<compile_context>
chip_gen: v7x
topology: tpu7x:2x2x1
jax: 0.10.0
libtpu: 0.0.40
codegen_flags: <defaults>
</compile_context>

<pallas_src>
import math
import numpy as np
import jax
import jax.numpy as jnp
from jax.experimental import pallas as pl
from jax.experimental.pallas import tpu as pltpu

SE = 4
LAMDA = 0.5


# ----------------------------------------------------------------------------
# Kernel helpers
# ----------------------------------------------------------------------------
def _gpc_se_layer(X, bsel, bselT, diag, E_full, N, wc, bc, wr_exp, br_exp, wd, wu):
    """One GPC_SE layer on the batched slab.

    X      : (M, Ci*N)      row=(b,i), lane=(c,j)
    bsel   : (M, TB)        delta(batch(row), col)
    bselT  : (TB, M)
    diag   : (M, Cmax*N)    delta(row % N, lane % N)
    E_full : (Cmax, Cmax*N) E[o, c*N+j] = delta(o, c)   (channel expander)
    wc     : (Ci*N, Co)     (1,N)-conv weights
    bc     : (1, Co)
    wr_exp : (Ci*N, Co*N)   1x1-conv weights, expanded block-diagonally
    br_exp : (1, Co*N)
    wd, wu : SE squeeze/excite weights (Co,Cm) / (Cm,Co)
    return : (M, Co*N)      pre-ReLU layer output
    """
    f32 = jnp.float32
    Co = wc.shape[1]
    CoN = Co * N

    # (1, N) conv: xc[(b,i), o]
    xc = jnp.dot(X, wc, preferred_element_type=f32) + bc                 # (M, Co)

    # SE gate per (b, o): mean_{i,j}(xc_i + xc_j) == (2/N) * sum_i xc_i
    se = (2.0 / N) * jnp.dot(bselT, xc, preferred_element_type=f32)      # (TB, Co)
    h = jnp.maximum(jnp.dot(se, wd, preferred_element_type=f32), 0.0)    # (TB, Cm)
    gate = jax.nn.sigmoid(jnp.dot(h, wu, preferred_element_type=f32))    # (TB, Co)
    gate_rows = jnp.dot(bsel, gate, preferred_element_type=f32)          # (M, Co)

    # pre-scale by the gate: gate*(xc_i + xc_j) == (g*xc)_i + (g*xc)_j
    xg = xc * gate_rows                                                  # (M, Co)

    # term1[(b,i),(o,j)] = xg[(b,i),o]   (broadcast over lanes j)
    term1 = jnp.dot(xg, E_full[:Co, :CoN], preferred_element_type=f32)   # (M, CoN)
    # term2[(b,i),(o,j)] = xg[(b,j),o]   (per-batch transpose via diag mask + selectors)
    G = term1 * diag[:, :CoN]
    xgT = jnp.dot(bselT, G, preferred_element_type=f32)                  # (TB, CoN)
    term2 = jnp.dot(bsel, xgT, preferred_element_type=f32)               # (M, CoN)

    # 1x1-conv residual
    res = jnp.dot(X, wr_exp, preferred_element_type=f32) + br_exp        # (M, CoN)

    return term1 + term2 + res


def _bc_gcn_se_kernel(x_ref, bsel_ref, bselT_ref, diag_ref, exp_ref,
                      wc1, bc1, wr1, br1, wd1, wu1,
                      wc2, bc2, wr2, br2, wd2, wu2,
                      wc3, bc3, wr3, br3, wd3, wu3,
                      wep, bep, wnp, bnp, wfc, bfc,
                      out_ref):
    f32 = jnp.float32
    N = x_ref.shape[-1]
    bsel = bsel_ref[...]                       # (M, TB)
    bselT = bselT_ref[...]                     # (TB, M)
    diag = diag_ref[...]                       # (M, Cmax*N)
    E_full = exp_ref[...]                      # (Cmax, Cmax*N)

    X = x_ref[...]                             # layer-1 slab (M, 1*N)
    for (wc, bc, wr, br, wd, wu) in ((wc1, bc1, wr1, br1, wd1, wu1),
                                     (wc2, bc2, wr2, br2, wd2, wu2),
                                     (wc3, bc3, wr3, br3, wd3, wu3)):
        X = jnp.maximum(
            _gpc_se_layer(X, bsel, bselT, diag, E_full, N,
                          wc[...], bc[...], wr[...], br[...], wd[...], wu[...]),
            0.0)

    # EP: (1, N) conv -> ep[(b,i), o]
    ep = jnp.maximum(
        jnp.dot(X, wep[...], preferred_element_type=f32) + bep[...], 0.0)            # (M, EPd)

    # NP: (N, 1) conv.  Re-lay ep per batch as (TB, EPd*N) then a single matmul.
    EPd = ep.shape[1]
    G_ep = jnp.dot(ep, E_full[:EPd, :EPd * N],
                   preferred_element_type=f32) * diag[:, :EPd * N]                   # (M, EPd*N)
    epT = jnp.dot(bselT, G_ep, preferred_element_type=f32)                            # (TB, EPd*N)
    npv = jnp.maximum(
        jnp.dot(epT, wnp[...], preferred_element_type=f32) + bnp[...], 0.0)           # (TB, NPd)

    # fc
    out_ref[...] = jnp.dot(npv, wfc[...], preferred_element_type=f32) + bfc[...]      # (TB, 1)


# ----------------------------------------------------------------------------
# Wrapper (plain-JAX glue: parameter re-layout, selectors/masks, BlockSpecs)
# ----------------------------------------------------------------------------
def bc_gcn_se_pallas(x, params, *, tb=8):
    x = jnp.asarray(x, jnp.float32)
    B, _, N, _ = x.shape

    # pad the batch to a multiple of the per-step batch tile
    g = -(-B // tb)
    b_pad = g * tb
    if b_pad != B:
        x = jnp.pad(x, ((0, b_pad - B), (0, 0), (0, 0), (0, 0)))
    M = tb * N

    x2d = x.reshape(b_pad * N, N)              # row=(b,i), lane=(c=0, j)

    args = [x2d]
    in_specs = [pl.BlockSpec((M, N), lambda gi: (gi, 0))]

    def add(arr):
        args.append(jnp.asarray(arr, jnp.float32))
        in_specs.append(pl.BlockSpec(memory_space=pltpu.MemorySpace.VMEM))

    # fixed selector / mask / expander operands (built once, resident in VMEM)
    widths = [params[k]["conv_w"].shape[0] for k in ("g1", "g2", "g3")]
    widths.append(params["ep_w"].shape[0])
    cmax = max(widths)
    block_sel = jnp.repeat(jnp.eye(tb, dtype=jnp.float32), N, axis=0)       # (M, TB)
    diag = (jnp.arange(M)[:, None] % N ==
            jnp.arange(cmax * N)[None, :] % N).astype(jnp.float32)          # (M, cmax*N)
    e_max = (jnp.arange(cmax)[:, None] ==
             (jnp.arange(cmax * N)[None, :] // N)).astype(jnp.float32)      # (cmax, cmax*N)
    add(block_sel)
    add(block_sel.T)
    add(diag)
    add(e_max)

    eye_n = jnp.eye(N, dtype=jnp.float32)
    for name in ("g1", "g2", "g3"):
        p = params[name]
        co, ci = p["conv_w"].shape[0], p["conv_w"].shape[1]
        add(jnp.transpose(p["conv_w"][:, :, 0, :], (1, 2, 0)).reshape(ci * N, co))     # Wc
        add(p["conv_b"].reshape(1, co))                                                # bc
        wr = p["convres_w"][:, :, 0, 0]                                                # (co, ci)
        add(jnp.einsum("oc,jk->cjok", wr, eye_n).reshape(ci * N, co * N))              # Wr expanded
        add(jnp.repeat(p["convres_b"], N).reshape(1, co * N))                          # br expanded
        add(p["sed_w"].T)                                                              # (co, cm)
        add(p["seu_w"].T)                                                              # (cm, co)

    epd, c3 = params["ep_w"].shape[0], params["ep_w"].shape[1]
    npd = params["np_w"].shape[0]
    add(jnp.transpose(params["ep_w"][:, :, 0, :], (1, 2, 0)).reshape(c3 * N, epd))     # Wep
    add(params["ep_b"].reshape(1, epd))
    add(jnp.transpose(params["np_w"][:, :, :, 0], (1, 2, 0)).reshape(epd * N, npd))    # Wnp
    add(params["np_b"].reshape(1, npd))
    add(params["fc_w"].T)                                                              # (npd, 1)
    add(params["fc_b"].reshape(1, 1))

    out = pl.pallas_call(
        _bc_gcn_se_kernel,
        out_shape=jax.ShapeDtypeStruct((b_pad, 1), jnp.float32),
        grid=(g,),
        in_specs=in_specs,
        out_specs=pl.BlockSpec((tb, 1), lambda gi: (gi, 0)),
        compiler_params=pltpu.CompilerParams(dimension_semantics=("parallel",)),
    )(*args)
    return out[:B]


# ----------------------------------------------------------------------------
# Deterministic parameter init (synthetic; matches module __init__ shapes)
# ----------------------------------------------------------------------------
def init_params(key, dims, node_dim):
    g1, g2, g3, ep_d, np_d = dims
    keys = iter(jax.random.split(key, 64))

    def nrm(shape, std):
        return std * jax.random.normal(next(keys), shape, dtype=jnp.float32)

    def gpc(ci, co):
        cm = co // SE
        return dict(
            conv_w=nrm((co, ci, 1, node_dim),
                       math.sqrt(2 * (1 - LAMDA) / (node_dim * ci + node_dim * co))),
            conv_b=nrm((co,), 0.05),
            convres_w=nrm((co, ci, 1, 1), math.sqrt(4 * LAMDA / (ci + co))),
            convres_b=nrm((co,), 0.05),
            sed_w=nrm((cm, co), 1.0 / math.sqrt(co)),
            seu_w=nrm((co, cm), 1.0 / math.sqrt(cm)),
        )

    return dict(
        g1=gpc(1, g1), g2=gpc(g1, g2), g3=gpc(g2, g3),
        ep_w=nrm((ep_d, g3, 1, node_dim), math.sqrt(4 / (node_dim * g3 + ep_d))),
        ep_b=nrm((ep_d,), 0.05),
        np_w=nrm((np_d, ep_d, node_dim, 1), math.sqrt(4 / (node_dim * ep_d + np_d))),
        np_b=nrm((np_d,), 0.05),
        fc_w=nrm((1, np_d), 1.0 / math.sqrt(np_d)),
        fc_b=jnp.zeros((1,), jnp.float32),
    )


# ----------------------------------------------------------------------------
# High-precision numpy reference (PyTorch semantics, NCHW)
# ----------------------------------------------------------------------------
def ref_forward(x, params):
    x = np.asarray(x, np.float64)
    P = jax.tree_util.tree_map(lambda a: np.asarray(a, np.float64), params)
    relu = lambda v: np.maximum(v, 0.0)
    sigmoid = lambda v: 1.0 / (1.0 + np.exp(-v))

    def gpc(x, p):
        res = np.einsum('oc,bcij->boij', p['convres_w'][:, :, 0, 0], x) \
            + p['convres_b'][None, :, None, None]
        xc = np.einsum('ocj,bcij->boi', p['conv_w'][:, :, 0, :], x) \
            + p['conv_b'][None, :, None]
        s = xc[:, :, :, None] + xc[:, :, None, :]
        se = s.mean(axis=(2, 3))
        se = relu(se @ p['sed_w'].T)
        se = sigmoid(se @ p['seu_w'].T)
        return s * se[:, :, None, None] + res

    for name in ("g1", "g2", "g3"):
        x = relu(gpc(x, P[name]))
    ep = np.einsum('ocj,bcij->boi', P['ep_w'][:, :, 0, :], x) + P['ep_b'][None, :, None]
    ep = relu(ep)
    npv = np.einsum('oci,bci->bo', P['np_w'][:, :, :, 0], ep) + P['np_b'][None, :]
    npv = relu(npv)
    return npv @ P['fc_w'].T + P['fc_b'][None, :]


# TODO(synk): the `len(x.shape) < 4` upper-triangular scatter branch of
# BC_GCN_SE.forward is not implemented (it references undefined self.input_dim
# in the original source); a 4-D connectivity tensor is fed directly.

if __name__ == "__main__":
    key = jax.random.PRNGKey(0)
    kx, kp = jax.random.split(key)

    B = 16                        # batch (TB=8 samples per grid step -> grid=(2,))
    N = 16                        # node_dim (small for the demo; 53 in the paper)
    dims = (8, 8, 8, 8, 16)       # GPC_dim_1, GPC_dim_2, GPC_dim_3, EP_dim, NP_dim

    x = jax.random.normal(kx, (B, 1, N, N), dtype=jnp.float32)
    params = init_params(kp, dims, N)

    y = bc_gcn_se_pallas(x, params, tb=8)
    y = jax.block_until_ready(y)

    y_ref = ref_forward(x, params)
    np.testing.assert_allclose(np.asarray(y), np.asarray(y_ref), rtol=5e-2, atol=5e-2)

    print("KERNEL_OK")
</pallas_src>

<mosaic_0001>
module attributes {stable_mosaic.version = 11 : i64} {
  func.func @_bc_gcn_se_kernel(%arg0: i32, %arg1: memref<128x16xf32, #tpu.memory_space<vmem>>, %arg2: memref<128x8xf32, #tpu.memory_space<vmem>>, %arg3: memref<8x128xf32, #tpu.memory_space<vmem>>, %arg4: memref<128x128xf32, #tpu.memory_space<vmem>>, %arg5: memref<8x128xf32, #tpu.memory_space<vmem>>, %arg6: memref<16x8xf32, #tpu.memory_space<vmem>>, %arg7: memref<1x8xf32, #tpu.memory_space<vmem>>, %arg8: memref<16x128xf32, #tpu.memory_space<vmem>>, %arg9: memref<1x128xf32, #tpu.memory_space<vmem>>, %arg10: memref<8x2xf32, #tpu.memory_space<vmem>>, %arg11: memref<2x8xf32, #tpu.memory_space<vmem>>, %arg12: memref<128x8xf32, #tpu.memory_space<vmem>>, %arg13: memref<1x8xf32, #tpu.memory_space<vmem>>, %arg14: memref<128x128xf32, #tpu.memory_space<vmem>>, %arg15: memref<1x128xf32, #tpu.memory_space<vmem>>, %arg16: memref<8x2xf32, #tpu.memory_space<vmem>>, %arg17: memref<2x8xf32, #tpu.memory_space<vmem>>, %arg18: memref<128x8xf32, #tpu.memory_space<vmem>>, %arg19: memref<1x8xf32, #tpu.memory_space<vmem>>, %arg20: memref<128x128xf32, #tpu.memory_space<vmem>>, %arg21: memref<1x128xf32, #tpu.memory_space<vmem>>, %arg22: memref<8x2xf32, #tpu.memory_space<vmem>>, %arg23: memref<2x8xf32, #tpu.memory_space<vmem>>, %arg24: memref<128x8xf32, #tpu.memory_space<vmem>>, %arg25: memref<1x8xf32, #tpu.memory_space<vmem>>, %arg26: memref<128x16xf32, #tpu.memory_space<vmem>>, %arg27: memref<1x16xf32, #tpu.memory_space<vmem>>, %arg28: memref<16x1xf32, #tpu.memory_space<vmem>>, %arg29: memref<1x1xf32, #tpu.memory_space<vmem>>, %arg30: memref<8x1xf32, #tpu.memory_space<vmem>>) attributes {dimension_semantics = [#tpu.dimension_semantics<parallel>], iteration_bounds = array<i64: 2>, scalar_prefetch = 0 : i64, scratch_operands = 0 : i64, tpu.core_type = #tpu.core_type<tc>, window_params = [{transform_indices = @transform_0, window_bounds = array<i64: 128, 16>}, {pipeline_mode = #tpu.pipeline_mode<synchronous>, transform_indices = @transform_1, window_bounds = array<i64: 128, 8>}, {pipeline_mode = #tpu.pipeline_mode<synchronous>, transform_indices = @transform_2, window_bounds = array<i64: 8, 128>}, {pipeline_mode = #tpu.pipeline_mode<synchronous>, transform_indices = @transform_3, window_bounds = array<i64: 128, 128>}, {pipeline_mode = #tpu.pipeline_mode<synchronous>, transform_indices = @transform_4, window_bounds = array<i64: 8, 128>}, {pipeline_mode = #tpu.pipeline_mode<synchronous>, transform_indices = @transform_5, window_bounds = array<i64: 16, 8>}, {pipeline_mode = #tpu.pipeline_mode<synchronous>, transform_indices = @transform_6, window_bounds = array<i64: 1, 8>}, {pipeline_mode = #tpu.pipeline_mode<synchronous>, transform_indices = @transform_7, window_bounds = array<i64: 16, 128>}, {pipeline_mode = #tpu.pipeline_mode<synchronous>, transform_indices = @transform_8, window_bounds = array<i64: 1, 128>}, {pipeline_mode = #tpu.pipeline_mode<synchronous>, transform_indices = @transform_9, window_bounds = array<i64: 8, 2>}, {pipeline_mode = #tpu.pipeline_mode<synchronous>, transform_indices = @transform_10, window_bounds = array<i64: 2, 8>}, {pipeline_mode = #tpu.pipeline_mode<synchronous>, transform_indices = @transform_11, window_bounds = array<i64: 128, 8>}, {pipeline_mode = #tpu.pipeline_mode<synchronous>, transform_indices = @transform_12, window_bounds = array<i64: 1, 8>}, {pipeline_mode = #tpu.pipeline_mode<synchronous>, transform_indices = @transform_13, window_bounds = array<i64: 128, 128>}, {pipeline_mode = #tpu.pipeline_mode<synchronous>, transform_indices = @transform_14, window_bounds = array<i64: 1, 128>}, {pipeline_mode = #tpu.pipeline_mode<synchronous>, transform_indices = @transform_15, window_bounds = array<i64: 8, 2>}, {pipeline_mode = #tpu.pipeline_mode<synchronous>, transform_indices = @transform_16, window_bounds = array<i64: 2, 8>}, {pipeline_mode = #tpu.pipeline_mode<synchronous>, transform_indices = @transform_17, window_bounds = array<i64: 128, 8>}, {pipeline_mode = #tpu.pipeline_mode<synchronous>, transform_indices = @transform_18, window_bounds = array<i64: 1, 8>}, {pipeline_mode = #tpu.pipeline_mode<synchronous>, transform_indices = @transform_19, window_bounds = array<i64: 128, 128>}, {pipeline_mode = #tpu.pipeline_mode<synchronous>, transform_indices = @transform_20, window_bounds = array<i64: 1, 128>}, {pipeline_mode = #tpu.pipeline_mode<synchronous>, transform_indices = @transform_21, window_bounds = array<i64: 8, 2>}, {pipeline_mode = #tpu.pipeline_mode<synchronous>, transform_indices = @transform_22, window_bounds = array<i64: 2, 8>}, {pipeline_mode = #tpu.pipeline_mode<synchronous>, transform_indices = @transform_23, window_bounds = array<i64: 128, 8>}, {pipeline_mode = #tpu.pipeline_mode<synchronous>, transform_indices = @transform_24, window_bounds = array<i64: 1, 8>}, {pipeline_mode = #tpu.pipeline_mode<synchronous>, transform_indices = @transform_25, window_bounds = array<i64: 128, 16>}, {pipeline_mode = #tpu.pipeline_mode<synchronous>, transform_indices = @transform_26, window_bounds = array<i64: 1, 16>}, {pipeline_mode = #tpu.pipeline_mode<synchronous>, transform_indices = @transform_27, window_bounds = array<i64: 16, 1>}, {pipeline_mode = #tpu.pipeline_mode<synchronous>, transform_indices = @transform_28, window_bounds = array<i64: 1, 1>}, {transform_indices = @transform_29, window_bounds = array<i64: 8, 1>}]} {
    %c0 = arith.constant 0 : index
    %c0_0 = arith.constant 0 : index
    %0 = vector.load %arg2[%c0, %c0_0] : memref<128x8xf32, #tpu.memory_space<vmem>>, vector<128x8xf32>
    %c0_1 = arith.constant 0 : index
    %c0_2 = arith.constant 0 : index
    %1 = vector.load %arg3[%c0_1, %c0_2] : memref<8x128xf32, #tpu.memory_space<vmem>>, vector<8x128xf32>
    %c0_3 = arith.constant 0 : index
    %c0_4 = arith.constant 0 : index
    %2 = vector.load %arg4[%c0_3, %c0_4] : memref<128x128xf32, #tpu.memory_space<vmem>>, vector<128x128xf32>
    %c0_5 = arith.constant 0 : index
    %c0_6 = arith.constant 0 : index
    %3 = vector.load %arg5[%c0_5, %c0_6] : memref<8x128xf32, #tpu.memory_space<vmem>>, vector<8x128xf32>
    %c0_7 = arith.constant 0 : index
    %c0_8 = arith.constant 0 : index
    %4 = vector.load %arg1[%c0_7, %c0_8] : memref<128x16xf32, #tpu.memory_space<vmem>>, vector<128x16xf32>
    %c0_9 = arith.constant 0 : index
    %c0_10 = arith.constant 0 : index
    %5 = vector.load %arg6[%c0_9, %c0_10] : memref<16x8xf32, #tpu.memory_space<vmem>>, vector<16x8xf32>
    %c0_11 = arith.constant 0 : index
    %c0_12 = arith.constant 0 : index
    %6 = vector.load %arg7[%c0_11, %c0_12] : memref<1x8xf32, #tpu.memory_space<vmem>>, vector<1x8xf32>
    %c0_13 = arith.constant 0 : index
    %c0_14 = arith.constant 0 : index
    %7 = vector.load %arg8[%c0_13, %c0_14] : memref<16x128xf32, #tpu.memory_space<vmem>>, vector<16x128xf32>
    %c0_15 = arith.constant 0 : index
    %c0_16 = arith.constant 0 : index
    %8 = vector.load %arg9[%c0_15, %c0_16] : memref<1x128xf32, #tpu.memory_space<vmem>>, vector<1x128xf32>
    %c0_17 = arith.constant 0 : index
    %c0_18 = arith.constant 0 : index
    %9 = vector.load %arg10[%c0_17, %c0_18] : memref<8x2xf32, #tpu.memory_space<vmem>>, vector<8x2xf32>
    %c0_19 = arith.constant 0 : index
    %c0_20 = arith.constant 0 : index
    %10 = vector.load %arg11[%c0_19, %c0_20] : memref<2x8xf32, #tpu.memory_space<vmem>>, vector<2x8xf32>
    %cst = arith.constant dense<0.000000e+00> : vector<128x8xf32>
    %11 = tpu.matmul %4, %5, %cst {dimension_numbers = #tpu.dot_dimension_numbers<[1], [0], [0], [1], [0, 0, 1, 1], [], []>} : vector<128x16xf32>, vector<16x8xf32>, vector<128x8xf32> -> vector<128x8xf32>
    %12 = vector.broadcast %6 : vector<1x8xf32> to vector<128x8xf32>
    %13 = arith.addf %11, %12 : vector<128x8xf32>
    %cst_21 = arith.constant dense<0.000000e+00> : vector<8x8xf32>
    %14 = tpu.matmul %1, %13, %cst_21 {dimension_numbers = #tpu.dot_dimension_numbers<[1], [0], [0], [1], [0, 0, 1, 1], [], []>} : vector<8x128xf32>, vector<128x8xf32>, vector<8x8xf32> -> vector<8x8xf32>
    %cst_22 = arith.constant 1.250000e-01 : f32
    %15 = vector.broadcast %cst_22 : f32 to vector<8x8xf32>
    %16 = arith.mulf %15, %14 : vector<8x8xf32>
    %cst_23 = arith.constant dense<0.000000e+00> : vector<8x2xf32>
    %17 = tpu.matmul %16, %9, %cst_23 {dimension_numbers = #tpu.dot_dimension_numbers<[1], [0], [0], [1], [0, 0, 1, 1], [], []>} : vector<8x8xf32>, vector<8x2xf32>, vector<8x2xf32> -> vector<8x2xf32>
    %cst_24 = arith.constant 0.000000e+00 : f32
    %18 = vector.broadcast %cst_24 : f32 to vector<8x2xf32>
    %19 = arith.maximumf %17, %18 : vector<8x2xf32>
    %cst_25 = arith.constant dense<0.000000e+00> : vector<8x8xf32>
    %20 = tpu.matmul %19, %10, %cst_25 {dimension_numbers = #tpu.dot_dimension_numbers<[1], [0], [0], [1], [0, 0, 1, 1], [], []>} : vector<8x2xf32>, vector<2x8xf32>, vector<8x8xf32> -> vector<8x8xf32>
    %21 = arith.negf %20 : vector<8x8xf32>
    %22 = math.exp %21 : vector<8x8xf32>
    %cst_26 = arith.constant 1.000000e+00 : f32
    %23 = vector.broadcast %cst_26 : f32 to vector<8x8xf32>
    %24 = arith.addf %23, %22 : vector<8x8xf32>
    %25 = arith.divf %23, %24 : vector<8x8xf32>
    %cst_27 = arith.constant dense<0.000000e+00> : vector<128x8xf32>
    %26 = tpu.matmul %0, %25, %cst_27 {dimension_numbers = #tpu.dot_dimension_numbers<[1], [0], [0], [1], [0, 0, 1, 1], [], []>} : vector<128x8xf32>, vector<8x8xf32>, vector<128x8xf32> -> vector<128x8xf32>
    %27 = arith.mulf %13, %26 : vector<128x8xf32>
    %cst_28 = arith.constant dense<0.000000e+00> : vector<128x128xf32>
    %28 = tpu.matmul %27, %3, %cst_28 {dimension_numbers = #tpu.dot_dimension_numbers<[1], [0], [0], [1], [0, 0, 1, 1], [], []>} : vector<128x8xf32>, vector<8x128xf32>, vector<128x128xf32> -> vector<128x128xf32>
    %29 = arith.mulf %28, %2 : vector<128x128xf32>
    %cst_29 = arith.constant dense<0.000000e+00> : vector<8x128xf32>
    %30 = tpu.matmul %1, %29, %cst_29 {dimension_numbers = #tpu.dot_dimension_numbers<[1], [0], [0], [1], [0, 0, 1, 1], [], []>} : vector<8x128xf32>, vector<128x128xf32>, vector<8x128xf32> -> vector<8x128xf32>
    %cst_30 = arith.constant dense<0.000000e+00> : vector<128x128xf32>
    %31 = tpu.matmul %0, %30, %cst_30 {dimension_numbers = #tpu.dot_dimension_numbers<[1], [0], [0], [1], [0, 0, 1, 1], [], []>} : vector<128x8xf32>, vector<8x128xf32>, vector<128x128xf32> -> vector<128x128xf32>
    %cst_31 = arith.constant dense<0.000000e+00> : vector<128x128xf32>
    %32 = tpu.matmul %4, %7, %cst_31 {dimension_numbers = #tpu.dot_dimension_numbers<[1], [0], [0], [1], [0, 0, 1, 1], [], []>} : vector<128x16xf32>, vector<16x128xf32>, vector<128x128xf32> -> vector<128x128xf32>
    %33 = vector.broadcast %8 : vector<1x128xf32> to vector<128x128xf32>
    %34 = arith.addf %32, %33 : vector<128x128xf32>
    %35 = arith.addf %28, %31 : vector<128x128xf32>
    %36 = arith.addf %35, %34 : vector<128x128xf32>
    %cst_32 = arith.constant 0.000000e+00 : f32
    %37 = vector.broadcast %cst_32 : f32 to vector<128x128xf32>
    %38 = arith.maximumf %36, %37 : vector<128x128xf32>
    %c0_33 = arith.constant 0 : index
    %c0_34 = arith.constant 0 : index
    %39 = vector.load %arg12[%c0_33, %c0_34] : memref<128x8xf32, #tpu.memory_space<vmem>>, vector<128x8xf32>
    %c0_35 = arith.constant 0 : index
    %c0_36 = arith.constant 0 : index
    %40 = vector.load %arg13[%c0_35, %c0_36] : memref<1x8xf32, #tpu.memory_space<vmem>>, vector<1x8xf32>
    %c0_37 = arith.constant 0 : index
    %c0_38 = arith.constant 0 : index
    %41 = vector.load %arg14[%c0_37, %c0_38] : memref<128x128xf32, #tpu.memory_space<vmem>>, vector<128x128xf32>
    %c0_39 = arith.constant 0 : index
    %c0_40 = arith.constant 0 : index
    %42 = vector.load %arg15[%c0_39, %c0_40] : memref<1x128xf32, #tpu.memory_space<vmem>>, vector<1x128xf32>
    %c0_41 = arith.constant 0 : index
    %c0_42 = arith.constant 0 : index
    %43 = vector.load %arg16[%c0_41, %c0_42] : memref<8x2xf32, #tpu.memory_space<vmem>>, vector<8x2xf32>
    %c0_43 = arith.constant 0 : index
    %c0_44 = arith.constant 0 : index
    %44 = vector.load %arg17[%c0_43, %c0_44] : memref<2x8xf32, #tpu.memory_space<vmem>>, vector<2x8xf32>
    %cst_45 = arith.constant dense<0.000000e+00> : vector<128x8xf32>
    %45 = tpu.matmul %38, %39, %cst_45 {dimension_numbers = #tpu.dot_dimension_numbers<[1], [0], [0], [1], [0, 0, 1, 1], [], []>} : vector<128x128xf32>, vector<128x8xf32>, vector<128x8xf32> -> vector<128x8xf32>
    %46 = vector.broadcast %40 : vector<1x8xf32> to vector<128x8xf32>
    %47 = arith.addf %45, %46 : vector<128x8xf32>
    %cst_46 = arith.constant dense<0.000000e+00> : vector<8x8xf32>
    %48 = tpu.matmul %1, %47, %cst_46 {dimension_numbers = #tpu.dot_dimension_numbers<[1], [0], [0], [1], [0, 0, 1, 1], [], []>} : vector<8x128xf32>, vector<128x8xf32>, vector<8x8xf32> -> vector<8x8xf32>
    %cst_47 = arith.constant 1.250000e-01 : f32
    %49 = vector.broadcast %cst_47 : f32 to vector<8x8xf32>
    %50 = arith.mulf %49, %48 : vector<8x8xf32>
    %cst_48 = arith.constant dense<0.000000e+00> : vector<8x2xf32>
    %51 = tpu.matmul %50, %43, %cst_48 {dimension_numbers = #tpu.dot_dimension_numbers<[1], [0], [0], [1], [0, 0, 1, 1], [], []>} : vector<8x8xf32>, vector<8x2xf32>, vector<8x2xf32> -> vector<8x2xf32>
    %cst_49 = arith.constant 0.000000e+00 : f32
    %52 = vector.broadcast %cst_49 : f32 to vector<8x2xf32>
    %53 = arith.maximumf %51, %52 : vector<8x2xf32>
    %cst_50 = arith.constant dense<0.000000e+00> : vector<8x8xf32>
    %54 = tpu.matmul %53, %44, %cst_50 {dimension_numbers = #tpu.dot_dimension_numbers<[1], [0], [0], [1], [0, 0, 1, 1], [], []>} : vector<8x2xf32>, vector<2x8xf32>, vector<8x8xf32> -> vector<8x8xf32>
    %55 = arith.negf %54 : vector<8x8xf32>
    %56 = math.exp %55 : vector<8x8xf32>
    %cst_51 = arith.constant 1.000000e+00 : f32
    %57 = vector.broadcast %cst_51 : f32 to vector<8x8xf32>
    %58 = arith.addf %57, %56 : vector<8x8xf32>
    %59 = arith.divf %57, %58 : vector<8x8xf32>
    %cst_52 = arith.constant dense<0.000000e+00> : vector<128x8xf32>
    %60 = tpu.matmul %0, %59, %cst_52 {dimension_numbers = #tpu.dot_dimension_numbers<[1], [0], [0], [1], [0, 0, 1, 1], [], []>} : vector<128x8xf32>, vector<8x8xf32>, vector<128x8xf32> -> vector<128x8xf32>
    %61 = arith.mulf %47, %60 : vector<128x8xf32>
    %cst_53 = arith.constant dense<0.000000e+00> : vector<128x128xf32>
    %62 = tpu.matmul %61, %3, %cst_53 {dimension_numbers = #tpu.dot_dimension_numbers<[1], [0], [0], [1], [0, 0, 1, 1], [], []>} : vector<128x8xf32>, vector<8x128xf32>, vector<128x128xf32> -> vector<128x128xf32>
    %63 = arith.mulf %62, %2 : vector<128x128xf32>
    %cst_54 = arith.constant dense<0.000000e+00> : vector<8x128xf32>
    %64 = tpu.matmul %1, %63, %cst_54 {dimension_numbers = #tpu.dot_dimension_numbers<[1], [0], [0], [1], [0, 0, 1, 1], [], []>} : vector<8x128xf32>, vector<128x128xf32>, vector<8x128xf32> -> vector<8x128xf32>
    %cst_55 = arith.constant dense<0.000000e+00> : vector<128x128xf32>
    %65 = tpu.matmul %0, %64, %cst_55 {dimension_numbers = #tpu.dot_dimension_numbers<[1], [0], [0], [1], [0, 0, 1, 1], [], []>} : vector<128x8xf32>, vector<8x128xf32>, vector<128x128xf32> -> vector<128x128xf32>
    %cst_56 = arith.constant dense<0.000000e+00> : vector<128x128xf32>
    %66 = tpu.matmul %38, %41, %cst_56 {dimension_numbers = #tpu.dot_dimension_numbers<[1], [0], [0], [1], [0, 0, 1, 1], [], []>} : vector<128x128xf32>, vector<128x128xf32>, vector<128x128xf32> -> vector<128x128xf32>
    %67 = vector.broadcast %42 : vector<1x128xf32> to vector<128x128xf32>
    %68 = arith.addf %66, %67 : vector<128x128xf32>
    %69 = arith.addf %62, %65 : vector<128x128xf32>
    %70 = arith.addf %69, %68 : vector<128x128xf32>
    %cst_57 = arith.constant 0.000000e+00 : f32
    %71 = vector.broadcast %cst_57 : f32 to vector<128x128xf32>
    %72 = arith.maximumf %70, %71 : vector<128x128xf32>
    %c0_58 = arith.constant 0 : index
    %c0_59 = arith.constant 0 : index
    %73 = vector.load %arg18[%c0_58, %c0_59] : memref<128x8xf32, #tpu.memory_space<vmem>>, vector<128x8xf32>
    %c0_60 = arith.constant 0 : index
    %c0_61 = arith.constant 0 : index
    %74 = vector.load %arg19[%c0_60, %c0_61] : memref<1x8xf32, #tpu.memory_space<vmem>>, vector<1x8xf32>
    %c0_62 = arith.constant 0 : index
    %c0_63 = arith.constant 0 : index
    %75 = vector.load %arg20[%c0_62, %c0_63] : memref<128x128xf32, #tpu.memory_space<vmem>>, vector<128x128xf32>
    %c0_64 = arith.constant 0 : index
    %c0_65 = arith.constant 0 : index
    %76 = vector.load %arg21[%c0_64, %c0_65] : memref<1x128xf32, #tpu.memory_space<vmem>>, vector<1x128xf32>
    %c0_66 = arith.constant 0 : index
    %c0_67 = arith.constant 0 : index
    %77 = vector.load %arg22[%c0_66, %c0_67] : memref<8x2xf32, #tpu.memory_space<vmem>>, vector<8x2xf32>
    %c0_68 = arith.constant 0 : index
    %c0_69 = arith.constant 0 : index
    %78 = vector.load %arg23[%c0_68, %c0_69] : memref<2x8xf32, #tpu.memory_space<vmem>>, vector<2x8xf32>
    %cst_70 = arith.constant dense<0.000000e+00> : vector<128x8xf32>
    %79 = tpu.matmul %72, %73, %cst_70 {dimension_numbers = #tpu.dot_dimension_numbers<[1], [0], [0], [1], [0, 0, 1, 1], [], []>} : vector<128x128xf32>, vector<128x8xf32>, vector<128x8xf32> -> vector<128x8xf32>
    %80 = vector.broadcast %74 : vector<1x8xf32> to vector<128x8xf32>
    %81 = arith.addf %79, %80 : vector<128x8xf32>
    %cst_71 = arith.constant dense<0.000000e+00> : vector<8x8xf32>
    %82 = tpu.matmul %1, %81, %cst_71 {dimension_numbers = #tpu.dot_dimension_numbers<[1], [0], [0], [1], [0, 0, 1, 1], [], []>} : vector<8x128xf32>, vector<128x8xf32>, vector<8x8xf32> -> vector<8x8xf32>
    %cst_72 = arith.constant 1.250000e-01 : f32
    %83 = vector.broadcast %cst_72 : f32 to vector<8x8xf32>
    %84 = arith.mulf %83, %82 : vector<8x8xf32>
    %cst_73 = arith.constant dense<0.000000e+00> : vector<8x2xf32>
    %85 = tpu.matmul %84, %77, %cst_73 {dimension_numbers = #tpu.dot_dimension_numbers<[1], [0], [0], [1], [0, 0, 1, 1], [], []>} : vector<8x8xf32>, vector<8x2xf32>, vector<8x2xf32> -> vector<8x2xf32>
    %cst_74 = arith.constant 0.000000e+00 : f32
    %86 = vector.broadcast %cst_74 : f32 to vector<8x2xf32>
    %87 = arith.maximumf %85, %86 : vector<8x2xf32>
    %cst_75 = arith.constant dense<0.000000e+00> : vector<8x8xf32>
    %88 = tpu.matmul %87, %78, %cst_75 {dimension_numbers = #tpu.dot_dimension_numbers<[1], [0], [0], [1], [0, 0, 1, 1], [], []>} : vector<8x2xf32>, vector<2x8xf32>, vector<8x8xf32> -> vector<8x8xf32>
    %89 = arith.negf %88 : vector<8x8xf32>
    %90 = math.exp %89 : vector<8x8xf32>
    %cst_76 = arith.constant 1.000000e+00 : f32
    %91 = vector.broadcast %cst_76 : f32 to vector<8x8xf32>
    %92 = arith.addf %91, %90 : vector<8x8xf32>
    %93 = arith.divf %91, %92 : vector<8x8xf32>
    %cst_77 = arith.constant dense<0.000000e+00> : vector<128x8xf32>
    %94 = tpu.matmul %0, %93, %cst_77 {dimension_numbers = #tpu.dot_dimension_numbers<[1], [0], [0], [1], [0, 0, 1, 1], [], []>} : vector<128x8xf32>, vector<8x8xf32>, vector<128x8xf32> -> vector<128x8xf32>
    %95 = arith.mulf %81, %94 : vector<128x8xf32>
    %cst_78 = arith.constant dense<0.000000e+00> : vector<128x128xf32>
    %96 = tpu.matmul %95, %3, %cst_78 {dimension_numbers = #tpu.dot_dimension_numbers<[1], [0], [0], [1], [0, 0, 1, 1], [], []>} : vector<128x8xf32>, vector<8x128xf32>, vector<128x128xf32> -> vector<128x128xf32>
    %97 = arith.mulf %96, %2 : vector<128x128xf32>
    %cst_79 = arith.constant dense<0.000000e+00> : vector<8x128xf32>
    %98 = tpu.matmul %1, %97, %cst_79 {dimension_numbers = #tpu.dot_dimension_numbers<[1], [0], [0], [1], [0, 0, 1, 1], [], []>} : vector<8x128xf32>, vector<128x128xf32>, vector<8x128xf32> -> vector<8x128xf32>
    %cst_80 = arith.constant dense<0.000000e+00> : vector<128x128xf32>
    %99 = tpu.matmul %0, %98, %cst_80 {dimension_numbers = #tpu.dot_dimension_numbers<[1], [0], [0], [1], [0, 0, 1, 1], [], []>} : vector<128x8xf32>, vector<8x128xf32>, vector<128x128xf32> -> vector<128x128xf32>
    %cst_81 = arith.constant dense<0.000000e+00> : vector<128x128xf32>
    %100 = tpu.matmul %72, %75, %cst_81 {dimension_numbers = #tpu.dot_dimension_numbers<[1], [0], [0], [1], [0, 0, 1, 1], [], []>} : vector<128x128xf32>, vector<128x128xf32>, vector<128x128xf32> -> vector<128x128xf32>
    %101 = vector.broadcast %76 : vector<1x128xf32> to vector<128x128xf32>
    %102 = arith.addf %100, %101 : vector<128x128xf32>
    %103 = arith.addf %96, %99 : vector<128x128xf32>
    %104 = arith.addf %103, %102 : vector<128x128xf32>
    %cst_82 = arith.constant 0.000000e+00 : f32
    %105 = vector.broadcast %cst_82 : f32 to vector<128x128xf32>
    %106 = arith.maximumf %104, %105 : vector<128x128xf32>
    %c0_83 = arith.constant 0 : index
    %c0_84 = arith.constant 0 : index
    %107 = vector.load %arg24[%c0_83, %c0_84] : memref<128x8xf32, #tpu.memory_space<vmem>>, vector<128x8xf32>
    %cst_85 = arith.constant dense<0.000000e+00> : vector<128x8xf32>
    %108 = tpu.matmul %106, %107, %cst_85 {dimension_numbers = #tpu.dot_dimension_numbers<[1], [0], [0], [1], [0, 0, 1, 1], [], []>} : vector<128x128xf32>, vector<128x8xf32>, vector<128x8xf32> -> vector<128x8xf32>
    %c0_86 = arith.constant 0 : index
    %c0_87 = arith.constant 0 : index
    %109 = vector.load %arg25[%c0_86, %c0_87] : memref<1x8xf32, #tpu.memory_space<vmem>>, vector<1x8xf32>
    %110 = vector.broadcast %109 : vector<1x8xf32> to vector<128x8xf32>
    %111 = arith.addf %108, %110 : vector<128x8xf32>
    %cst_88 = arith.constant 0.000000e+00 : f32
    %112 = vector.broadcast %cst_88 : f32 to vector<128x8xf32>
    %113 = arith.maximumf %111, %112 : vector<128x8xf32>
    %cst_89 = arith.constant dense<0.000000e+00> : vector<128x128xf32>
    %114 = tpu.matmul %113, %3, %cst_89 {dimension_numbers = #tpu.dot_dimension_numbers<[1], [0], [0], [1], [0, 0, 1, 1], [], []>} : vector<128x8xf32>, vector<8x128xf32>, vector<128x128xf32> -> vector<128x128xf32>
    %115 = arith.mulf %114, %2 : vector<128x128xf32>
    %cst_90 = arith.constant dense<0.000000e+00> : vector<8x128xf32>
    %116 = tpu.matmul %1, %115, %cst_90 {dimension_numbers = #tpu.dot_dimension_numbers<[1], [0], [0], [1], [0, 0, 1, 1], [], []>} : vector<8x128xf32>, vector<128x128xf32>, vector<8x128xf32> -> vector<8x128xf32>
    %c0_91 = arith.constant 0 : index
    %c0_92 = arith.constant 0 : index
    %117 = vector.load %arg26[%c0_91, %c0_92] : memref<128x16xf32, #tpu.memory_space<vmem>>, vector<128x16xf32>
    %cst_93 = arith.constant dense<0.000000e+00> : vector<8x16xf32>
    %118 = tpu.matmul %116, %117, %cst_93 {dimension_numbers = #tpu.dot_dimension_numbers<[1], [0], [0], [1], [0, 0, 1, 1], [], []>} : vector<8x128xf32>, vector<128x16xf32>, vector<8x16xf32> -> vector<8x16xf32>
    %c0_94 = arith.constant 0 : index
    %c0_95 = arith.constant 0 : index
    %119 = vector.load %arg27[%c0_94, %c0_95] : memref<1x16xf32, #tpu.memory_space<vmem>>, vector<1x16xf32>
    %120 = vector.broadcast %119 : vector<1x16xf32> to vector<8x16xf32>
    %121 = arith.addf %118, %120 : vector<8x16xf32>
    %cst_96 = arith.constant 0.000000e+00 : f32
    %122 = vector.broadcast %cst_96 : f32 to vector<8x16xf32>
    %123 = arith.maximumf %121, %122 : vector<8x16xf32>
    %c0_97 = arith.constant 0 : index
    %c0_98 = arith.constant 0 : index
    %124 = vector.load %arg28[%c0_97, %c0_98] : memref<16x1xf32, #tpu.memory_space<vmem>>, vector<16x1xf32>
    %cst_99 = arith.constant dense<0.000000e+00> : vector<8x1xf32>
    %125 = tpu.matmul %123, %124, %cst_99 {dimension_numbers = #tpu.dot_dimension_numbers<[1], [0], [0], [1], [0, 0, 1, 1], [], []>} : vector<8x16xf32>, vector<16x1xf32>, vector<8x1xf32> -> vector<8x1xf32>
    %c0_100 = arith.constant 0 : index
    %c0_101 = arith.constant 0 : index
    %126 = vector.load %arg29[%c0_100, %c0_101] : memref<1x1xf32, #tpu.memory_space<vmem>>, vector<1x1xf32>
    %127 = vector.broadcast %126 : vector<1x1xf32> to vector<8x1xf32>
    %128 = arith.addf %125, %127 : vector<8x1xf32>
    %c0_102 = arith.constant 0 : index
    %c0_103 = arith.constant 0 : index
    %129 = vector.load %arg30[%c0_102, %c0_103] : memref<8x1xf32, #tpu.memory_space<vmem>>, vector<8x1xf32>
    tpu.vector_store %arg30[%c0_102, %c0_103], %128 {strides = array<i32>} : memref<8x1xf32, #tpu.memory_space<vmem>>, vector<8x1xf32>,
    return
  }
  func.func @transform_0(%arg0: i32) -> (i32, i32) {
    %c0_i32 = arith.constant 0 : i32
    %c0_i32_0 = arith.constant 0 : i32
    return %arg0, %c0_i32 : i32, i32
  }
  func.func @transform_1(%arg0: i32) -> (i32, i32) {
    %c0_i32 = arith.constant 0 : i32
    %c0_i32_0 = arith.constant 0 : i32
    %c0_i32_1 = arith.constant 0 : i32
    return %c0_i32, %c0_i32_0 : i32, i32
  }
  func.func @transform_2(%arg0: i32) -> (i32, i32) {
    %c0_i32 = arith.constant 0 : i32
    %c0_i32_0 = arith.constant 0 : i32
    %c0_i32_1 = arith.constant 0 : i32
    return %c0_i32, %c0_i32_0 : i32, i32
  }
  func.func @transform_3(%arg0: i32) -> (i32, i32) {
    %c0_i32 = arith.constant 0 : i32
    %c0_i32_0 = arith.constant 0 : i32
    %c0_i32_1 = arith.constant 0 : i32
    return %c0_i32, %c0_i32_0 : i32, i32
  }
  func.func @transform_4(%arg0: i32) -> (i32, i32) {
    %c0_i32 = arith.constant 0 : i32
    %c0_i32_0 = arith.constant 0 : i32
    %c0_i32_1 = arith.constant 0 : i32
    return %c0_i32, %c0_i32_0 : i32, i32
  }
  func.func @transform_5(%arg0: i32) -> (i32, i32) {
    %c0_i32 = arith.constant 0 : i32
    %c0_i32_0 = arith.constant 0 : i32
    %c0_i32_1 = arith.constant 0 : i32
    return %c0_i32, %c0_i32_0 : i32, i32
  }
  func.func @transform_6(%arg0: i32) -> (i32, i32) {
    %c0_i32 = arith.constant 0 : i32
    %c0_i32_0 = arith.constant 0 : i32
    %c0_i32_1 = arith.constant 0 : i32
    return %c0_i32, %c0_i32_0 : i32, i32
  }
  func.func @transform_7(%arg0: i32) -> (i32, i32) {
    %c0_i32 = arith.constant 0 : i32
    %c0_i32_0 = arith.constant 0 : i32
    %c0_i32_1 = arith.constant 0 : i32
    return %c0_i32, %c0_i32_0 : i32, i32
  }
  func.func @transform_8(%arg0: i32) -> (i32, i32) {
    %c0_i32 = arith.constant 0 : i32
    %c0_i32_0 = arith.constant 0 : i32
    %c0_i32_1 = arith.constant 0 : i32
    return %c0_i32, %c0_i32_0 : i32, i32
  }
  func.func @transform_9(%arg0: i32) -> (i32, i32) {
    %c0_i32 = arith.constant 0 : i32
    %c0_i32_0 = arith.constant 0 : i32
    %c0_i32_1 = arith.constant 0 : i32
    return %c0_i32, %c0_i32_0 : i32, i32
  }
  func.func @transform_10(%arg0: i32) -> (i32, i32) {
    %c0_i32 = arith.constant 0 : i32
    %c0_i32_0 = arith.constant 0 : i32
    %c0_i32_1 = arith.constant 0 : i32
    return %c0_i32, %c0_i32_0 : i32, i32
  }
  func.func @transform_11(%arg0: i32) -> (i32, i32) {
    %c0_i32 = arith.constant 0 : i32
    %c0_i32_0 = arith.constant 0 : i32
    %c0_i32_1 = arith.constant 0 : i32
    return %c0_i32, %c0_i32_0 : i32, i32
  }
  func.func @transform_12(%arg0: i32) -> (i32, i32) {
    %c0_i32 = arith.constant 0 : i32
    %c0_i32_0 = arith.constant 0 : i32
    %c0_i32_1 = arith.constant 0 : i32
    return %c0_i32, %c0_i32_0 : i32, i32
  }
  func.func @transform_13(%arg0: i32) -> (i32, i32) {
    %c0_i32 = arith.constant 0 : i32
    %c0_i32_0 = arith.constant 0 : i32
    %c0_i32_1 = arith.constant 0 : i32
    return %c0_i32, %c0_i32_0 : i32, i32
  }
  func.func @transform_14(%arg0: i32) -> (i32, i32) {
    %c0_i32 = arith.constant 0 : i32
    %c0_i32_0 = arith.constant 0 : i32
    %c0_i32_1 = arith.constant 0 : i32
    return %c0_i32, %c0_i32_0 : i32, i32
  }
  func.func @transform_15(%arg0: i32) -> (i32, i32) {
    %c0_i32 = arith.constant 0 : i32
    %c0_i32_0 = arith.constant 0 : i32
    %c0_i32_1 = arith.constant 0 : i32
    return %c0_i32, %c0_i32_0 : i32, i32
  }
  func.func @transform_16(%arg0: i32) -> (i32, i32) {
    %c0_i32 = arith.constant 0 : i32
    %c0_i32_0 = arith.constant 0 : i32
    %c0_i32_1 = arith.constant 0 : i32
    return %c0_i32, %c0_i32_0 : i32, i32
  }
  func.func @transform_17(%arg0: i32) -> (i32, i32) {
    %c0_i32 = arith.constant 0 : i32
    %c0_i32_0 = arith.constant 0 : i32
    %c0_i32_1 = arith.constant 0 : i32
    return %c0_i32, %c0_i32_0 : i32, i32
  }
  func.func @transform_18(%arg0: i32) -> (i32, i32) {
    %c0_i32 = arith.constant 0 : i32
    %c0_i32_0 = arith.constant 0 : i32
    %c0_i32_1 = arith.constant 0 : i32
    return %c0_i32, %c0_i32_0 : i32, i32
  }
  func.func @transform_19(%arg0: i32) -> (i32, i32) {
    %c0_i32 = arith.constant 0 : i32
    %c0_i32_0 = arith.constant 0 : i32
    %c0_i32_1 = arith.constant 0 : i32
    return %c0_i32, %c0_i32_0 : i32, i32
  }
  func.func @transform_20(%arg0: i32) -> (i32, i32) {
    %c0_i32 = arith.constant 0 : i32
    %c0_i32_0 = arith.constant 0 : i32
    %c0_i32_1 = arith.constant 0 : i32
    return %c0_i32, %c0_i32_0 : i32, i32
  }
  func.func @transform_21(%arg0: i32) -> (i32, i32) {
    %c0_i32 = arith.constant 0 : i32
    %c0_i32_0 = arith.constant 0 : i32
    %c0_i32_1 = arith.constant 0 : i32
    return %c0_i32, %c0_i32_0 : i32, i32
  }
  func.func @transform_22(%arg0: i32) -> (i32, i32) {
    %c0_i32 = arith.constant 0 : i32
    %c0_i32_0 = arith.constant 0 : i32
    %c0_i32_1 = arith.constant 0 : i32
    return %c0_i32, %c0_i32_0 : i32, i32
  }
  func.func @transform_23(%arg0: i32) -> (i32, i32) {
    %c0_i32 = arith.constant 0 : i32
    %c0_i32_0 = arith.constant 0 : i32
    %c0_i32_1 = arith.constant 0 : i32
    return %c0_i32, %c0_i32_0 : i32, i32
  }
  func.func @transform_24(%arg0: i32) -> (i32, i32) {
    %c0_i32 = arith.constant 0 : i32
    %c0_i32_0 = arith.constant 0 : i32
    %c0_i32_1 = arith.constant 0 : i32
    return %c0_i32, %c0_i32_0 : i32, i32
  }
  func.func @transform_25(%arg0: i32) -> (i32, i32) {
    %c0_i32 = arith.constant 0 : i32
    %c0_i32_0 = arith.constant 0 : i32
    %c0_i32_1 = arith.constant 0 : i32
    return %c0_i32, %c0_i32_0 : i32, i32
  }
  func.func @transform_26(%arg0: i32) -> (i32, i32) {
    %c0_i32 = arith.constant 0 : i32
    %c0_i32_0 = arith.constant 0 : i32
    %c0_i32_1 = arith.constant 0 : i32
    return %c0_i32, %c0_i32_0 : i32, i32
  }
  func.func @transform_27(%arg0: i32) -> (i32, i32) {
    %c0_i32 = arith.constant 0 : i32
    %c0_i32_0 = arith.constant 0 : i32
    %c0_i32_1 = arith.constant 0 : i32
    return %c0_i32, %c0_i32_0 : i32, i32
  }
  func.func @transform_28(%arg0: i32) -> (i32, i32) {
    %c0_i32 = arith.constant 0 : i32
    %c0_i32_0 = arith.constant 0 : i32
    %c0_i32_1 = arith.constant 0 : i32
    return %c0_i32, %c0_i32_0 : i32, i32
  }
  func.func @transform_29(%arg0: i32) -> (i32, i32) {
    %c0_i32 = arith.constant 0 : i32
    %c0_i32_0 = arith.constant 0 : i32
    return %arg0, %c0_i32 : i32, i32
  }
}

</mosaic_0001>

<llo_original>
// kernel: tpu_custom_call.1
$region0: #{tpu_custom_call.1}
  #allocation0 [shape = 'u32[]', space=smem, size = 0x4, offset = 0x4, fixed_abs, tag = 'smem constant byte address 0x4 - core index']
  #allocation1 [shape = 'u32[144,128]{1,0:T(1,128)}', space=vmem, size = 0x12000, scoped, tag = 'internal scratch']
  #allocation2 [shape = 'f32[1,1]{1,0:T(1,128)S(1)}', space=vmem, size = 0x200, scoped, tag = 'scoped memory for tpu_custom_call.1']
  %s0 = inlined_call_operand.smem [shape: u32[30], index: -1, kind: input, shape index: {}]
  %s1 = sld [smem:[%s0]]
  %s2 = scalar_lea.smem %s0, 1
  %s3 = sld [smem:[%s2]]
  %s4 = scalar_lea.smem %s0, 2
  %s5 = sld [smem:[%s4]]
  %s6 = scalar_lea.smem %s0, 3
  %s7 = sld [smem:[%s6]]
  %s8 = scalar_lea.smem %s0, 4
  %s9 = sld [smem:[%s8]]
  %s10 = scalar_lea.smem %s0, 5
  %s11 = sld [smem:[%s10]]
  %s12 = scalar_lea.smem %s0, 6
  %s13 = sld [smem:[%s12]]
  %s14 = scalar_lea.smem %s0, 7
  %s15 = sld [smem:[%s14]]
  %s16 = scalar_lea.smem %s0, 8
  %s17 = sld [smem:[%s16]]
  %s18 = scalar_lea.smem %s0, 9
  %s19 = sld [smem:[%s18]]
  %s20 = scalar_lea.smem %s0, 10
  %s21 = sld [smem:[%s20]]
  %s22 = scalar_lea.smem %s0, 11
  %s23 = sld [smem:[%s22]]
  %s24 = scalar_lea.smem %s0, 12
  %s25 = sld [smem:[%s24]]
  %s26 = scalar_lea.smem %s0, 13
  %s27 = sld [smem:[%s26]]
  %s28 = scalar_lea.smem %s0, 14
  %s29 = sld [smem:[%s28]]
  %s30 = scalar_lea.smem %s0, 15
  %s31 = sld [smem:[%s30]]
  %s32 = scalar_lea.smem %s0, 16
  %s33 = sld [smem:[%s32]]
  %s34 = scalar_lea.smem %s0, 17
  %s35 = sld [smem:[%s34]]
  %s36 = scalar_lea.smem %s0, 18
  %s37 = sld [smem:[%s36]]
  %s38 = scalar_lea.smem %s0, 19
  %s39 = sld [smem:[%s38]]
  %s40 = scalar_lea.smem %s0, 20
  %s41 = sld [smem:[%s40]]
  %s42 = scalar_lea.smem %s0, 21
  %s43 = sld [smem:[%s42]]
  %s44 = scalar_lea.smem %s0, 22
  %s45 = sld [smem:[%s44]]
  %s46 = scalar_lea.smem %s0, 23
  %s47 = sld [smem:[%s46]]
  %s48 = scalar_lea.smem %s0, 24
  %s49 = sld [smem:[%s48]]
  %s50 = scalar_lea.smem %s0, 25
  %s51 = sld [smem:[%s50]]
  %s52 = scalar_lea.smem %s0, 26
  %s53 = sld [smem:[%s52]]
  %s54 = scalar_lea.smem %s0, 27
  %s55 = sld [smem:[%s54]]
  %s56 = scalar_lea.smem %s0, 28
  %s57 = sld [smem:[%s56]]
  %s58 = scalar_lea.smem %s0, 29
  %s59 = sld [smem:[%s58]]
  %s60 = sld [smem:[#allocation0]]
  $region149: #{tpu_custom_call.1} parent=0
    _
  %s62 = ssub.s32 1, %s60
  %s63 = scalar_select 0, %s62, %s60
  %v64 = vstv %s57
  %65 = vst [vmem:[#allocation2] sm:$0x1] %v64
  loop: start=0, step=1, limit=4
  $region2: #{tpu_custom_call.1} parent=0 // loop_pre_header
    _
  $region3: #{tpu_custom_call.1} parent=0 // loop_header
    %s67 = sphi 0, %s71
    %p68 = scmp.ge.s32.totalorder %s67, 4
    %s77 = sphi 0, %s79
    %s80 = sphi 0, %s77
    %s81 = sphi 0, %s80
    %s97 = sphi 0, %s81
    %s101 = sphi 0, %s101
    %s103 = sphi 0, %s101
    %s104 = sphi 0, %s103
    %s118 = sphi 0, %s104
    %s122 = sphi 0, %s122
    %s124 = sphi 0, %s122
    %s125 = sphi 0, %s124
    %s139 = sphi 0, %s125
    %s143 = sphi 0, %s143
    %s145 = sphi 0, %s143
    %s146 = sphi 0, %s145
    %s160 = sphi 0, %s146
    %s164 = sphi 0, %s164
    %s166 = sphi 0, %s164
    %s167 = sphi 0, %s166
    %s181 = sphi 0, %s167
    %s185 = sphi 0, %s185
    %s187 = sphi 0, %s185
    %s188 = sphi 0, %s187
    %s202 = sphi 0, %s188
    %s206 = sphi 0, %s206
    %s208 = sphi 0, %s206
    %s209 = sphi 0, %s208
    %s223 = sphi 0, %s209
    %s227 = sphi 0, %s227
    %s229 = sphi 0, %s227
    %s230 = sphi 0, %s229
    %s244 = sphi 0, %s230
    %s248 = sphi 0, %s248
    %s250 = sphi 0, %s248
    %s251 = sphi 0, %s250
    %s265 = sphi 0, %s251
    %s269 = sphi 0, %s269
    %s271 = sphi 0, %s269
    %s272 = sphi 0, %s271
    %s286 = sphi 0, %s272
    %s290 = sphi 0, %s290
    %s292 = sphi 0, %s290
    %s293 = sphi 0, %s292
    %s307 = sphi 0, %s293
    %s311 = sphi 0, %s311
    %s313 = sphi 0, %s311
    %s314 = sphi 0, %s313
    %s328 = sphi 0, %s314
    %s332 = sphi 0, %s332
    %s334 = sphi 0, %s332
    %s335 = sphi 0, %s334
    %s349 = sphi 0, %s335
    %s353 = sphi 0, %s353
    %s355 = sphi 0, %s353
    %s356 = sphi 0, %s355
    %s370 = sphi 0, %s356
    %s374 = sphi 0, %s374
    %s376 = sphi 0, %s374
    %s377 = sphi 0, %s376
    %s391 = sphi 0, %s377
    %s395 = sphi 0, %s395
    %s397 = sphi 0, %s395
    %s398 = sphi 0, %s397
    %s412 = sphi 0, %s398
    %s416 = sphi 0, %s416
    %s418 = sphi 0, %s416
    %s419 = sphi 0, %s418
    %s433 = sphi 0, %s419
    %s437 = sphi 0, %s437
    %s439 = sphi 0, %s437
    %s440 = sphi 0, %s439
    %s454 = sphi 0, %s440
    %s458 = sphi 0, %s458
    %s460 = sphi 0, %s458
    %s461 = sphi 0, %s460
    %s475 = sphi 0, %s461
    %s479 = sphi 0, %s479
    %s481 = sphi 0, %s479
    %s482 = sphi 0, %s481
    %s496 = sphi 0, %s482
    %s500 = sphi 0, %s500
    %s502 = sphi 0, %s500
    %s503 = sphi 0, %s502
    %s517 = sphi 0, %s503
    %s521 = sphi 0, %s521
    %s523 = sphi 0, %s521
    %s524 = sphi 0, %s523
    %s538 = sphi 0, %s524
    %s542 = sphi 0, %s542
    %s544 = sphi 0, %s542
    %s545 = sphi 0, %s544
    %s559 = sphi 0, %s545
    %s563 = sphi 0, %s563
    %s565 = sphi 0, %s563
    %s566 = sphi 0, %s565
    %s580 = sphi 0, %s566
    %s584 = sphi 0, %s584
    %s586 = sphi 0, %s584
    %s587 = sphi 0, %s586
    %s601 = sphi 0, %s587
    %s605 = sphi 0, %s605
    %s607 = sphi 0, %s605
    %s608 = sphi 0, %s607
    %s622 = sphi 0, %s608
    %s626 = sphi 0, %s626
    %s628 = sphi 0, %s626
    %s629 = sphi 0, %s628
    %s643 = sphi 0, %s629
    %s647 = sphi 0, %s647
    %s649 = sphi 0, %s647
    %s650 = sphi 0, %s649
    %s664 = sphi 0, %s650
    %s668 = sphi 0, %s668
    %s670 = sphi 0, %s668
    %s671 = sphi 0, %s670
    %s685 = sphi 0, %s671
    %s691 = sphi 0, %s693
    %s694 = sphi 0, %s691
    %s695 = sphi 0, %s694
    %s711 = sphi 0, %s695
  $region4: #{tpu_custom_call.1} parent=0 // loop_header_branch
    %70 = sbr.rel (%p68) target = $region8
  $region5: #{tpu_custom_call.1} parent=0 // loop_body
    %s72 = ssub.s32 %s67, 1
    %s73 = ssub.s32 %s67, 2
    %s74 = sadd.s32 %s67, 1
    %s75 = ssub.s32 %s67, %s74
    %p76 = scmp.eq.s32.totalorder %s75, 0
    %s78 = sadd.s32 %s77, 1
    %s79 = scalar_select %p76, %s77, %s78
    %p82 = pneg %p76
    %p83 = scmp.eq.s32.totalorder %s67, 1
    %p84 = por %p82, %p83
    %p85 = scmp.ne.s32.totalorder %s77, %s80
    %p86 = scmp.eq.s32.totalorder %s67, 0
    %p87 = por %p85, %p86
    %p88 = scmp.ne.s32.totalorder %s77, %s80
    %p89 = scmp.eq.s32.totalorder %s72, 1
    %p90 = por %p88, %p89
    %p91 = scmp.ne.s32.totalorder %s80, %s81
    %p92 = scmp.eq.s32.totalorder %s72, 0
    %p93 = por %p91, %p92
    %p94 = scmp.ne.s32.totalorder %s80, %s81
    %p95 = scmp.eq.s32.totalorder %s73, 1
    %p96 = por %p94, %p95
    %p98 = scmp.ne.s32.totalorder %s81, %s97
    %p99 = scmp.eq.s32.totalorder %s73, 0
    %p100 = por %p98, %p99
    %s102 = sadd.s32 %s101, 1
    %p105 = scmp.eq.s32.totalorder %s67, 1
    %p106 = scmp.ne.s32.totalorder %s101, %s103
    %p107 = scmp.eq.s32.totalorder %s67, 0
    %p108 = por %p106, %p107
    %p109 = scmp.ne.s32.totalorder %s101, %s103
    %p110 = scmp.eq.s32.totalorder %s72, 1
    %p111 = por %p109, %p110
    %p112 = scmp.ne.s32.totalorder %s103, %s104
    %p113 = scmp.eq.s32.totalorder %s72, 0
    %p114 = por %p112, %p113
    %p115 = scmp.ne.s32.totalorder %s103, %s104
    %p116 = scmp.eq.s32.totalorder %s73, 1
    %p117 = por %p115, %p116
    %p119 = scmp.ne.s32.totalorder %s104, %s118
    %p120 = scmp.eq.s32.totalorder %s73, 0
    %p121 = por %p119, %p120
    %s123 = sadd.s32 %s122, 1
    %p126 = scmp.eq.s32.totalorder %s67, 1
    %p127 = scmp.ne.s32.totalorder %s122, %s124
    %p128 = scmp.eq.s32.totalorder %s67, 0
    %p129 = por %p127, %p128
    %p130 = scmp.ne.s32.totalorder %s122, %s124
    %p131 = scmp.eq.s32.totalorder %s72, 1
    %p132 = por %p130, %p131
    %p133 = scmp.ne.s32.totalorder %s124, %s125
    %p134 = scmp.eq.s32.totalorder %s72, 0
    %p135 = por %p133, %p134
    %p136 = scmp.ne.s32.totalorder %s124, %s125
    %p137 = scmp.eq.s32.totalorder %s73, 1
    %p138 = por %p136, %p137
    %p140 = scmp.ne.s32.totalorder %s125, %s139
    %p141 = scmp.eq.s32.totalorder %s73, 0
    %p142 = por %p140, %p141
    %s144 = sadd.s32 %s143, 1
    %p147 = scmp.eq.s32.totalorder %s67, 1
    %p148 = scmp.ne.s32.totalorder %s143, %s145
    %p149 = scmp.eq.s32.totalorder %s67, 0
    %p150 = por %p148, %p149
    %p151 = scmp.ne.s32.totalorder %s143, %s145
    %p152 = scmp.eq.s32.totalorder %s72, 1
    %p153 = por %p151, %p152
    %p154 = scmp.ne.s32.totalorder %s145, %s146
    %p155 = scmp.eq.s32.totalorder %s72, 0
    %p156 = por %p154, %p155
    %p157 = scmp.ne.s32.totalorder %s145, %s146
    %p158 = scmp.eq.s32.totalorder %s73, 1
    %p159 = por %p157, %p158
    %p161 = scmp.ne.s32.totalorder %s146, %s160
    %p162 = scmp.eq.s32.totalorder %s73, 0
    %p163 = por %p161, %p162
    %s165 = sadd.s32 %s164, 1
    %p168 = scmp.eq.s32.totalorder %s67, 1
    %p169 = scmp.ne.s32.totalorder %s164, %s166
    %p170 = scmp.eq.s32.totalorder %s67, 0
    %p171 = por %p169, %p170
    %p172 = scmp.ne.s32.totalorder %s164, %s166
    %p173 = scmp.eq.s32.totalorder %s72, 1
    %p174 = por %p172, %p173
    %p175 = scmp.ne.s32.totalorder %s166, %s167
    %p176 = scmp.eq.s32.totalorder %s72, 0
    %p177 = por %p175, %p176
    %p178 = scmp.ne.s32.totalorder %s166, %s167
    %p179 = scmp.eq.s32.totalorder %s73, 1
    %p180 = por %p178, %p179
    %p182 = scmp.ne.s32.totalorder %s167, %s181
    %p183 = scmp.eq.s32.totalorder %s73, 0
    %p184 = por %p182, %p183
    %s186 = sadd.s32 %s185, 1
    %p189 = scmp.eq.s32.totalorder %s67, 1
    %p190 = scmp.ne.s32.totalorder %s185, %s187
    %p191 = scmp.eq.s32.totalorder %s67, 0
    %p192 = por %p190, %p191
    %p193 = scmp.ne.s32.totalorder %s185, %s187
    %p194 = scmp.eq.s32.totalorder %s72, 1
    %p195 = por %p193, %p194
    %p196 = scmp.ne.s32.totalorder %s187, %s188
    %p197 = scmp.eq.s32.totalorder %s72, 0
    %p198 = por %p196, %p197
    %p199 = scmp.ne.s32.totalorder %s187, %s188
    %p200 = scmp.eq.s32.totalorder %s73, 1
    %p201 = por %p199, %p200
    %p203 = scmp.ne.s32.totalorder %s188, %s202
    %p204 = scmp.eq.s32.totalorder %s73, 0
    %p205 = por %p203, %p204
    %s207 = sadd.s32 %s206, 1
    %p210 = scmp.eq.s32.totalorder %s67, 1
    %p211 = scmp.ne.s32.totalorder %s206, %s208
    %p212 = scmp.eq.s32.totalorder %s67, 0
    %p213 = por %p211, %p212
    %p214 = scmp.ne.s32.totalorder %s206, %s208
    %p215 = scmp.eq.s32.totalorder %s72, 1
    %p216 = por %p214, %p215
    %p217 = scmp.ne.s32.totalorder %s208, %s209
    %p218 = scmp.eq.s32.totalorder %s72, 0
    %p219 = por %p217, %p218
    %p220 = scmp.ne.s32.totalorder %s208, %s209
    %p221 = scmp.eq.s32.totalorder %s73, 1
    %p222 = por %p220, %p221
    %p224 = scmp.ne.s32.totalorder %s209, %s223
    %p225 = scmp.eq.s32.totalorder %s73, 0
    %p226 = por %p224, %p225
    %s228 = sadd.s32 %s227, 1
    %p231 = scmp.eq.s32.totalorder %s67, 1
    %p232 = scmp.ne.s32.totalorder %s227, %s229
    %p233 = scmp.eq.s32.totalorder %s67, 0
    %p234 = por %p232, %p233
    %p235 = scmp.ne.s32.totalorder %s227, %s229
    %p236 = scmp.eq.s32.totalorder %s72, 1
    %p237 = por %p235, %p236
    %p238 = scmp.ne.s32.totalorder %s229, %s230
    %p239 = scmp.eq.s32.totalorder %s72, 0
    %p240 = por %p238, %p239
    %p241 = scmp.ne.s32.totalorder %s229, %s230
    %p242 = scmp.eq.s32.totalorder %s73, 1
    %p243 = por %p241, %p242
    %p245 = scmp.ne.s32.totalorder %s230, %s244
    %p246 = scmp.eq.s32.totalorder %s73, 0
    %p247 = por %p245, %p246
    %s249 = sadd.s32 %s248, 1
    %p252 = scmp.eq.s32.totalorder %s67, 1
    %p253 = scmp.ne.s32.totalorder %s248, %s250
    %p254 = scmp.eq.s32.totalorder %s67, 0
    %p255 = por %p253, %p254
    %p256 = scmp.ne.s32.totalorder %s248, %s250
    %p257 = scmp.eq.s32.totalorder %s72, 1
    %p258 = por %p256, %p257
    %p259 = scmp.ne.s32.totalorder %s250, %s251
    %p260 = scmp.eq.s32.totalorder %s72, 0
    %p261 = por %p259, %p260
    %p262 = scmp.ne.s32.totalorder %s250, %s251
    %p263 = scmp.eq.s32.totalorder %s73, 1
    %p264 = por %p262, %p263
    %p266 = scmp.ne.s32.totalorder %s251, %s265
    %p267 = scmp.eq.s32.totalorder %s73, 0
    %p268 = por %p266, %p267
    %s270 = sadd.s32 %s269, 1
    %p273 = scmp.eq.s32.totalorder %s67, 1
    %p274 = scmp.ne.s32.totalorder %s269, %s271
    %p275 = scmp.eq.s32.totalorder %s67, 0
    %p276 = por %p274, %p275
    %p277 = scmp.ne.s32.totalorder %s269, %s271
    %p278 = scmp.eq.s32.totalorder %s72, 1
    %p279 = por %p277, %p278
    %p280 = scmp.ne.s32.totalorder %s271, %s272
    %p281 = scmp.eq.s32.totalorder %s72, 0
    %p282 = por %p280, %p281
    %p283 = scmp.ne.s32.totalorder %s271, %s272
    %p284 = scmp.eq.s32.totalorder %s73, 1
    %p285 = por %p283, %p284
    %p287 = scmp.ne.s32.totalorder %s272, %s286
    %p288 = scmp.eq.s32.totalorder %s73, 0
    %p289 = por %p287, %p288
    %s291 = sadd.s32 %s290, 1
    %p294 = scmp.eq.s32.totalorder %s67, 1
    %p295 = scmp.ne.s32.totalorder %s290, %s292
    %p296 = scmp.eq.s32.totalorder %s67, 0
    %p297 = por %p295, %p296
    %p298 = scmp.ne.s32.totalorder %s290, %s292
    %p299 = scmp.eq.s32.totalorder %s72, 1
    %p300 = por %p298, %p299
    %p301 = scmp.ne.s32.totalorder %s292, %s293
    %p302 = scmp.eq.s32.totalorder %s72, 0
    %p303 = por %p301, %p302
    %p304 = scmp.ne.s32.totalorder %s292, %s293
    %p305 = scmp.eq.s32.totalorder %s73, 1
    %p306 = por %p304, %p305
    %p308 = scmp.ne.s32.totalorder %s293, %s307
    %p309 = scmp.eq.s32.totalorder %s73, 0
    %p310 = por %p308, %p309
    %s312 = sadd.s32 %s311, 1
    %p315 = scmp.eq.s32.totalorder %s67, 1
    %p316 = scmp.ne.s32.totalorder %s311, %s313
    %p317 = scmp.eq.s32.totalorder %s67, 0
    %p318 = por %p316, %p317
    %p319 = scmp.ne.s32.totalorder %s311, %s313
    %p320 = scmp.eq.s32.totalorder %s72, 1
    %p321 = por %p319, %p320
    %p322 = scmp.ne.s32.totalorder %s313, %s314
    %p323 = scmp.eq.s32.totalorder %s72, 0
    %p324 = por %p322, %p323
    %p325 = scmp.ne.s32.totalorder %s313, %s314
    %p326 = scmp.eq.s32.totalorder %s73, 1
    %p327 = por %p325, %p326
    %p329 = scmp.ne.s32.totalorder %s314, %s328
    %p330 = scmp.eq.s32.totalorder %s73, 0
    %p331 = por %p329, %p330
    %s333 = sadd.s32 %s332, 1
    %p336 = scmp.eq.s32.totalorder %s67, 1
    %p337 = scmp.ne.s32.totalorder %s332, %s334
    %p338 = scmp.eq.s32.totalorder %s67, 0
    %p339 = por %p337, %p338
    %p340 = scmp.ne.s32.totalorder %s332, %s334
    %p341 = scmp.eq.s32.totalorder %s72, 1
    %p342 = por %p340, %p341
    %p343 = scmp.ne.s32.totalorder %s334, %s335
    %p344 = scmp.eq.s32.totalorder %s72, 0
    %p345 = por %p343, %p344
    %p346 = scmp.ne.s32.totalorder %s334, %s335
    %p347 = scmp.eq.s32.totalorder %s73, 1
    %p348 = por %p346, %p347
    %p350 = scmp.ne.s32.totalorder %s335, %s349
    %p351 = scmp.eq.s32.totalorder %s73, 0
    %p352 = por %p350, %p351
    %s354 = sadd.s32 %s353, 1
    %p357 = scmp.eq.s32.totalorder %s67, 1
    %p358 = scmp.ne.s32.totalorder %s353, %s355
    %p359 = scmp.eq.s32.totalorder %s67, 0
    %p360 = por %p358, %p359
    %p361 = scmp.ne.s32.totalorder %s353, %s355
    %p362 = scmp.eq.s32.totalorder %s72, 1
    %p363 = por %p361, %p362
    %p364 = scmp.ne.s32.totalorder %s355, %s356
    %p365 = scmp.eq.s32.totalorder %s72, 0
    %p366 = por %p364, %p365
    %p367 = scmp.ne.s32.totalorder %s355, %s356
    %p368 = scmp.eq.s32.totalorder %s73, 1
    %p369 = por %p367, %p368
    %p371 = scmp.ne.s32.totalorder %s356, %s370
    %p372 = scmp.eq.s32.totalorder %s73, 0
    %p373 = por %p371, %p372
    %s375 = sadd.s32 %s374, 1
    %p378 = scmp.eq.s32.totalorder %s67, 1
    %p379 = scmp.ne.s32.totalorder %s374, %s376
    %p380 = scmp.eq.s32.totalorder %s67, 0
    %p381 = por %p379, %p380
    %p382 = scmp.ne.s32.totalorder %s374, %s376
    %p383 = scmp.eq.s32.totalorder %s72, 1
    %p384 = por %p382, %p383
    %p385 = scmp.ne.s32.totalorder %s376, %s377
    %p386 = scmp.eq.s32.totalorder %s72, 0
    %p387 = por %p385, %p386
    %p388 = scmp.ne.s32.totalorder %s376, %s377
    %p389 = scmp.eq.s32.totalorder %s73, 1
    %p390 = por %p388, %p389
    %p392 = scmp.ne.s32.totalorder %s377, %s391
    %p393 = scmp.eq.s32.totalorder %s73, 0
    %p394 = por %p392, %p393
    %s396 = sadd.s32 %s395, 1
    %p399 = scmp.eq.s32.totalorder %s67, 1
    %p400 = scmp.ne.s32.totalorder %s395, %s397
    %p401 = scmp.eq.s32.totalorder %s67, 0
    %p402 = por %p400, %p401
    %p403 = scmp.ne.s32.totalorder %s395, %s397
    %p404 = scmp.eq.s32.totalorder %s72, 1
    %p405 = por %p403, %p404
    %p406 = scmp.ne.s32.totalorder %s397, %s398
    %p407 = scmp.eq.s32.totalorder %s72, 0
    %p408 = por %p406, %p407
    %p409 = scmp.ne.s32.totalorder %s397, %s398
    %p410 = scmp.eq.s32.totalorder %s73, 1
    %p411 = por %p409, %p410
    %p413 = scmp.ne.s32.totalorder %s398, %s412
    %p414 = scmp.eq.s32.totalorder %s73, 0
    %p415 = por %p413, %p414
    %s417 = sadd.s32 %s416, 1
    %p420 = scmp.eq.s32.totalorder %s67, 1
    %p421 = scmp.ne.s32.totalorder %s416, %s418
    %p422 = scmp.eq.s32.totalorder %s67, 0
    %p423 = por %p421, %p422
    %p424 = scmp.ne.s32.totalorder %s416, %s418
    %p425 = scmp.eq.s32.totalorder %s72, 1
    %p426 = por %p424, %p425
    %p427 = scmp.ne.s32.totalorder %s418, %s419
    %p428 = scmp.eq.s32.totalorder %s72, 0
    %p429 = por %p427, %p428
    %p430 = scmp.ne.s32.totalorder %s418, %s419
    %p431 = scmp.eq.s32.totalorder %s73, 1
    %p432 = por %p430, %p431
    %p434 = scmp.ne.s32.totalorder %s419, %s433
    %p435 = scmp.eq.s32.totalorder %s73, 0
    %p436 = por %p434, %p435
    %s438 = sadd.s32 %s437, 1
    %p441 = scmp.eq.s32.totalorder %s67, 1
    %p442 = scmp.ne.s32.totalorder %s437, %s439
    %p443 = scmp.eq.s32.totalorder %s67, 0
    %p444 = por %p442, %p443
    %p445 = scmp.ne.s32.totalorder %s437, %s439
    %p446 = scmp.eq.s32.totalorder %s72, 1
    %p447 = por %p445, %p446
    %p448 = scmp.ne.s32.totalorder %s439, %s440
    %p449 = scmp.eq.s32.totalorder %s72, 0
    %p450 = por %p448, %p449
    %p451 = scmp.ne.s32.totalorder %s439, %s440
    %p452 = scmp.eq.s32.totalorder %s73, 1
    %p453 = por %p451, %p452
    %p455 = scmp.ne.s32.totalorder %s440, %s454
    %p456 = scmp.eq.s32.totalorder %s73, 0
    %p457 = por %p455, %p456
    %s459 = sadd.s32 %s458, 1
    %p462 = scmp.eq.s32.totalorder %s67, 1
    %p463 = scmp.ne.s32.totalorder %s458, %s460
    %p464 = scmp.eq.s32.totalorder %s67, 0
    %p465 = por %p463, %p464
    %p466 = scmp.ne.s32.totalorder %s458, %s460
    %p467 = scmp.eq.s32.totalorder %s72, 1
    %p468 = por %p466, %p467
    %p469 = scmp.ne.s32.totalorder %s460, %s461
    %p470 = scmp.eq.s32.totalorder %s72, 0
    %p471 = por %p469, %p470
    %p472 = scmp.ne.s32.totalorder %s460, %s461
    %p473 = scmp.eq.s32.totalorder %s73, 1
    %p474 = por %p472, %p473
    %p476 = scmp.ne.s32.totalorder %s461, %s475
    %p477 = scmp.eq.s32.totalorder %s73, 0
    %p478 = por %p476, %p477
    %s480 = sadd.s32 %s479, 1
    %p483 = scmp.eq.s32.totalorder %s67, 1
    %p484 = scmp.ne.s32.totalorder %s479, %s481
    %p485 = scmp.eq.s32.totalorder %s67, 0
    %p486 = por %p484, %p485
    %p487 = scmp.ne.s32.totalorder %s479, %s481
    %p488 = scmp.eq.s32.totalorder %s72, 1
    %p489 = por %p487, %p488
    %p490 = scmp.ne.s32.totalorder %s481, %s482
    %p491 = scmp.eq.s32.totalorder %s72, 0
    %p492 = por %p490, %p491
    %p493 = scmp.ne.s32.totalorder %s481, %s482
    %p494 = scmp.eq.s32.totalorder %s73, 1
    %p495 = por %p493, %p494
    %p497 = scmp.ne.s32.totalorder %s482, %s496
    %p498 = scmp.eq.s32.totalorder %s73, 0
    %p499 = por %p497, %p498
    %s501 = sadd.s32 %s500, 1
    %p504 = scmp.eq.s32.totalorder %s67, 1
    %p505 = scmp.ne.s32.totalorder %s500, %s502
    %p506 = scmp.eq.s32.totalorder %s67, 0
    %p507 = por %p505, %p506
    %p508 = scmp.ne.s32.totalorder %s500, %s502
    %p509 = scmp.eq.s32.totalorder %s72, 1
    %p510 = por %p508, %p509
    %p511 = scmp.ne.s32.totalorder %s502, %s503
    %p512 = scmp.eq.s32.totalorder %s72, 0
    %p513 = por %p511, %p512
    %p514 = scmp.ne.s32.totalorder %s502, %s503
    %p515 = scmp.eq.s32.totalorder %s73, 1
    %p516 = por %p514, %p515
    %p518 = scmp.ne.s32.totalorder %s503, %s517
    %p519 = scmp.eq.s32.totalorder %s73, 0
    %p520 = por %p518, %p519
    %s522 = sadd.s32 %s521, 1
    %p525 = scmp.eq.s32.totalorder %s67, 1
    %p526 = scmp.ne.s32.totalorder %s521, %s523
    %p527 = scmp.eq.s32.totalorder %s67, 0
    %p528 = por %p526, %p527
    %p529 = scmp.ne.s32.totalorder %s521, %s523
    %p530 = scmp.eq.s32.totalorder %s72, 1
    %p531 = por %p529, %p530
    %p532 = scmp.ne.s32.totalorder %s523, %s524
    %p533 = scmp.eq.s32.totalorder %s72, 0
    %p534 = por %p532, %p533
    %p535 = scmp.ne.s32.totalorder %s523, %s524
    %p536 = scmp.eq.s32.totalorder %s73, 1
    %p537 = por %p535, %p536
    %p539 = scmp.ne.s32.totalorder %s524, %s538
    %p540 = scmp.eq.s32.totalorder %s73, 0
    %p541 = por %p539, %p540
    %s543 = sadd.s32 %s542, 1
    %p546 = scmp.eq.s32.totalorder %s67, 1
    %p547 = scmp.ne.s32.totalorder %s542, %s544
    %p548 = scmp.eq.s32.totalorder %s67, 0
    %p549 = por %p547, %p548
    %p550 = scmp.ne.s32.totalorder %s542, %s544
    %p551 = scmp.eq.s32.totalorder %s72, 1
    %p552 = por %p550, %p551
    %p553 = scmp.ne.s32.totalorder %s544, %s545
    %p554 = scmp.eq.s32.totalorder %s72, 0
    %p555 = por %p553, %p554
    %p556 = scmp.ne.s32.totalorder %s544, %s545
    %p557 = scmp.eq.s32.totalorder %s73, 1
    %p558 = por %p556, %p557
    %p560 = scmp.ne.s32.totalorder %s545, %s559
    %p561 = scmp.eq.s32.totalorder %s73, 0
    %p562 = por %p560, %p561
    %s564 = sadd.s32 %s563, 1
    %p567 = scmp.eq.s32.totalorder %s67, 1
    %p568 = scmp.ne.s32.totalorder %s563, %s565
    %p569 = scmp.eq.s32.totalorder %s67, 0
    %p570 = por %p568, %p569
    %p571 = scmp.ne.s32.totalorder %s563, %s565
    %p572 = scmp.eq.s32.totalorder %s72, 1
    %p573 = por %p571, %p572
    %p574 = scmp.ne.s32.totalorder %s565, %s566
    %p575 = scmp.eq.s32.totalorder %s72, 0
    %p576 = por %p574, %p575
    %p577 = scmp.ne.s32.totalorder %s565, %s566
    %p578 = scmp.eq.s32.totalorder %s73, 1
    %p579 = por %p577, %p578
    %p581 = scmp.ne.s32.totalorder %s566, %s580
    %p582 = scmp.eq.s32.totalorder %s73, 0
    %p583 = por %p581, %p582
    %s585 = sadd.s32 %s584, 1
    %p588 = scmp.eq.s32.totalorder %s67, 1
    %p589 = scmp.ne.s32.totalorder %s584, %s586
    %p590 = scmp.eq.s32.totalorder %s67, 0
    %p591 = por %p589, %p590
    %p592 = scmp.ne.s32.totalorder %s584, %s586
    %p593 = scmp.eq.s32.totalorder %s72, 1
    %p594 = por %p592, %p593
    %p595 = scmp.ne.s32.totalorder %s586, %s587
    %p596 = scmp.eq.s32.totalorder %s72, 0
    %p597 = por %p595, %p596
    %p598 = scmp.ne.s32.totalorder %s586, %s587
    %p599 = scmp.eq.s32.totalorder %s73, 1
    %p600 = por %p598, %p599
    %p602 = scmp.ne.s32.totalorder %s587, %s601
    %p603 = scmp.eq.s32.totalorder %s73, 0
    %p604 = por %p602, %p603
    %s606 = sadd.s32 %s605, 1
    %p609 = scmp.eq.s32.totalorder %s67, 1
    %p610 = scmp.ne.s32.totalorder %s605, %s607
    %p611 = scmp.eq.s32.totalorder %s67, 0
    %p612 = por %p610, %p611
    %p613 = scmp.ne.s32.totalorder %s605, %s607
    %p614 = scmp.eq.s32.totalorder %s72, 1
    %p615 = por %p613, %p614
    %p616 = scmp.ne.s32.totalorder %s607, %s608
    %p617 = scmp.eq.s32.totalorder %s72, 0
    %p618 = por %p616, %p617
    %p619 = scmp.ne.s32.totalorder %s607, %s608
    %p620 = scmp.eq.s32.totalorder %s73, 1
    %p621 = por %p619, %p620
    %p623 = scmp.ne.s32.totalorder %s608, %s622
    %p624 = scmp.eq.s32.totalorder %s73, 0
    %p625 = por %p623, %p624
    %s627 = sadd.s32 %s626, 1
    %p630 = scmp.eq.s32.totalorder %s67, 1
    %p631 = scmp.ne.s32.totalorder %s626, %s628
    %p632 = scmp.eq.s32.totalorder %s67, 0
    %p633 = por %p631, %p632
    %p634 = scmp.ne.s32.totalorder %s626, %s628
    %p635 = scmp.eq.s32.totalorder %s72, 1
    %p636 = por %p634, %p635
    %p637 = scmp.ne.s32.totalorder %s628, %s629
    %p638 = scmp.eq.s32.totalorder %s72, 0
    %p639 = por %p637, %p638
    %p640 = scmp.ne.s32.totalorder %s628, %s629
    %p641 = scmp.eq.s32.totalorder %s73, 1
    %p642 = por %p640, %p641
    %p644 = scmp.ne.s32.totalorder %s629, %s643
    %p645 = scmp.eq.s32.totalorder %s73, 0
    %p646 = por %p644, %p645
    %s648 = sadd.s32 %s647, 1
    %p651 = scmp.eq.s32.totalorder %s67, 1
    %p652 = scmp.ne.s32.totalorder %s647, %s649
    %p653 = scmp.eq.s32.totalorder %s67, 0
    %p654 = por %p652, %p653
    %p655 = scmp.ne.s32.totalorder %s647, %s649
    %p656 = scmp.eq.s32.totalorder %s72, 1
    %p657 = por %p655, %p656
    %p658 = scmp.ne.s32.totalorder %s649, %s650
    %p659 = scmp.eq.s32.totalorder %s72, 0
    %p660 = por %p658, %p659
    %p661 = scmp.ne.s32.totalorder %s649, %s650
    %p662 = scmp.eq.s32.totalorder %s73, 1
    %p663 = por %p661, %p662
    %p665 = scmp.ne.s32.totalorder %s650, %s664
    %p666 = scmp.eq.s32.totalorder %s73, 0
    %p667 = por %p665, %p666
    %s669 = sadd.s32 %s668, 1
    %p672 = scmp.eq.s32.totalorder %s67, 1
    %p673 = scmp.ne.s32.totalorder %s668, %s670
    %p674 = scmp.eq.s32.totalorder %s67, 0
    %p675 = por %p673, %p674
    %p676 = scmp.ne.s32.totalorder %s668, %s670
    %p677 = scmp.eq.s32.totalorder %s72, 1
    %p678 = por %p676, %p677
    %p679 = scmp.ne.s32.totalorder %s670, %s671
    %p680 = scmp.eq.s32.totalorder %s72, 0
    %p681 = por %p679, %p680
    %p682 = scmp.ne.s32.totalorder %s670, %s671
    %p683 = scmp.eq.s32.totalorder %s73, 1
    %p684 = por %p682, %p683
    %p686 = scmp.ne.s32.totalorder %s671, %s685
    %p687 = scmp.eq.s32.totalorder %s73, 0
    %p688 = por %p686, %p687
    %s689 = ssub.s32 %s67, %s74
    %p690 = scmp.eq.s32.totalorder %s689, 0
    %s692 = sadd.s32 %s691, 1
    %s693 = scalar_select %p690, %s691, %s692
    %p696 = pneg %p690
    %p697 = scmp.eq.s32.totalorder %s67, 1
    %p698 = por %p696, %p697
    %p699 = scmp.ne.s32.totalorder %s691, %s694
    %p700 = scmp.eq.s32.totalorder %s67, 0
    %p701 = por %p699, %p700
    %p702 = scmp.ne.s32.totalorder %s691, %s694
    %p703 = scmp.eq.s32.totalorder %s72, 1
    %p704 = por %p702, %p703
    %p705 = scmp.ne.s32.totalorder %s694, %s695
    %p706 = scmp.eq.s32.totalorder %s72, 0
    %p707 = por %p705, %p706
    %p708 = scmp.ne.s32.totalorder %s694, %s695
    %p709 = scmp.eq.s32.totalorder %s73, 1
    %p710 = por %p708, %p709
    %p712 = scmp.ne.s32.totalorder %s695, %s711
    %p713 = scmp.eq.s32.totalorder %s73, 0
    %p714 = por %p712, %p713
    %p715 = scmp.le.s32.totalorder 1, %s67
    %p716 = scmp.lt.s32.totalorder %s67, 3
    %p717 = pnand %p715, %p716
    %p718 = pneg %p717
    // Predicated region
    $region9: #{tpu_custom_call.1} parent=5 // pred_check
      _
    $region10: #{tpu_custom_call.1} parent=5 // pred_check_branch
      %720 = sbr.rel (%p717) target = $region12
    $region11: #{tpu_custom_call.1} parent=5 // pred_region
      %s721 = ssub.s32 %s67, 1
      // Predicated region
      $region13: #{tpu_custom_call.1} parent=11 // pred_check
        %p722 = pneg %p114
      $region14: #{tpu_custom_call.1} parent=11 // pred_check_branch
        %724 = sbr.rel (%p722) target = $region16
      $region15: #{tpu_custom_call.1} parent=11 // pred_region
        _
      $region16: #{tpu_custom_call.1} parent=11 // pred_fallthru
        _
      // Predicated region
      $region17: #{tpu_custom_call.1} parent=11 // pred_check
        %p725 = pneg %p135
      $region18: #{tpu_custom_call.1} parent=11 // pred_check_branch
        %727 = sbr.rel (%p725) target = $region20
      $region19: #{tpu_custom_call.1} parent=11 // pred_region
        _
      $region20: #{tpu_custom_call.1} parent=11 // pred_fallthru
        _
      // Predicated region
      $region21: #{tpu_custom_call.1} parent=11 // pred_check
        %p728 = pneg %p156
      $region22: #{tpu_custom_call.1} parent=11 // pred_check_branch
        %730 = sbr.rel (%p728) target = $region24
      $region23: #{tpu_custom_call.1} parent=11 // pred_region
        _
      $region24: #{tpu_custom_call.1} parent=11 // pred_fallthru
        _
      // Predicated region
      $region25: #{tpu_custom_call.1} parent=11 // pred_check
        %p731 = pneg %p177
      $region26: #{tpu_custom_call.1} parent=11 // pred_check_branch
        %733 = sbr.rel (%p731) target = $region28
      $region27: #{tpu_custom_call.1} parent=11 // pred_region
        _
      $region28: #{tpu_custom_call.1} parent=11 // pred_fallthru
        _
      // Predicated region
      $region29: #{tpu_custom_call.1} parent=11 // pred_check
        %p734 = pneg %p198
      $region30: #{tpu_custom_call.1} parent=11 // pred_check_branch
        %736 = sbr.rel (%p734) target = $region32
      $region31: #{tpu_custom_call.1} parent=11 // pred_region
        _
      $region32: #{tpu_custom_call.1} parent=11 // pred_fallthru
        _
      // Predicated region
      $region33: #{tpu_custom_call.1} parent=11 // pred_check
        %p737 = pneg %p219
      $region34: #{tpu_custom_call.1} parent=11 // pred_check_branch
        %739 = sbr.rel (%p737) target = $region36
      $region35: #{tpu_custom_call.1} parent=11 // pred_region
        _
      $region36: #{tpu_custom_call.1} parent=11 // pred_fallthru
        _
      // Predicated region
      $region37: #{tpu_custom_call.1} parent=11 // pred_check
        %p740 = pneg %p240
      $region38: #{tpu_custom_call.1} parent=11 // pred_check_branch
        %742 = sbr.rel (%p740) target = $region40
      $region39: #{tpu_custom_call.1} parent=11 // pred_region
        _
      $region40: #{tpu_custom_call.1} parent=11 // pred_fallthru
        _
      // Predicated region
      $region41: #{tpu_custom_call.1} parent=11 // pred_check
        %p743 = pneg %p261
      $region42: #{tpu_custom_call.1} parent=11 // pred_check_branch
        %745 = sbr.rel (%p743) target = $region44
      $region43: #{tpu_custom_call.1} parent=11 // pred_region
        _
      $region44: #{tpu_custom_call.1} parent=11 // pred_fallthru
        _
      // Predicated region
      $region45: #{tpu_custom_call.1} parent=11 // pred_check
        %p746 = pneg %p282
      $region46: #{tpu_custom_call.1} parent=11 // pred_check_branch
        %748 = sbr.rel (%p746) target = $region48
      $region47: #{tpu_custom_call.1} parent=11 // pred_region
        _
      $region48: #{tpu_custom_call.1} parent=11 // pred_fallthru
        _
      // Predicated region
      $region49: #{tpu_custom_call.1} parent=11 // pred_check
        %p749 = pneg %p303
      $region50: #{tpu_custom_call.1} parent=11 // pred_check_branch
        %751 = sbr.rel (%p749) target = $region52
      $region51: #{tpu_custom_call.1} parent=11 // pred_region
        _
      $region52: #{tpu_custom_call.1} parent=11 // pred_fallthru
        _
      // Predicated region
      $region53: #{tpu_custom_call.1} parent=11 // pred_check
        %p752 = pneg %p324
      $region54: #{tpu_custom_call.1} parent=11 // pred_check_branch
        %754 = sbr.rel (%p752) target = $region56
      $region55: #{tpu_custom_call.1} parent=11 // pred_region
        _
      $region56: #{tpu_custom_call.1} parent=11 // pred_fallthru
        _
      // Predicated region
      $region57: #{tpu_custom_call.1} parent=11 // pred_check
        %p755 = pneg %p345
      $region58: #{tpu_custom_call.1} parent=11 // pred_check_branch
        %757 = sbr.rel (%p755) target = $region60
      $region59: #{tpu_custom_call.1} parent=11 // pred_region
        _
      $region60: #{tpu_custom_call.1} parent=11 // pred_fallthru
        _
      // Predicated region
      $region61: #{tpu_custom_call.1} parent=11 // pred_check
        %p758 = pneg %p366
      $region62: #{tpu_custom_call.1} parent=11 // pred_check_branch
        %760 = sbr.rel (%p758) target = $region64
      $region63: #{tpu_custom_call.1} parent=11 // pred_region
        _
      $region64: #{tpu_custom_call.1} parent=11 // pred_fallthru
        _
      // Predicated region
      $region65: #{tpu_custom_call.1} parent=11 // pred_check
        %p761 = pneg %p387
      $region66: #{tpu_custom_call.1} parent=11 // pred_check_branch
        %763 = sbr.rel (%p761) target = $region68
      $region67: #{tpu_custom_call.1} parent=11 // pred_region
        _
      $region68: #{tpu_custom_call.1} parent=11 // pred_fallthru
        _
      // Predicated region
      $region69: #{tpu_custom_call.1} parent=11 // pred_check
        %p764 = pneg %p408
      $region70: #{tpu_custom_call.1} parent=11 // pred_check_branch
        %766 = sbr.rel (%p764) target = $region72
      $region71: #{tpu_custom_call.1} parent=11 // pred_region
        _
      $region72: #{tpu_custom_call.1} parent=11 // pred_fallthru
        _
      // Predicated region
      $region73: #{tpu_custom_call.1} parent=11 // pred_check
        %p767 = pneg %p429
      $region74: #{tpu_custom_call.1} parent=11 // pred_check_branch
        %769 = sbr.rel (%p767) target = $region76
      $region75: #{tpu_custom_call.1} parent=11 // pred_region
        _
      $region76: #{tpu_custom_call.1} parent=11 // pred_fallthru
        _
      // Predicated region
      $region77: #{tpu_custom_call.1} parent=11 // pred_check
        %p770 = pneg %p450
      $region78: #{tpu_custom_call.1} parent=11 // pred_check_branch
        %772 = sbr.rel (%p770) target = $region80
      $region79: #{tpu_custom_call.1} parent=11 // pred_region
        _
      $region80: #{tpu_custom_call.1} parent=11 // pred_fallthru
        _
      // Predicated region
      $region81: #{tpu_custom_call.1} parent=11 // pred_check
        %p773 = pneg %p471
      $region82: #{tpu_custom_call.1} parent=11 // pred_check_branch
        %775 = sbr.rel (%p773) target = $region84
      $region83: #{tpu_custom_call.1} parent=11 // pred_region
        _
      $region84: #{tpu_custom_call.1} parent=11 // pred_fallthru
        _
      // Predicated region
      $region85: #{tpu_custom_call.1} parent=11 // pred_check
        %p776 = pneg %p492
      $region86: #{tpu_custom_call.1} parent=11 // pred_check_branch
        %778 = sbr.rel (%p776) target = $region88
      $region87: #{tpu_custom_call.1} parent=11 // pred_region
        _
      $region88: #{tpu_custom_call.1} parent=11 // pred_fallthru
        _
      // Predicated region
      $region89: #{tpu_custom_call.1} parent=11 // pred_check
        %p779 = pneg %p513
      $region90: #{tpu_custom_call.1} parent=11 // pred_check_branch
        %781 = sbr.rel (%p779) target = $region92
      $region91: #{tpu_custom_call.1} parent=11 // pred_region
        _
      $region92: #{tpu_custom_call.1} parent=11 // pred_fallthru
        _
      // Predicated region
      $region93: #{tpu_custom_call.1} parent=11 // pred_check
        %p782 = pneg %p534
      $region94: #{tpu_custom_call.1} parent=11 // pred_check_branch
        %784 = sbr.rel (%p782) target = $region96
      $region95: #{tpu_custom_call.1} parent=11 // pred_region
        _
      $region96: #{tpu_custom_call.1} parent=11 // pred_fallthru
        _
      // Predicated region
      $region97: #{tpu_custom_call.1} parent=11 // pred_check
        %p785 = pneg %p555
      $region98: #{tpu_custom_call.1} parent=11 // pred_check_branch
        %787 = sbr.rel (%p785) target = $region100
      $region99: #{tpu_custom_call.1} parent=11 // pred_region
        _
      $region100: #{tpu_custom_call.1} parent=11 // pred_fallthru
        _
      // Predicated region
      $region101: #{tpu_custom_call.1} parent=11 // pred_check
        %p788 = pneg %p576
      $region102: #{tpu_custom_call.1} parent=11 // pred_check_branch
        %790 = sbr.rel (%p788) target = $region104
      $region103: #{tpu_custom_call.1} parent=11 // pred_region
        _
      $region104: #{tpu_custom_call.1} parent=11 // pred_fallthru
        _
      // Predicated region
      $region105: #{tpu_custom_call.1} parent=11 // pred_check
        %p791 = pneg %p597
      $region106: #{tpu_custom_call.1} parent=11 // pred_check_branch
        %793 = sbr.rel (%p791) target = $region108
      $region107: #{tpu_custom_call.1} parent=11 // pred_region
        _
      $region108: #{tpu_custom_call.1} parent=11 // pred_fallthru
        _
      // Predicated region
      $region109: #{tpu_custom_call.1} parent=11 // pred_check
        %p794 = pneg %p618
      $region110: #{tpu_custom_call.1} parent=11 // pred_check_branch
        %796 = sbr.rel (%p794) target = $region112
      $region111: #{tpu_custom_call.1} parent=11 // pred_region
        _
      $region112: #{tpu_custom_call.1} parent=11 // pred_fallthru
        _
      // Predicated region
      $region113: #{tpu_custom_call.1} parent=11 // pred_check
        %p797 = pneg %p639
      $region114: #{tpu_custom_call.1} parent=11 // pred_check_branch
        %799 = sbr.rel (%p797) target = $region116
      $region115: #{tpu_custom_call.1} parent=11 // pred_region
        _
      $region116: #{tpu_custom_call.1} parent=11 // pred_fallthru
        _
      // Predicated region
      $region117: #{tpu_custom_call.1} parent=11 // pred_check
        %p800 = pneg %p660
      $region118: #{tpu_custom_call.1} parent=11 // pred_check_branch
        %802 = sbr.rel (%p800) target = $region120
      $region119: #{tpu_custom_call.1} parent=11 // pred_region
        _
      $region120: #{tpu_custom_call.1} parent=11 // pred_fallthru
        _
      // Predicated region
      $region121: #{tpu_custom_call.1} parent=11 // pred_check
        %p803 = pneg %p681
      $region122: #{tpu_custom_call.1} parent=11 // pred_check_branch
        %805 = sbr.rel (%p803) target = $region124
      $region123: #{tpu_custom_call.1} parent=11 // pred_region
        _
      $region124: #{tpu_custom_call.1} parent=11 // pred_fallthru
        _
    $region12: #{tpu_custom_call.1} parent=5 // pred_fallthru
      _
    %p806 = scmp.lt.s32.totalorder %s67, 2
    // Predicated region
    $region125: #{tpu_custom_call.1} parent=5 // pred_check
      %p807 = pneg %p806
    $region126: #{tpu_custom_call.1} parent=5 // pred_check_branch
      %809 = sbr.rel (%p807) target = $region128
    $region127: #{tpu_custom_call.1} parent=5 // pred_region
      // Predicated region
      $region129: #{tpu_custom_call.1} parent=127 // pred_check
        %p810 = pneg %p87
      $region130: #{tpu_custom_call.1} parent=127 // pred_check_branch
        %812 = sbr.rel (%p810) target = $region132
      $region131: #{tpu_custom_call.1} parent=127 // pred_region
        %s813 = smul.u32 16, %s67
        %p814 = scmp.lt.s32.totalorder %s813, 31
        %s815 = scalar_select %p814, %s813, 31
        %s816 = smul.addr %s815, 8
        %s817 = scalar_lea.vmem %s1, %s816
        %s818 = smul.u32 16, %s67
      $region132: #{tpu_custom_call.1} parent=127 // pred_fallthru
        _
    $region128: #{tpu_custom_call.1} parent=5 // pred_fallthru
      _
    %p819 = scmp.le.s32.totalorder 1, %s67
    %p820 = scmp.lt.s32.totalorder %s67, 3
    %p821 = pnand %p819, %p820
    %p822 = pneg %p821
    // Predicated region
    $region133: #{tpu_custom_call.1} parent=5 // pred_check
      _
    $region134: #{tpu_custom_call.1} parent=5 // pred_check_branch
      %824 = sbr.rel (%p821) target = $region136
    $region135: #{tpu_custom_call.1} parent=5 // pred_region
      %s825 = ssub.s32 %s67, 1
      %s826 = smul.u32 16, %s72
      %p827 = scmp.lt.s32.totalorder %s826, 31
      %s828 = scalar_select %p827, %s826, 31
      %s829 = smul.addr %s828, 8
      %s830 = scalar_lea.vmem %s1, %s829
      %p831 = pneg %p93
      %p832 = pneg %p90
      %p833 = pneg %p114
      %p834 = pneg %p111
      %p835 = pneg %p135
      %p836 = pneg %p132
      %p837 = pneg %p156
      %p838 = pneg %p153
      %p839 = pneg %p177
      %p840 = pneg %p174
      %p841 = pneg %p198
      %p842 = pneg %p195
      %p843 = pneg %p219
      %p844 = pneg %p216
      %p845 = pneg %p240
      %p846 = pneg %p237
      %p847 = pneg %p261
      %p848 = pneg %p258
      %p849 = pneg %p282
      %p850 = pneg %p279
      %p851 = pneg %p303
      %p852 = pneg %p300
      %p853 = pneg %p324
      %p854 = pneg %p321
      %p855 = pneg %p345
      %p856 = pneg %p342
      %p857 = pneg %p366
      %p858 = pneg %p363
      %p859 = pneg %p387
      %p860 = pneg %p384
      %p861 = pneg %p408
      %p862 = pneg %p405
      %p863 = pneg %p429
      %p864 = pneg %p426
      %p865 = pneg %p450
      %p866 = pneg %p447
      %p867 = pneg %p471
      %p868 = pneg %p468
      %p869 = pneg %p492
      %p870 = pneg %p489
      %p871 = pneg %p513
      %p872 = pneg %p510
      %p873 = pneg %p534
      %p874 = pneg %p531
      %p875 = pneg %p555
      %p876 = pneg %p552
      %p877 = pneg %p576
      %p878 = pneg %p573
      %p879 = pneg %p597
      %p880 = pneg %p594
      %p881 = pneg %p618
      %p882 = pneg %p615
      %p883 = pneg %p639
      %p884 = pneg %p636
      %p885 = pneg %p660
      %p886 = pneg %p657
      %p887 = pneg %p681
      %p888 = pneg %p678
      %p889 = pneg %p707
      %p890 = pneg %p704
      %p891 = scmp.lt.s32.totalorder %s72, 1
      %s892 = scalar_select %p891, %s72, 1
      %s893 = smul.addr %s892, 8
      %s894 = scalar_lea.vmem %s59, %s893
      %s895 = smul.u32 16, %s72
      %p896 = scmp.lt.s32.totalorder %s895, 31
      %s897 = scalar_select %p896, %s895, 31
      %s898 = smul.addr %s897, 8
      %s899 = scalar_lea.vmem %s1, %s898
      %s900 = smul.u32 16, %s72
      %p901 = scmp.lt.s32.totalorder %s72, 1
      %s902 = scalar_select %p901, %s72, 1
      %s903 = smul.addr %s902, 8
      %s904 = scalar_lea.vmem %s59, %s903
      %v905 = vld [vmem:[%s3] sm:$0xff]
      %v906 = vld [vmem:[%s3 + $0x8] sm:$0xff]
      %v907 = vld [vmem:[%s3 + $0x10] sm:$0xff]
      %v908 = vld [vmem:[%s3 + $0x18] sm:$0xff]
      %v909 = vld [vmem:[%s3 + $0x20] sm:$0xff]
      %v910 = vld [vmem:[%s3 + $0x28] sm:$0xff]
      %v911 = vld [vmem:[%s3 + $0x30] sm:$0xff]
      %v912 = vld [vmem:[%s3 + $0x38] sm:$0xff]
      %v913 = vld [vmem:[%s3 + $0x40] sm:$0xff]
      %v914 = vld [vmem:[%s3 + $0x48] sm:$0xff]
      %v915 = vld [vmem:[%s3 + $0x50] sm:$0xff]
      %v916 = vld [vmem:[%s3 + $0x58] sm:$0xff]
      %v917 = vld [vmem:[%s3 + $0x60] sm:$0xff]
      %v918 = vld [vmem:[%s3 + $0x68] sm:$0xff]
      %v919 = vld [vmem:[%s3 + $0x70] sm:$0xff]
      %v920 = vld [vmem:[%s3 + $0x78] sm:$0xff]
      %v921 = vld [vmem:[%s5] sm:$0xff]
      %v922 = vld [vmem:[%s7] sm:$0xff]
      %v923 = vld [vmem:[%s7 + $0x8] sm:$0xff]
      %v924 = vld [vmem:[%s7 + $0x10] sm:$0xff]
      %v925 = vld [vmem:[%s7 + $0x18] sm:$0xff]
      %v926 = vld [vmem:[%s7 + $0x20] sm:$0xff]
      %v927 = vld [vmem:[%s7 + $0x28] sm:$0xff]
      %v928 = vld [vmem:[%s7 + $0x30] sm:$0xff]
      %v929 = vld [vmem:[%s7 + $0x38] sm:$0xff]
      %v930 = vld [vmem:[%s7 + $0x40] sm:$0xff]
      %v931 = vld [vmem:[%s7 + $0x48] sm:$0xff]
      %v932 = vld [vmem:[%s7 + $0x50] sm:$0xff]
      %v933 = vld [vmem:[%s7 + $0x58] sm:$0xff]
      %v934 = vld [vmem:[%s7 + $0x60] sm:$0xff]
      %v935 = vld [vmem:[%s7 + $0x68] sm:$0xff]
      %v936 = vld [vmem:[%s7 + $0x70] sm:$0xff]
      %v937 = vld [vmem:[%s7 + $0x78] sm:$0xff]
      %v938 = vld [vmem:[%s9] sm:$0xff]
      %v939 = vld [vmem:[%s899] sm:$0xff]
      %v940 = vld [vmem:[%s899 + $0x8] sm:$0xff]
      %v941 = vld [vmem:[%s899 + $0x10] sm:$0xff]
      %v942 = vld [vmem:[%s899 + $0x18] sm:$0xff]
      %v943 = vld [vmem:[%s899 + $0x20] sm:$0xff]
      %v944 = vld [vmem:[%s899 + $0x28] sm:$0xff]
      %v945 = vld [vmem:[%s899 + $0x30] sm:$0xff]
      %v946 = vld [vmem:[%s899 + $0x38] sm:$0xff]
      %v947 = vld [vmem:[%s899 + $0x40] sm:$0xff]
      %v948 = vld [vmem:[%s899 + $0x48] sm:$0xff]
      %v949 = vld [vmem:[%s899 + $0x50] sm:$0xff]
      %v950 = vld [vmem:[%s899 + $0x58] sm:$0xff]
      %v951 = vld [vmem:[%s899 + $0x60] sm:$0xff]
      %v952 = vld [vmem:[%s899 + $0x68] sm:$0xff]
      %v953 = vld [vmem:[%s899 + $0x70] sm:$0xff]
      %v954 = vld [vmem:[%s899 + $0x78] sm:$0xff]
      %v955 = vld [vmem:[%s11] sm:$0xff]
      %v956 = vld [vmem:[%s11 + $0x8] sm:$0xff]
      %v957 = vld [vmem:[%s13] sm:$0x1]
      %v958 = vld [vmem:[%s15] sm:$0xff]
      %v959 = vld [vmem:[%s15 + $0x8] sm:$0xff]
      %v960 = vld [vmem:[%s17] sm:$0x1]
      %v961 = vld [vmem:[%s19] sm:$0xff]
      %v962 = vld [vmem:[%s21] sm:$0x3]
      %v964 = vlaneseq
      %v965 = vshrl.u32 %v964, 7
      %v966 = vsub.s32 0, %v965
      %v967 = vrot.slane %v957, %v966
      %vm969 = vcmask 130048
      %v971 = vsel %vm969, %v939, 0
      %v974 = vsel %vm969, %v940, 0
      %v977 = vsel %vm969, %v941, 0
      %v980 = vsel %vm969, %v942, 0
      %v983 = vsel %vm969, %v943, 0
      %v986 = vsel %vm969, %v944, 0
      %v989 = vsel %vm969, %v945, 0
      %v992 = vsel %vm969, %v946, 0
      %v995 = vsel %vm969, %v947, 0
      %v998 = vsel %vm969, %v948, 0
      %v1001 = vsel %vm969, %v949, 0
      %v1004 = vsel %vm969, %v950, 0
      %v1007 = vsel %vm969, %v951, 0
      %v1010 = vsel %vm969, %v952, 0
      %v1013 = vsel %vm969, %v953, 0
      %v1016 = vsel %vm969, %v954, 0
      %1018 = vmatprep.subr.mxu0 0.0
      %1019 = vmatpush1.msra.mxu0 %v955
      %1020 = vmatprep.subr.mxu0 0.0
      %1021 = vmatpush1.msra.mxu0 %v956
      %1022 = vmatprep.subr.mxu0 0.0
      %1023 = vmatpush1.msra.mxu0 0.0
      %1024 = vmatprep.subr.mxu0 0.0
      %1025 = vmatpush1.msra.mxu0 0.0
      %1026 = vmatprep.subr.mxu0 0.0
      %1027 = vmatpush1.msra.mxu0 0.0
      %1028 = vmatprep.subr.mxu0 0.0
      %1029 = vmatpush1.msra.mxu0 0.0
      %1030 = vmatprep.subr.mxu0 0.0
      %1031 = vmatpush1.msra.mxu0 0.0
      %1032 = vmatprep.subr.mxu0 0.0
      %1033 = vmatpush1.msra.mxu0 0.0
      %1034 = vmatprep.subr.mxu0 0.0
      %1035 = vmatpush1.msra.mxu0 0.0
      %1036 = vmatprep.subr.mxu0 0.0
      %1037 = vmatpush1.msra.mxu0 0.0
      %1038 = vmatprep.subr.mxu0 0.0
      %1039 = vmatpush1.msra.mxu0 0.0
      %1040 = vmatprep.subr.mxu0 0.0
      %1041 = vmatpush1.msra.mxu0 0.0
      %1042 = vmatprep.subr.mxu0 0.0
      %1043 = vmatpush1.msra.mxu0 0.0
      %1044 = vmatprep.subr.mxu0 0.0
      %1045 = vmatpush1.msra.mxu0 0.0
      %1046 = vmatprep.subr.mxu0 0.0
      %1047 = vmatpush1.msra.mxu0 0.0
      %1048 = vmatprep.subr.mxu0 0.0
      %1049 = vmatpush1.msra.mxu0 0.0
      %1050 = vmatprep.subr.mxu0 0.0
      %1051 = vmatpush1.msra.mxu0 0.0
      %1052 = vmatprep.subr.mxu0 0.0
      %1053 = vmatpush1.msra.mxu0 0.0
      %1054 = vmatprep.subr.mxu0 0.0
      %1055 = vmatpush1.msra.mxu0 0.0
      %1056 = vmatprep.subr.mxu0 0.0
      %1057 = vmatpush1.msra.mxu0 0.0
      %1058 = vmatprep.subr.mxu0 0.0
      %1059 = vmatpush1.msra.mxu0 0.0
      %1060 = vmatprep.subr.mxu0 0.0
      %1061 = vmatpush1.msra.mxu0 0.0
      %1062 = vmatprep.subr.mxu0 0.0
      %1063 = vmatpush1.msra.mxu0 0.0
      %1064 = vmatprep.subr.mxu0 0.0
      %1065 = vmatpush1.msra.mxu0 0.0
      %1066 = vmatprep.subr.mxu0 0.0
      %1067 = vmatpush1.msra.mxu0 0.0
      %1068 = vmatprep.subr.mxu0 0.0
      %1069 = vmatpush1.msra.mxu0 0.0
      %1070 = vmatprep.subr.mxu0 0.0
      %1071 = vmatpush1.msra.mxu0 0.0
      %1072 = vmatprep.subr.mxu0 0.0
      %1073 = vmatpush1.msra.mxu0 0.0
      %1074 = vmatprep.subr.mxu0 0.0
      %1075 = vmatpush1.msra.mxu0 0.0
      %1076 = vmatprep.subr.mxu0 0.0
      %1077 = vmatpush1.msra.mxu0 0.0
      %1078 = vmatprep.subr.mxu0 0.0
      %1079 = vmatpush1.msra.mxu0 0.0
      %1080 = vmatprep.subr.mxu0 0.0
      %1081 = vmatpush1.msra.mxu0 0.0
      %1082 = vmatprep.mubr.f32.mxu0 0.0
      %1083 = vmatmul.mubr.f32.gmra.mrb[0].mxu0 %v971
      %v1084 = vpop.f32.mrb[0].mxu0
      %v1085 = vadd.f32 %v967, %v1084
      %v1086 = vpop.f32.mrb[0].mxu0
      %1087 = vmatprep.mubr.f32.mxu0 0.0
      %1088 = vmatmul.mubr.f32.gmra.mrb[0].mxu0 %v974
      %v1089 = vpop.f32.mrb[0].mxu0
      %v1090 = vadd.f32 %v967, %v1089
      %v1091 = vpop.f32.mrb[0].mxu0
      %1092 = vmatprep.mubr.f32.mxu0 0.0
      %1093 = vmatmul.mubr.f32.gmra.mrb[0].mxu0 %v977
      %v1094 = vpop.f32.mrb[0].mxu0
      %v1095 = vadd.f32 %v967, %v1094
      %v1096 = vpop.f32.mrb[0].mxu0
      %1097 = vmatprep.mubr.f32.mxu0 0.0
      %1098 = vmatmul.mubr.f32.gmra.mrb[0].mxu0 %v980
      %v1099 = vpop.f32.mrb[0].mxu0
      %v1100 = vadd.f32 %v967, %v1099
      %v1101 = vpop.f32.mrb[0].mxu0
      %1102 = vmatprep.mubr.f32.mxu0 0.0
      %1103 = vmatmul.mubr.f32.gmra.mrb[0].mxu0 %v983
      %v1104 = vpop.f32.mrb[0].mxu0
      %v1105 = vadd.f32 %v967, %v1104
      %v1106 = vpop.f32.mrb[0].mxu0
      %1107 = vmatprep.mubr.f32.mxu0 0.0
      %1108 = vmatmul.mubr.f32.gmra.mrb[0].mxu0 %v986
      %v1109 = vpop.f32.mrb[0].mxu0
      %v1110 = vadd.f32 %v967, %v1109
      %v1111 = vpop.f32.mrb[0].mxu0
      %1112 = vmatprep.mubr.f32.mxu0 0.0
      %1113 = vmatmul.mubr.f32.gmra.mrb[0].mxu0 %v989
      %v1114 = vpop.f32.mrb[0].mxu0
      %v1115 = vadd.f32 %v967, %v1114
      %v1116 = vpop.f32.mrb[0].mxu0
      %1117 = vmatprep.mubr.f32.mxu0 0.0
      %1118 = vmatmul.mubr.f32.gmra.mrb[0].mxu0 %v992
      %v1119 = vpop.f32.mrb[0].mxu0
      %v1120 = vadd.f32 %v967, %v1119
      %v1121 = vpop.f32.mrb[0].mxu0
      %1122 = vmatprep.mubr.f32.mxu0 0.0
      %1123 = vmatmul.mubr.f32.gmra.mrb[0].mxu0 %v995
      %v1124 = vpop.f32.mrb[0].mxu0
      %v1125 = vadd.f32 %v967, %v1124
      %v1126 = vpop.f32.mrb[0].mxu0
      %1127 = vmatprep.mubr.f32.mxu0 0.0
      %1128 = vmatmul.mubr.f32.gmra.mrb[0].mxu0 %v998
      %v1129 = vpop.f32.mrb[0].mxu0
      %v1130 = vadd.f32 %v967, %v1129
      %v1131 = vpop.f32.mrb[0].mxu0
      %1132 = vmatprep.mubr.f32.mxu0 0.0
      %1133 = vmatmul.mubr.f32.gmra.mrb[0].mxu0 %v1001
      %v1134 = vpop.f32.mrb[0].mxu0
      %v1135 = vadd.f32 %v967, %v1134
      %v1136 = vpop.f32.mrb[0].mxu0
      %1137 = vmatprep.mubr.f32.mxu0 0.0
      %1138 = vmatmul.mubr.f32.gmra.mrb[0].mxu0 %v1004
      %v1139 = vpop.f32.mrb[0].mxu0
      %v1140 = vadd.f32 %v967, %v1139
      %v1141 = vpop.f32.mrb[0].mxu0
      %1142 = vmatprep.mubr.f32.mxu0 0.0
      %1143 = vmatmul.mubr.f32.gmra.mrb[0].mxu0 %v1007
      %v1144 = vpop.f32.mrb[0].mxu0
      %v1145 = vadd.f32 %v967, %v1144
      %v1146 = vpop.f32.mrb[0].mxu0
      %1147 = vmatprep.mubr.f32.mxu0 0.0
      %1148 = vmatmul.mubr.f32.gmra.mrb[0].mxu0 %v1010
      %v1149 = vpop.f32.mrb[0].mxu0
      %v1150 = vadd.f32 %v967, %v1149
      %v1151 = vpop.f32.mrb[0].mxu0
      %1152 = vmatprep.mubr.f32.mxu0 0.0
      %1153 = vmatmul.mubr.f32.gmra.mrb[0].mxu0 %v1013
      %v1154 = vpop.f32.mrb[0].mxu0
      %v1155 = vadd.f32 %v967, %v1154
      %v1156 = vpop.f32.mrb[0].mxu0
      %1157 = vmatprep.mubr.f32.mxu0 0.0
      %1158 = vmatmul.mubr.f32.gmra.mrb[0].mxu0 %v1016
      %v1159 = vpop.f32.mrb[0].mxu0
      %v1160 = vadd.f32 %v967, %v1159
      %v1161 = vpop.f32.mrb[0].mxu0
      %1162 = vdwg.mxu0
      %1163 = vmatprep.subr.mxu0 0.0
      %1164 = vmatpush1.msra.mxu0 %v1085
      %1165 = vmatprep.subr.mxu0 0.0
      %1166 = vmatpush1.msra.mxu0 %v1090
      %1167 = vmatprep.subr.mxu0 0.0
      %1168 = vmatpush1.msra.mxu0 %v1095
      %1169 = vmatprep.subr.mxu0 0.0
      %1170 = vmatpush1.msra.mxu0 %v1100
      %1171 = vmatprep.subr.mxu0 0.0
      %1172 = vmatpush1.msra.mxu0 %v1105
      %1173 = vmatprep.subr.mxu0 0.0
      %1174 = vmatpush1.msra.mxu0 %v1110
      %1175 = vmatprep.subr.mxu0 0.0
      %1176 = vmatpush1.msra.mxu0 %v1115
      %1177 = vmatprep.subr.mxu0 0.0
      %1178 = vmatpush1.msra.mxu0 %v1120
      %1179 = vmatprep.subr.mxu0 0.0
      %1180 = vmatpush1.msra.mxu0 %v1125
      %1181 = vmatprep.subr.mxu0 0.0
      %1182 = vmatpush1.msra.mxu0 %v1130
      %1183 = vmatprep.subr.mxu0 0.0
      %1184 = vmatpush1.msra.mxu0 %v1135
      %1185 = vmatprep.subr.mxu0 0.0
      %1186 = vmatpush1.msra.mxu0 %v1140
      %1187 = vmatprep.subr.mxu0 0.0
      %1188 = vmatpush1.msra.mxu0 %v1145
      %1189 = vmatprep.subr.mxu0 0.0
      %1190 = vmatpush1.msra.mxu0 %v1150
      %1191 = vmatprep.subr.mxu0 0.0
      %1192 = vmatpush1.msra.mxu0 %v1155
      %1193 = vmatprep.subr.mxu0 0.0
      %1194 = vmatpush1.msra.mxu0 %v1160
      %1195 = vmatprep.subr.mxu0 0.0
      %1196 = vmatpush1.msra.mxu0 0.0
      %1197 = vmatprep.subr.mxu0 0.0
      %1198 = vmatpush1.msra.mxu0 0.0
      %1199 = vmatprep.subr.mxu0 0.0
      %1200 = vmatpush1.msra.mxu0 0.0
      %1201 = vmatprep.subr.mxu0 0.0
      %1202 = vmatpush1.msra.mxu0 0.0
      %1203 = vmatprep.subr.mxu0 0.0
      %1204 = vmatpush1.msra.mxu0 0.0
      %1205 = vmatprep.subr.mxu0 0.0
      %1206 = vmatpush1.msra.mxu0 0.0
      %1207 = vmatprep.subr.mxu0 0.0
      %1208 = vmatpush1.msra.mxu0 0.0
      %1209 = vmatprep.subr.mxu0 0.0
      %1210 = vmatpush1.msra.mxu0 0.0
      %1211 = vmatprep.subr.mxu0 0.0
      %1212 = vmatpush1.msra.mxu0 0.0
      %1213 = vmatprep.subr.mxu0 0.0
      %1214 = vmatpush1.msra.mxu0 0.0
      %1215 = vmatprep.subr.mxu0 0.0
      %1216 = vmatpush1.msra.mxu0 0.0
      %1217 = vmatprep.subr.mxu0 0.0
      %1218 = vmatpush1.msra.mxu0 0.0
      %1219 = vmatprep.subr.mxu0 0.0
      %1220 = vmatpush1.msra.mxu0 0.0
      %1221 = vmatprep.subr.mxu0 0.0
      %1222 = vmatpush1.msra.mxu0 0.0
      %1223 = vmatprep.subr.mxu0 0.0
      %1224 = vmatpush1.msra.mxu0 0.0
      %1225 = vmatprep.subr.mxu0 0.0
      %1226 = vmatpush1.msra.mxu0 0.0
      %1227 = vmatprep.mubr.f32.mxu0 0.0
      %1228 = vmatmul.mubr.f32.gmra.mrb[0].mxu0 %v921
      %v1229 = vpop.f32.mrb[0].mxu0
      %v1230 = vadd.f32 0.0, %v1229
      %v1231 = vpop.f32.mrb[0].mxu0
      %1232 = vdwg.mxu0
      %v1233 = vmul.f32 %v1230, 0.125
      %vm1234 = vcmask 64512
      %v1236 = vsel %vm1234, %v1233, 0
      %1238 = vmatprep.subr.mxu0 0.0
      %1239 = vmatpush1.msra.mxu0 %v961
      %1240 = vmatprep.subr.mxu0 0.0
      %1241 = vmatpush1.msra.mxu0 0.0
      %1242 = vmatprep.subr.mxu0 0.0
      %1243 = vmatpush1.msra.mxu0 0.0
      %1244 = vmatprep.subr.mxu0 0.0
      %1245 = vmatpush1.msra.mxu0 0.0
      %1246 = vmatprep.subr.mxu0 0.0
      %1247 = vmatpush1.msra.mxu0 0.0
      %1248 = vmatprep.subr.mxu0 0.0
      %1249 = vmatpush1.msra.mxu0 0.0
      %1250 = vmatprep.subr.mxu0 0.0
      %1251 = vmatpush1.msra.mxu0 0.0
      %1252 = vmatprep.subr.mxu0 0.0
      %1253 = vmatpush1.msra.mxu0 0.0
      %1254 = vmatprep.subr.mxu0 0.0
      %1255 = vmatpush1.msra.mxu0 0.0
      %1256 = vmatprep.subr.mxu0 0.0
      %1257 = vmatpush1.msra.mxu0 0.0
      %1258 = vmatprep.subr.mxu0 0.0
      %1259 = vmatpush1.msra.mxu0 0.0
      %1260 = vmatprep.subr.mxu0 0.0
      %1261 = vmatpush1.msra.mxu0 0.0
      %1262 = vmatprep.subr.mxu0 0.0
      %1263 = vmatpush1.msra.mxu0 0.0
      %1264 = vmatprep.subr.mxu0 0.0
      %1265 = vmatpush1.msra.mxu0 0.0
      %1266 = vmatprep.subr.mxu0 0.0
      %1267 = vmatpush1.msra.mxu0 0.0
      %1268 = vmatprep.subr.mxu0 0.0
      %1269 = vmatpush1.msra.mxu0 0.0
      %1270 = vmatprep.subr.mxu0 0.0
      %1271 = vmatpush1.msra.mxu0 0.0
      %1272 = vmatprep.subr.mxu0 0.0
      %1273 = vmatpush1.msra.mxu0 0.0
      %1274 = vmatprep.subr.mxu0 0.0
      %1275 = vmatpush1.msra.mxu0 0.0
      %1276 = vmatprep.subr.mxu0 0.0
      %1277 = vmatpush1.msra.mxu0 0.0
      %1278 = vmatprep.subr.mxu0 0.0
      %1279 = vmatpush1.msra.mxu0 0.0
      %1280 = vmatprep.subr.mxu0 0.0
      %1281 = vmatpush1.msra.mxu0 0.0
      %1282 = vmatprep.subr.mxu0 0.0
      %1283 = vmatpush1.msra.mxu0 0.0
      %1284 = vmatprep.subr.mxu0 0.0
      %1285 = vmatpush1.msra.mxu0 0.0
      %1286 = vmatprep.subr.mxu0 0.0
      %1287 = vmatpush1.msra.mxu0 0.0
      %1288 = vmatprep.subr.mxu0 0.0
      %1289 = vmatpush1.msra.mxu0 0.0
      %1290 = vmatprep.subr.mxu0 0.0
      %1291 = vmatpush1.msra.mxu0 0.0
      %1292 = vmatprep.subr.mxu0 0.0
      %1293 = vmatpush1.msra.mxu0 0.0
      %1294 = vmatprep.subr.mxu0 0.0
      %1295 = vmatpush1.msra.mxu0 0.0
      %1296 = vmatprep.subr.mxu0 0.0
      %1297 = vmatpush1.msra.mxu0 0.0
      %1298 = vmatprep.subr.mxu0 0.0
      %1299 = vmatpush1.msra.mxu0 0.0
      %1300 = vmatprep.subr.mxu0 0.0
      %1301 = vmatpush1.msra.mxu0 0.0
      %1302 = vmatprep.mubr.f32.mxu0 0.0
      %1303 = vmatmul.mubr.f32.gmra.mrb[0].mxu0 %v1236
      %v1304 = vpop.f32.mrb[0].mxu0
      %v1305 = vadd.f32 0.0, %v1304
      %v1306 = vpop.f32.mrb[0].mxu0
      %1307 = vdwg.mxu0
      %v1308 = vmax.f32 %v1305, 0.0
      %vm1309 = vcmask 15360
      %v1311 = vsel %vm1309, %v1308, 0
      %vm1313 = vcmask 1041408
      %v1315 = vsel %vm1313, %v962, 0
      %1317 = vmatprep.subr.mxu0 0.0
      %1318 = vmatpush1.msra.mxu0 %v1315
      %1319 = vmatprep.subr.mxu0 0.0
      %1320 = vmatpush1.msra.mxu0 0.0
      %1321 = vmatprep.subr.mxu0 0.0
      %1322 = vmatpush1.msra.mxu0 0.0
      %1323 = vmatprep.subr.mxu0 0.0
      %1324 = vmatpush1.msra.mxu0 0.0
      %1325 = vmatprep.subr.mxu0 0.0
      %1326 = vmatpush1.msra.mxu0 0.0
      %1327 = vmatprep.subr.mxu0 0.0
      %1328 = vmatpush1.msra.mxu0 0.0
      %1329 = vmatprep.subr.mxu0 0.0
      %1330 = vmatpush1.msra.mxu0 0.0
      %1331 = vmatprep.subr.mxu0 0.0
      %1332 = vmatpush1.msra.mxu0 0.0
      %1333 = vmatprep.subr.mxu0 0.0
      %1334 = vmatpush1.msra.mxu0 0.0
      %1335 = vmatprep.subr.mxu0 0.0
      %1336 = vmatpush1.msra.mxu0 0.0
      %1337 = vmatprep.subr.mxu0 0.0
      %1338 = vmatpush1.msra.mxu0 0.0
      %1339 = vmatprep.subr.mxu0 0.0
      %1340 = vmatpush1.msra.mxu0 0.0
      %1341 = vmatprep.subr.mxu0 0.0
      %1342 = vmatpush1.msra.mxu0 0.0
      %1343 = vmatprep.subr.mxu0 0.0
      %1344 = vmatpush1.msra.mxu0 0.0
      %1345 = vmatprep.subr.mxu0 0.0
      %1346 = vmatpush1.msra.mxu0 0.0
      %1347 = vmatprep.subr.mxu0 0.0
      %1348 = vmatpush1.msra.mxu0 0.0
      %1349 = vmatprep.subr.mxu0 0.0
      %1350 = vmatpush1.msra.mxu0 0.0
      %1351 = vmatprep.subr.mxu0 0.0
      %1352 = vmatpush1.msra.mxu0 0.0
      %1353 = vmatprep.subr.mxu0 0.0
      %1354 = vmatpush1.msra.mxu0 0.0
      %1355 = vmatprep.subr.mxu0 0.0
      %1356 = vmatpush1.msra.mxu0 0.0
      %1357 = vmatprep.subr.mxu0 0.0
      %1358 = vmatpush1.msra.mxu0 0.0
      %1359 = vmatprep.subr.mxu0 0.0
      %1360 = vmatpush1.msra.mxu0 0.0
      %1361 = vmatprep.subr.mxu0 0.0
      %1362 = vmatpush1.msra.mxu0 0.0
      %1363 = vmatprep.subr.mxu0 0.0
      %1364 = vmatpush1.msra.mxu0 0.0
      %1365 = vmatprep.subr.mxu0 0.0
      %1366 = vmatpush1.msra.mxu0 0.0
      %1367 = vmatprep.subr.mxu0 0.0
      %1368 = vmatpush1.msra.mxu0 0.0
      %1369 = vmatprep.subr.mxu0 0.0
      %1370 = vmatpush1.msra.mxu0 0.0
      %1371 = vmatprep.subr.mxu0 0.0
      %1372 = vmatpush1.msra.mxu0 0.0
      %1373 = vmatprep.subr.mxu0 0.0
      %1374 = vmatpush1.msra.mxu0 0.0
      %1375 = vmatprep.subr.mxu0 0.0
      %1376 = vmatpush1.msra.mxu0 0.0
      %1377 = vmatprep.subr.mxu0 0.0
      %1378 = vmatpush1.msra.mxu0 0.0
      %1379 = vmatprep.subr.mxu0 0.0
      %1380 = vmatpush1.msra.mxu0 0.0
      %1381 = vmatprep.mubr.f32.mxu0 0.0
      %1382 = vmatmul.mubr.f32.gmra.mrb[0].mxu0 %v1311
      %v1383 = vpop.f32.mrb[0].mxu0
      %v1384 = vadd.f32 0.0, %v1383
      %v1385 = vpop.f32.mrb[0].mxu0
      %1386 = vdwg.mxu0
      %v1387 = vxor.u32 %v1384, 2147483648
      %v1388 = vmul.f32 %v1387, 1.442695
      %v1389 = vpow.pop %v1388
      %v1390 = vadd.f32 %v1389, 1.0
      %v1391 = vrcp.pop %v1390
      %v1392 = vmul.f32 1.0, %v1391
      %v1394 = vsel %vm1234, %v905, 0
      %v1397 = vsel %vm1234, %v906, 0
      %v1400 = vsel %vm1234, %v907, 0
      %v1403 = vsel %vm1234, %v908, 0
      %v1406 = vsel %vm1234, %v909, 0
      %v1409 = vsel %vm1234, %v910, 0
      %v1412 = vsel %vm1234, %v911, 0
      %v1415 = vsel %vm1234, %v912, 0
      %v1418 = vsel %vm1234, %v913, 0
      %v1421 = vsel %vm1234, %v914, 0
      %v1424 = vsel %vm1234, %v915, 0
      %v1427 = vsel %vm1234, %v916, 0
      %v1430 = vsel %vm1234, %v917, 0
      %v1433 = vsel %vm1234, %v918, 0
      %v1436 = vsel %vm1234, %v919, 0
      %v1439 = vsel %vm1234, %v920, 0
      %1441 = vmatprep.subr.mxu0 0.0
      %1442 = vmatpush1.msra.mxu0 %v1392
      %1443 = vmatprep.subr.mxu0 0.0
      %1444 = vmatpush1.msra.mxu0 0.0
      %1445 = vmatprep.subr.mxu0 0.0
      %1446 = vmatpush1.msra.mxu0 0.0
      %1447 = vmatprep.subr.mxu0 0.0
      %1448 = vmatpush1.msra.mxu0 0.0
      %1449 = vmatprep.subr.mxu0 0.0
      %1450 = vmatpush1.msra.mxu0 0.0
      %1451 = vmatprep.subr.mxu0 0.0
      %1452 = vmatpush1.msra.mxu0 0.0
      %1453 = vmatprep.subr.mxu0 0.0
      %1454 = vmatpush1.msra.mxu0 0.0
      %1455 = vmatprep.subr.mxu0 0.0
      %1456 = vmatpush1.msra.mxu0 0.0
      %1457 = vmatprep.subr.mxu0 0.0
      %1458 = vmatpush1.msra.mxu0 0.0
      %1459 = vmatprep.subr.mxu0 0.0
      %1460 = vmatpush1.msra.mxu0 0.0
      %1461 = vmatprep.subr.mxu0 0.0
      %1462 = vmatpush1.msra.mxu0 0.0
      %1463 = vmatprep.subr.mxu0 0.0
      %1464 = vmatpush1.msra.mxu0 0.0
      %1465 = vmatprep.subr.mxu0 0.0
      %1466 = vmatpush1.msra.mxu0 0.0
      %1467 = vmatprep.subr.mxu0 0.0
      %1468 = vmatpush1.msra.mxu0 0.0
      %1469 = vmatprep.subr.mxu0 0.0
      %1470 = vmatpush1.msra.mxu0 0.0
      %1471 = vmatprep.subr.mxu0 0.0
      %1472 = vmatpush1.msra.mxu0 0.0
      %1473 = vmatprep.subr.mxu0 0.0
      %1474 = vmatpush1.msra.mxu0 0.0
      %1475 = vmatprep.subr.mxu0 0.0
      %1476 = vmatpush1.msra.mxu0 0.0
      %1477 = vmatprep.subr.mxu0 0.0
      %1478 = vmatpush1.msra.mxu0 0.0
      %1479 = vmatprep.subr.mxu0 0.0
      %1480 = vmatpush1.msra.mxu0 0.0
      %1481 = vmatprep.subr.mxu0 0.0
      %1482 = vmatpush1.msra.mxu0 0.0
      %1483 = vmatprep.subr.mxu0 0.0
      %1484 = vmatpush1.msra.mxu0 0.0
      %1485 = vmatprep.subr.mxu0 0.0
      %1486 = vmatpush1.msra.mxu0 0.0
      %1487 = vmatprep.subr.mxu0 0.0
      %1488 = vmatpush1.msra.mxu0 0.0
      %1489 = vmatprep.subr.mxu0 0.0
      %1490 = vmatpush1.msra.mxu0 0.0
      %1491 = vmatprep.subr.mxu0 0.0
      %1492 = vmatpush1.msra.mxu0 0.0
      %1493 = vmatprep.subr.mxu0 0.0
      %1494 = vmatpush1.msra.mxu0 0.0
      %1495 = vmatprep.subr.mxu0 0.0
      %1496 = vmatpush1.msra.mxu0 0.0
      %1497 = vmatprep.subr.mxu0 0.0
      %1498 = vmatpush1.msra.mxu0 0.0
      %1499 = vmatprep.subr.mxu0 0.0
      %1500 = vmatpush1.msra.mxu0 0.0
      %1501 = vmatprep.subr.mxu0 0.0
      %1502 = vmatpush1.msra.mxu0 0.0
      %1503 = vmatprep.subr.mxu0 0.0
      %1504 = vmatpush1.msra.mxu0 0.0
      %1505 = vmatprep.mubr.f32.mxu0 0.0
      %1506 = vmatmul.mubr.f32.gmra.mrb[0].mxu0 %v1394
      %v1507 = vpop.f32.mrb[0].mxu0
      %v1508 = vadd.f32 0.0, %v1507
      %v1509 = vpop.f32.mrb[0].mxu0
      %1510 = vmatprep.mubr.f32.mxu0 0.0
      %1511 = vmatmul.mubr.f32.gmra.mrb[0].mxu0 %v1397
      %v1512 = vpop.f32.mrb[0].mxu0
      %v1513 = vadd.f32 0.0, %v1512
      %v1514 = vpop.f32.mrb[0].mxu0
      %1515 = vmatprep.mubr.f32.mxu0 0.0
      %1516 = vmatmul.mubr.f32.gmra.mrb[0].mxu0 %v1400
      %v1517 = vpop.f32.mrb[0].mxu0
      %v1518 = vadd.f32 0.0, %v1517
      %v1519 = vpop.f32.mrb[0].mxu0
      %1520 = vmatprep.mubr.f32.mxu0 0.0
      %1521 = vmatmul.mubr.f32.gmra.mrb[0].mxu0 %v1403
      %v1522 = vpop.f32.mrb[0].mxu0
      %v1523 = vadd.f32 0.0, %v1522
      %v1524 = vpop.f32.mrb[0].mxu0
      %1525 = vmatprep.mubr.f32.mxu0 0.0
      %1526 = vmatmul.mubr.f32.gmra.mrb[0].mxu0 %v1406
      %v1527 = vpop.f32.mrb[0].mxu0
      %v1528 = vadd.f32 0.0, %v1527
      %v1529 = vpop.f32.mrb[0].mxu0
      %1530 = vmatprep.mubr.f32.mxu0 0.0
      %1531 = vmatmul.mubr.f32.gmra.mrb[0].mxu0 %v1409
      %v1532 = vpop.f32.mrb[0].mxu0
      %v1533 = vadd.f32 0.0, %v1532
      %v1534 = vpop.f32.mrb[0].mxu0
      %1535 = vmatprep.mubr.f32.mxu0 0.0
      %1536 = vmatmul.mubr.f32.gmra.mrb[0].mxu0 %v1412
      %v1537 = vpop.f32.mrb[0].mxu0
      %v1538 = vadd.f32 0.0, %v1537
      %v1539 = vpop.f32.mrb[0].mxu0
      %1540 = vmatprep.mubr.f32.mxu0 0.0
      %1541 = vmatmul.mubr.f32.gmra.mrb[0].mxu0 %v1415
      %v1542 = vpop.f32.mrb[0].mxu0
      %v1543 = vadd.f32 0.0, %v1542
      %v1544 = vpop.f32.mrb[0].mxu0
      %1545 = vmatprep.mubr.f32.mxu0 0.0
      %1546 = vmatmul.mubr.f32.gmra.mrb[0].mxu0 %v1418
      %v1547 = vpop.f32.mrb[0].mxu0
      %v1548 = vadd.f32 0.0, %v1547
      %v1549 = vpop.f32.mrb[0].mxu0
      %1550 = vmatprep.mubr.f32.mxu0 0.0
      %1551 = vmatmul.mubr.f32.gmra.mrb[0].mxu0 %v1421
      %v1552 = vpop.f32.mrb[0].mxu0
      %v1553 = vadd.f32 0.0, %v1552
      %v1554 = vpop.f32.mrb[0].mxu0
      %1555 = vmatprep.mubr.f32.mxu0 0.0
      %1556 = vmatmul.mubr.f32.gmra.mrb[0].mxu0 %v1424
      %v1557 = vpop.f32.mrb[0].mxu0
      %v1558 = vadd.f32 0.0, %v1557
      %v1559 = vpop.f32.mrb[0].mxu0
      %1560 = vmatprep.mubr.f32.mxu0 0.0
      %1561 = vmatmul.mubr.f32.gmra.mrb[0].mxu0 %v1427
      %v1562 = vpop.f32.mrb[0].mxu0
      %v1563 = vadd.f32 0.0, %v1562
      %v1564 = vpop.f32.mrb[0].mxu0
      %1565 = vmatprep.mubr.f32.mxu0 0.0
      %1566 = vmatmul.mubr.f32.gmra.mrb[0].mxu0 %v1430
      %v1567 = vpop.f32.mrb[0].mxu0
      %v1568 = vadd.f32 0.0, %v1567
      %v1569 = vpop.f32.mrb[0].mxu0
      %1570 = vmatprep.mubr.f32.mxu0 0.0
      %1571 = vmatmul.mubr.f32.gmra.mrb[0].mxu0 %v1433
      %v1572 = vpop.f32.mrb[0].mxu0
      %v1573 = vadd.f32 0.0, %v1572
      %v1574 = vpop.f32.mrb[0].mxu0
      %1575 = vmatprep.mubr.f32.mxu0 0.0
      %1576 = vmatmul.mubr.f32.gmra.mrb[0].mxu0 %v1436
      %v1577 = vpop.f32.mrb[0].mxu0
      %v1578 = vadd.f32 0.0, %v1577
      %v1579 = vpop.f32.mrb[0].mxu0
      %1580 = vmatprep.mubr.f32.mxu0 0.0
      %1581 = vmatmul.mubr.f32.gmra.mrb[0].mxu0 %v1439
      %v1582 = vpop.f32.mrb[0].mxu0
      %v1583 = vadd.f32 0.0, %v1582
      %v1584 = vpop.f32.mrb[0].mxu0
      %1585 = vdwg.mxu0
      %v1586 = vmul.f32 %v1085, %v1508
      %v1587 = vmul.f32 %v1090, %v1513
      %v1588 = vmul.f32 %v1095, %v1518
      %v1589 = vmul.f32 %v1100, %v1523
      %v1590 = vmul.f32 %v1105, %v1528
      %v1591 = vmul.f32 %v1110, %v1533
      %v1592 = vmul.f32 %v1115, %v1538
      %v1593 = vmul.f32 %v1120, %v1543
      %v1594 = vmul.f32 %v1125, %v1548
      %v1595 = vmul.f32 %v1130, %v1553
      %v1596 = vmul.f32 %v1135, %v1558
      %v1597 = vmul.f32 %v1140, %v1563
      %v1598 = vmul.f32 %v1145, %v1568
      %v1599 = vmul.f32 %v1150, %v1573
      %v1600 = vmul.f32 %v1155, %v1578
      %v1601 = vmul.f32 %v1160, %v1583
      %v1603 = vsel %vm1234, %v1586, 0
      %v1606 = vsel %vm1234, %v1587, 0
      %v1609 = vsel %vm1234, %v1588, 0
      %v1612 = vsel %vm1234, %v1589, 0
      %v1615 = vsel %vm1234, %v1590, 0
      %v1618 = vsel %vm1234, %v1591, 0
      %v1621 = vsel %vm1234, %v1592, 0
      %v1624 = vsel %vm1234, %v1593, 0
      %v1627 = vsel %vm1234, %v1594, 0
      %v1630 = vsel %vm1234, %v1595, 0
      %v1633 = vsel %vm1234, %v1596, 0
      %v1636 = vsel %vm1234, %v1597, 0
      %v1639 = vsel %vm1234, %v1598, 0
      %v1642 = vsel %vm1234, %v1599, 0
      %v1645 = vsel %vm1234, %v1600, 0
      %v1648 = vsel %vm1234, %v1601, 0
      %1650 = vmatprep.subr.mxu0 0.0
      %1651 = vmatpush1.msra.mxu0 %v938
      %1652 = vmatprep.subr.mxu0 0.0
      %1653 = vmatpush1.msra.mxu0 0.0
      %1654 = vmatprep.subr.mxu0 0.0
      %1655 = vmatpush1.msra.mxu0 0.0
      %1656 = vmatprep.subr.mxu0 0.0
      %1657 = vmatpush1.msra.mxu0 0.0
      %1658 = vmatprep.subr.mxu0 0.0
      %1659 = vmatpush1.msra.mxu0 0.0
      %1660 = vmatprep.subr.mxu0 0.0
      %1661 = vmatpush1.msra.mxu0 0.0
      %1662 = vmatprep.subr.mxu0 0.0
      %1663 = vmatpush1.msra.mxu0 0.0
      %1664 = vmatprep.subr.mxu0 0.0
      %1665 = vmatpush1.msra.mxu0 0.0
      %1666 = vmatprep.subr.mxu0 0.0
      %1667 = vmatpush1.msra.mxu0 0.0
      %1668 = vmatprep.subr.mxu0 0.0
      %1669 = vmatpush1.msra.mxu0 0.0
      %1670 = vmatprep.subr.mxu0 0.0
      %1671 = vmatpush1.msra.mxu0 0.0
      %1672 = vmatprep.subr.mxu0 0.0
      %1673 = vmatpush1.msra.mxu0 0.0
      %1674 = vmatprep.subr.mxu0 0.0
      %1675 = vmatpush1.msra.mxu0 0.0
      %1676 = vmatprep.subr.mxu0 0.0
      %1677 = vmatpush1.msra.mxu0 0.0
      %1678 = vmatprep.subr.mxu0 0.0
      %1679 = vmatpush1.msra.mxu0 0.0
      %1680 = vmatprep.subr.mxu0 0.0
      %1681 = vmatpush1.msra.mxu0 0.0
      %1682 = vmatprep.subr.mxu0 0.0
      %1683 = vmatpush1.msra.mxu0 0.0
      %1684 = vmatprep.subr.mxu0 0.0
      %1685 = vmatpush1.msra.mxu0 0.0
      %1686 = vmatprep.subr.mxu0 0.0
      %1687 = vmatpush1.msra.mxu0 0.0
      %1688 = vmatprep.subr.mxu0 0.0
      %1689 = vmatpush1.msra.mxu0 0.0
      %1690 = vmatprep.subr.mxu0 0.0
      %1691 = vmatpush1.msra.mxu0 0.0
      %1692 = vmatprep.subr.mxu0 0.0
      %1693 = vmatpush1.msra.mxu0 0.0
      %1694 = vmatprep.subr.mxu0 0.0
      %1695 = vmatpush1.msra.mxu0 0.0
      %1696 = vmatprep.subr.mxu0 0.0
      %1697 = vmatpush1.msra.mxu0 0.0
      %1698 = vmatprep.subr.mxu0 0.0
      %1699 = vmatpush1.msra.mxu0 0.0
      %1700 = vmatprep.subr.mxu0 0.0
      %1701 = vmatpush1.msra.mxu0 0.0
      %1702 = vmatprep.subr.mxu0 0.0
      %1703 = vmatpush1.msra.mxu0 0.0
      %1704 = vmatprep.subr.mxu0 0.0
      %1705 = vmatpush1.msra.mxu0 0.0
      %1706 = vmatprep.subr.mxu0 0.0
      %1707 = vmatpush1.msra.mxu0 0.0
      %1708 = vmatprep.subr.mxu0 0.0
      %1709 = vmatpush1.msra.mxu0 0.0
      %1710 = vmatprep.subr.mxu0 0.0
      %1711 = vmatpush1.msra.mxu0 0.0
      %1712 = vmatprep.subr.mxu0 0.0
      %1713 = vmatpush1.msra.mxu0 0.0
      %1714 = vmatprep.mubr.f32.mxu0 0.0
      %1715 = vmatmul.mubr.f32.gmra.mrb[0].mxu0 %v1603
      %v1716 = vpop.f32.mrb[0].mxu0
      %v1717 = vadd.f32 0.0, %v1716
      %v1718 = vpop.f32.mrb[0].mxu0
      %1719 = vmatprep.mubr.f32.mxu0 0.0
      %1720 = vmatmul.mubr.f32.gmra.mrb[0].mxu0 %v1606
      %v1721 = vpop.f32.mrb[0].mxu0
      %v1722 = vadd.f32 0.0, %v1721
      %v1723 = vpop.f32.mrb[0].mxu0
      %1724 = vmatprep.mubr.f32.mxu0 0.0
      %1725 = vmatmul.mubr.f32.gmra.mrb[0].mxu0 %v1609
      %v1726 = vpop.f32.mrb[0].mxu0
      %v1727 = vadd.f32 0.0, %v1726
      %v1728 = vpop.f32.mrb[0].mxu0
      %1729 = vmatprep.mubr.f32.mxu0 0.0
      %1730 = vmatmul.mubr.f32.gmra.mrb[0].mxu0 %v1612
      %v1731 = vpop.f32.mrb[0].mxu0
      %v1732 = vadd.f32 0.0, %v1731
      %v1733 = vpop.f32.mrb[0].mxu0
      %1734 = vmatprep.mubr.f32.mxu0 0.0
      %1735 = vmatmul.mubr.f32.gmra.mrb[0].mxu0 %v1615
      %v1736 = vpop.f32.mrb[0].mxu0
      %v1737 = vadd.f32 0.0, %v1736
      %v1738 = vpop.f32.mrb[0].mxu0
      %1739 = vmatprep.mubr.f32.mxu0 0.0
      %1740 = vmatmul.mubr.f32.gmra.mrb[0].mxu0 %v1618
      %v1741 = vpop.f32.mrb[0].mxu0
      %v1742 = vadd.f32 0.0, %v1741
      %v1743 = vpop.f32.mrb[0].mxu0
      %1744 = vmatprep.mubr.f32.mxu0 0.0
      %1745 = vmatmul.mubr.f32.gmra.mrb[0].mxu0 %v1621
      %v1746 = vpop.f32.mrb[0].mxu0
      %v1747 = vadd.f32 0.0, %v1746
      %v1748 = vpop.f32.mrb[0].mxu0
      %1749 = vmatprep.mubr.f32.mxu0 0.0
      %1750 = vmatmul.mubr.f32.gmra.mrb[0].mxu0 %v1624
      %v1751 = vpop.f32.mrb[0].mxu0
      %v1752 = vadd.f32 0.0, %v1751
      %v1753 = vpop.f32.mrb[0].mxu0
      %1754 = vmatprep.mubr.f32.mxu0 0.0
      %1755 = vmatmul.mubr.f32.gmra.mrb[0].mxu0 %v1627
      %v1756 = vpop.f32.mrb[0].mxu0
      %v1757 = vadd.f32 0.0, %v1756
      %v1758 = vpop.f32.mrb[0].mxu0
      %1759 = vmatprep.mubr.f32.mxu0 0.0
      %1760 = vmatmul.mubr.f32.gmra.mrb[0].mxu0 %v1630
      %v1761 = vpop.f32.mrb[0].mxu0
      %v1762 = vadd.f32 0.0, %v1761
      %v1763 = vpop.f32.mrb[0].mxu0
      %1764 = vmatprep.mubr.f32.mxu0 0.0
      %1765 = vmatmul.mubr.f32.gmra.mrb[0].mxu0 %v1633
      %v1766 = vpop.f32.mrb[0].mxu0
      %v1767 = vadd.f32 0.0, %v1766
      %v1768 = vpop.f32.mrb[0].mxu0
      %1769 = vmatprep.mubr.f32.mxu0 0.0
      %1770 = vmatmul.mubr.f32.gmra.mrb[0].mxu0 %v1636
      %v1771 = vpop.f32.mrb[0].mxu0
      %v1772 = vadd.f32 0.0, %v1771
      %v1773 = vpop.f32.mrb[0].mxu0
      %1774 = vmatprep.mubr.f32.mxu0 0.0
      %1775 = vmatmul.mubr.f32.gmra.mrb[0].mxu0 %v1639
      %v1776 = vpop.f32.mrb[0].mxu0
      %v1777 = vadd.f32 0.0, %v1776
      %v1778 = vpop.f32.mrb[0].mxu0
      %1779 = vmatprep.mubr.f32.mxu0 0.0
      %1780 = vmatmul.mubr.f32.gmra.mrb[0].mxu0 %v1642
      %v1781 = vpop.f32.mrb[0].mxu0
      %v1782 = vadd.f32 0.0, %v1781
      %v1783 = vpop.f32.mrb[0].mxu0
      %1784 = vmatprep.mubr.f32.mxu0 0.0
      %1785 = vmatmul.mubr.f32.gmra.mrb[0].mxu0 %v1645
      %v1786 = vpop.f32.mrb[0].mxu0
      %v1787 = vadd.f32 0.0, %v1786
      %v1788 = vpop.f32.mrb[0].mxu0
      %1789 = vmatprep.mubr.f32.mxu0 0.0
      %1790 = vmatmul.mubr.f32.gmra.mrb[0].mxu0 %v1648
      %v1791 = vpop.f32.mrb[0].mxu0
      %v1792 = vadd.f32 0.0, %v1791
      %v1793 = vpop.f32.mrb[0].mxu0
      %1794 = vdwg.mxu0
      %v1795 = vmul.f32 %v1717, %v922
      %v1796 = vmul.f32 %v1722, %v923
      %v1797 = vmul.f32 %v1727, %v924
      %v1798 = vmul.f32 %v1732, %v925
      %v1799 = vmul.f32 %v1737, %v926
      %v1800 = vmul.f32 %v1742, %v927
      %v1801 = vmul.f32 %v1747, %v928
      %v1802 = vmul.f32 %v1752, %v929
      %v1803 = vmul.f32 %v1757, %v930
      %v1804 = vmul.f32 %v1762, %v931
      %v1805 = vmul.f32 %v1767, %v932
      %v1806 = vmul.f32 %v1772, %v933
      %v1807 = vmul.f32 %v1777, %v934
      %v1808 = vmul.f32 %v1782, %v935
      %v1809 = vmul.f32 %v1787, %v936
      %v1810 = vmul.f32 %v1792, %v937
      %1811 = vmatprep.subr.mxu0 0.0
      %1812 = vmatpush1.msra.mxu0 %v1795
      %1813 = vmatprep.subr.mxu0 0.0
      %1814 = vmatpush1.msra.mxu0 %v1796
      %1815 = vmatprep.subr.mxu0 0.0
      %1816 = vmatpush1.msra.mxu0 %v1797
      %1817 = vmatprep.subr.mxu0 0.0
      %1818 = vmatpush1.msra.mxu0 %v1798
      %1819 = vmatprep.subr.mxu0 0.0
      %1820 = vmatpush1.msra.mxu0 %v1799
      %1821 = vmatprep.subr.mxu0 0.0
      %1822 = vmatpush1.msra.mxu0 %v1800
      %1823 = vmatprep.subr.mxu0 0.0
      %1824 = vmatpush1.msra.mxu0 %v1801
      %1825 = vmatprep.subr.mxu0 0.0
      %1826 = vmatpush1.msra.mxu0 %v1802
      %1827 = vmatprep.subr.mxu0 0.0
      %1828 = vmatpush1.msra.mxu0 %v1803
      %1829 = vmatprep.subr.mxu0 0.0
      %1830 = vmatpush1.msra.mxu0 %v1804
      %1831 = vmatprep.subr.mxu0 0.0
      %1832 = vmatpush1.msra.mxu0 %v1805
      %1833 = vmatprep.subr.mxu0 0.0
      %1834 = vmatpush1.msra.mxu0 %v1806
      %1835 = vmatprep.subr.mxu0 0.0
      %1836 = vmatpush1.msra.mxu0 %v1807
      %1837 = vmatprep.subr.mxu0 0.0
      %1838 = vmatpush1.msra.mxu0 %v1808
      %1839 = vmatprep.subr.mxu0 0.0
      %1840 = vmatpush1.msra.mxu0 %v1809
      %1841 = vmatprep.subr.mxu0 0.0
      %1842 = vmatpush1.msra.mxu0 %v1810
      %1843 = vmatprep.subr.mxu0 0.0
      %1844 = vmatpush1.msra.mxu0 0.0
      %1845 = vmatprep.subr.mxu0 0.0
      %1846 = vmatpush1.msra.mxu0 0.0
      %1847 = vmatprep.subr.mxu0 0.0
      %1848 = vmatpush1.msra.mxu0 0.0
      %1849 = vmatprep.subr.mxu0 0.0
      %1850 = vmatpush1.msra.mxu0 0.0
      %1851 = vmatprep.subr.mxu0 0.0
      %1852 = vmatpush1.msra.mxu0 0.0
      %1853 = vmatprep.subr.mxu0 0.0
      %1854 = vmatpush1.msra.mxu0 0.0
      %1855 = vmatprep.subr.mxu0 0.0
      %1856 = vmatpush1.msra.mxu0 0.0
      %1857 = vmatprep.subr.mxu0 0.0
      %1858 = vmatpush1.msra.mxu0 0.0
      %1859 = vmatprep.subr.mxu0 0.0
      %1860 = vmatpush1.msra.mxu0 0.0
      %1861 = vmatprep.subr.mxu0 0.0
      %1862 = vmatpush1.msra.mxu0 0.0
      %1863 = vmatprep.subr.mxu0 0.0
      %1864 = vmatpush1.msra.mxu0 0.0
      %1865 = vmatprep.subr.mxu0 0.0
      %1866 = vmatpush1.msra.mxu0 0.0
      %1867 = vmatprep.subr.mxu0 0.0
      %1868 = vmatpush1.msra.mxu0 0.0
      %1869 = vmatprep.subr.mxu0 0.0
      %1870 = vmatpush1.msra.mxu0 0.0
      %1871 = vmatprep.subr.mxu0 0.0
      %1872 = vmatpush1.msra.mxu0 0.0
      %1873 = vmatprep.subr.mxu0 0.0
      %1874 = vmatpush1.msra.mxu0 0.0
      %1875 = vmatprep.mubr.f32.mxu0 0.0
      %1876 = vmatmul.mubr.f32.gmra.mrb[0].mxu0 %v921
      %v1877 = vpop.f32.mrb[0].mxu0
      %v1878 = vadd.f32 0.0, %v1877
      %v1879 = vpop.f32.mrb[0].mxu0
      %1880 = vdwg.mxu0
      %1881 = vmatprep.subr.mxu0 0.0
      %1882 = vmatpush1.msra.mxu0 %v1878
      %1883 = vmatprep.subr.mxu0 0.0
      %1884 = vmatpush1.msra.mxu0 0.0
      %1885 = vmatprep.subr.mxu0 0.0
      %1886 = vmatpush1.msra.mxu0 0.0
      %1887 = vmatprep.subr.mxu0 0.0
      %1888 = vmatpush1.msra.mxu0 0.0
      %1889 = vmatprep.subr.mxu0 0.0
      %1890 = vmatpush1.msra.mxu0 0.0
      %1891 = vmatprep.subr.mxu0 0.0
      %1892 = vmatpush1.msra.mxu0 0.0
      %1893 = vmatprep.subr.mxu0 0.0
      %1894 = vmatpush1.msra.mxu0 0.0
      %1895 = vmatprep.subr.mxu0 0.0
      %1896 = vmatpush1.msra.mxu0 0.0
      %1897 = vmatprep.subr.mxu0 0.0
      %1898 = vmatpush1.msra.mxu0 0.0
      %1899 = vmatprep.subr.mxu0 0.0
      %1900 = vmatpush1.msra.mxu0 0.0
      %1901 = vmatprep.subr.mxu0 0.0
      %1902 = vmatpush1.msra.mxu0 0.0
      %1903 = vmatprep.subr.mxu0 0.0
      %1904 = vmatpush1.msra.mxu0 0.0
      %1905 = vmatprep.subr.mxu0 0.0
      %1906 = vmatpush1.msra.mxu0 0.0
      %1907 = vmatprep.subr.mxu0 0.0
      %1908 = vmatpush1.msra.mxu0 0.0
      %1909 = vmatprep.subr.mxu0 0.0
      %1910 = vmatpush1.msra.mxu0 0.0
      %1911 = vmatprep.subr.mxu0 0.0
      %1912 = vmatpush1.msra.mxu0 0.0
      %1913 = vmatprep.subr.mxu0 0.0
      %1914 = vmatpush1.msra.mxu0 0.0
      %1915 = vmatprep.subr.mxu0 0.0
      %1916 = vmatpush1.msra.mxu0 0.0
      %1917 = vmatprep.subr.mxu0 0.0
      %1918 = vmatpush1.msra.mxu0 0.0
      %1919 = vmatprep.subr.mxu0 0.0
      %1920 = vmatpush1.msra.mxu0 0.0
      %1921 = vmatprep.subr.mxu0 0.0
      %1922 = vmatpush1.msra.mxu0 0.0
      %1923 = vmatprep.subr.mxu0 0.0
      %1924 = vmatpush1.msra.mxu0 0.0
      %1925 = vmatprep.subr.mxu0 0.0
      %1926 = vmatpush1.msra.mxu0 0.0
      %1927 = vmatprep.subr.mxu0 0.0
      %1928 = vmatpush1.msra.mxu0 0.0
      %1929 = vmatprep.subr.mxu0 0.0
      %1930 = vmatpush1.msra.mxu0 0.0
      %1931 = vmatprep.subr.mxu0 0.0
      %1932 = vmatpush1.msra.mxu0 0.0
      %1933 = vmatprep.subr.mxu0 0.0
      %1934 = vmatpush1.msra.mxu0 0.0
      %1935 = vmatprep.subr.mxu0 0.0
      %1936 = vmatpush1.msra.mxu0 0.0
      %1937 = vmatprep.subr.mxu0 0.0
      %1938 = vmatpush1.msra.mxu0 0.0
      %1939 = vmatprep.subr.mxu0 0.0
      %1940 = vmatpush1.msra.mxu0 0.0
      %1941 = vmatprep.subr.mxu0 0.0
      %1942 = vmatpush1.msra.mxu0 0.0
      %1943 = vmatprep.subr.mxu0 0.0
      %1944 = vmatpush1.msra.mxu0 0.0
      %1945 = vmatprep.mubr.f32.mxu0 0.0
      %1946 = vmatmul.mubr.f32.gmra.mrb[0].mxu0 %v1394
      %v1947 = vpop.f32.mrb[0].mxu0
      %v1948 = vadd.f32 0.0, %v1947
      %v1949 = vpop.f32.mrb[0].mxu0
      %1950 = vmatprep.mubr.f32.mxu0 0.0
      %1951 = vmatmul.mubr.f32.gmra.mrb[0].mxu0 %v1397
      %v1952 = vpop.f32.mrb[0].mxu0
      %v1953 = vadd.f32 0.0, %v1952
      %v1954 = vpop.f32.mrb[0].mxu0
      %1955 = vmatprep.mubr.f32.mxu0 0.0
      %1956 = vmatmul.mubr.f32.gmra.mrb[0].mxu0 %v1400
      %v1957 = vpop.f32.mrb[0].mxu0
      %v1958 = vadd.f32 0.0, %v1957
      %v1959 = vpop.f32.mrb[0].mxu0
      %1960 = vmatprep.mubr.f32.mxu0 0.0
      %1961 = vmatmul.mubr.f32.gmra.mrb[0].mxu0 %v1403
      %v1962 = vpop.f32.mrb[0].mxu0
      %v1963 = vadd.f32 0.0, %v1962
      %v1964 = vpop.f32.mrb[0].mxu0
      %1965 = vmatprep.mubr.f32.mxu0 0.0
      %1966 = vmatmul.mubr.f32.gmra.mrb[0].mxu0 %v1406
      %v1967 = vpop.f32.mrb[0].mxu0
      %v1968 = vadd.f32 0.0, %v1967
      %v1969 = vpop.f32.mrb[0].mxu0
      %1970 = vmatprep.mubr.f32.mxu0 0.0
      %1971 = vmatmul.mubr.f32.gmra.mrb[0].mxu0 %v1409
      %v1972 = vpop.f32.mrb[0].mxu0
      %v1973 = vadd.f32 0.0, %v1972
      %v1974 = vpop.f32.mrb[0].mxu0
      %1975 = vmatprep.mubr.f32.mxu0 0.0
      %1976 = vmatmul.mubr.f32.gmra.mrb[0].mxu0 %v1412
      %v1977 = vpop.f32.mrb[0].mxu0
      %v1978 = vadd.f32 0.0, %v1977
      %v1979 = vpop.f32.mrb[0].mxu0
      %1980 = vmatprep.mubr.f32.mxu0 0.0
      %1981 = vmatmul.mubr.f32.gmra.mrb[0].mxu0 %v1415
      %v1982 = vpop.f32.mrb[0].mxu0
      %v1983 = vadd.f32 0.0, %v1982
      %v1984 = vpop.f32.mrb[0].mxu0
      %1985 = vmatprep.mubr.f32.mxu0 0.0
      %1986 = vmatmul.mubr.f32.gmra.mrb[0].mxu0 %v1418
      %v1987 = vpop.f32.mrb[0].mxu0
      %v1988 = vadd.f32 0.0, %v1987
      %v1989 = vpop.f32.mrb[0].mxu0
      %1990 = vmatprep.mubr.f32.mxu0 0.0
      %1991 = vmatmul.mubr.f32.gmra.mrb[0].mxu0 %v1421
      %v1992 = vpop.f32.mrb[0].mxu0
      %v1993 = vadd.f32 0.0, %v1992
      %v1994 = vpop.f32.mrb[0].mxu0
      %1995 = vmatprep.mubr.f32.mxu0 0.0
      %1996 = vmatmul.mubr.f32.gmra.mrb[0].mxu0 %v1424
      %v1997 = vpop.f32.mrb[0].mxu0
      %v1998 = vadd.f32 0.0, %v1997
      %v1999 = vpop.f32.mrb[0].mxu0
      %2000 = vmatprep.mubr.f32.mxu0 0.0
      %2001 = vmatmul.mubr.f32.gmra.mrb[0].mxu0 %v1427
      %v2002 = vpop.f32.mrb[0].mxu0
      %v2003 = vadd.f32 0.0, %v2002
      %v2004 = vpop.f32.mrb[0].mxu0
      %2005 = vmatprep.mubr.f32.mxu0 0.0
      %2006 = vmatmul.mubr.f32.gmra.mrb[0].mxu0 %v1430
      %v2007 = vpop.f32.mrb[0].mxu0
      %v2008 = vadd.f32 0.0, %v2007
      %v2009 = vpop.f32.mrb[0].mxu0
      %2010 = vmatprep.mubr.f32.mxu0 0.0
      %2011 = vmatmul.mubr.f32.gmra.mrb[0].mxu0 %v1433
      %v2012 = vpop.f32.mrb[0].mxu0
      %v2013 = vadd.f32 0.0, %v2012
      %v2014 = vpop.f32.mrb[0].mxu0
      %2015 = vmatprep.mubr.f32.mxu0 0.0
      %2016 = vmatmul.mubr.f32.gmra.mrb[0].mxu0 %v1436
      %v2017 = vpop.f32.mrb[0].mxu0
      %v2018 = vadd.f32 0.0, %v2017
      %v2019 = vpop.f32.mrb[0].mxu0
      %2020 = vmatprep.mubr.f32.mxu0 0.0
      %2021 = vmatmul.mubr.f32.gmra.mrb[0].mxu0 %v1439
      %v2022 = vpop.f32.mrb[0].mxu0
      %v2023 = vadd.f32 0.0, %v2022
      %v2024 = vpop.f32.mrb[0].mxu0
      %2025 = vdwg.mxu0
      %v2027 = vlaneseq
      %v2028 = vshrl.u32 %v2027, 7
      %v2029 = vsub.s32 0, %v2028
      %v2030 = vrot.slane %v960, %v2029
      %2032 = vmatprep.subr.mxu0 0.0
      %2033 = vmatpush1.msra.mxu0 %v958
      %2034 = vmatprep.subr.mxu0 0.0
      %2035 = vmatpush1.msra.mxu0 %v959
      %2036 = vmatprep.subr.mxu0 0.0
      %2037 = vmatpush1.msra.mxu0 0.0
      %2038 = vmatprep.subr.mxu0 0.0
      %2039 = vmatpush1.msra.mxu0 0.0
      %2040 = vmatprep.subr.mxu0 0.0
      %2041 = vmatpush1.msra.mxu0 0.0
      %2042 = vmatprep.subr.mxu0 0.0
      %2043 = vmatpush1.msra.mxu0 0.0
      %2044 = vmatprep.subr.mxu0 0.0
      %2045 = vmatpush1.msra.mxu0 0.0
      %2046 = vmatprep.subr.mxu0 0.0
      %2047 = vmatpush1.msra.mxu0 0.0
      %2048 = vmatprep.subr.mxu0 0.0
      %2049 = vmatpush1.msra.mxu0 0.0
      %2050 = vmatprep.subr.mxu0 0.0
      %2051 = vmatpush1.msra.mxu0 0.0
      %2052 = vmatprep.subr.mxu0 0.0
      %2053 = vmatpush1.msra.mxu0 0.0
      %2054 = vmatprep.subr.mxu0 0.0
      %2055 = vmatpush1.msra.mxu0 0.0
      %2056 = vmatprep.subr.mxu0 0.0
      %2057 = vmatpush1.msra.mxu0 0.0
      %2058 = vmatprep.subr.mxu0 0.0
      %2059 = vmatpush1.msra.mxu0 0.0
      %2060 = vmatprep.subr.mxu0 0.0
      %2061 = vmatpush1.msra.mxu0 0.0
      %2062 = vmatprep.subr.mxu0 0.0
      %2063 = vmatpush1.msra.mxu0 0.0
      %2064 = vmatprep.subr.mxu0 0.0
      %2065 = vmatpush1.msra.mxu0 0.0
      %2066 = vmatprep.subr.mxu0 0.0
      %2067 = vmatpush1.msra.mxu0 0.0
      %2068 = vmatprep.subr.mxu0 0.0
      %2069 = vmatpush1.msra.mxu0 0.0
      %2070 = vmatprep.subr.mxu0 0.0
      %2071 = vmatpush1.msra.mxu0 0.0
      %2072 = vmatprep.subr.mxu0 0.0
      %2073 = vmatpush1.msra.mxu0 0.0
      %2074 = vmatprep.subr.mxu0 0.0
      %2075 = vmatpush1.msra.mxu0 0.0
      %2076 = vmatprep.subr.mxu0 0.0
      %2077 = vmatpush1.msra.mxu0 0.0
      %2078 = vmatprep.subr.mxu0 0.0
      %2079 = vmatpush1.msra.mxu0 0.0
      %2080 = vmatprep.subr.mxu0 0.0
      %2081 = vmatpush1.msra.mxu0 0.0
      %2082 = vmatprep.subr.mxu0 0.0
      %2083 = vmatpush1.msra.mxu0 0.0
      %2084 = vmatprep.subr.mxu0 0.0
      %2085 = vmatpush1.msra.mxu0 0.0
      %2086 = vmatprep.subr.mxu0 0.0
      %2087 = vmatpush1.msra.mxu0 0.0
      %2088 = vmatprep.subr.mxu0 0.0
      %2089 = vmatpush1.msra.mxu0 0.0
      %2090 = vmatprep.subr.mxu0 0.0
      %2091 = vmatpush1.msra.mxu0 0.0
      %2092 = vmatprep.subr.mxu0 0.0
      %2093 = vmatpush1.msra.mxu0 0.0
      %2094 = vmatprep.subr.mxu0 0.0
      %2095 = vmatpush1.msra.mxu0 0.0
      %2096 = vmatprep.mubr.f32.mxu0 0.0
      %2097 = vmatmul.mubr.f32.gmra.mrb[0].mxu0 %v971
      %v2098 = vpop.f32.mrb[0].mxu0
      %v2099 = vadd.f32 %v2030, %v2098
      %v2100 = vpop.f32.mrb[0].mxu0
      %2101 = vmatprep.mubr.f32.mxu0 0.0
      %2102 = vmatmul.mubr.f32.gmra.mrb[0].mxu0 %v974
      %v2103 = vpop.f32.mrb[0].mxu0
      %v2104 = vadd.f32 %v2030, %v2103
      %v2105 = vpop.f32.mrb[0].mxu0
      %2106 = vmatprep.mubr.f32.mxu0 0.0
      %2107 = vmatmul.mubr.f32.gmra.mrb[0].mxu0 %v977
      %v2108 = vpop.f32.mrb[0].mxu0
      %v2109 = vadd.f32 %v2030, %v2108
      %v2110 = vpop.f32.mrb[0].mxu0
      %2111 = vmatprep.mubr.f32.mxu0 0.0
      %2112 = vmatmul.mubr.f32.gmra.mrb[0].mxu0 %v980
      %v2113 = vpop.f32.mrb[0].mxu0
      %v2114 = vadd.f32 %v2030, %v2113
      %v2115 = vpop.f32.mrb[0].mxu0
      %2116 = vmatprep.mubr.f32.mxu0 0.0
      %2117 = vmatmul.mubr.f32.gmra.mrb[0].mxu0 %v983
      %v2118 = vpop.f32.mrb[0].mxu0
      %v2119 = vadd.f32 %v2030, %v2118
      %v2120 = vpop.f32.mrb[0].mxu0
      %2121 = vmatprep.mubr.f32.mxu0 0.0
      %2122 = vmatmul.mubr.f32.gmra.mrb[0].mxu0 %v986
      %v2123 = vpop.f32.mrb[0].mxu0
      %v2124 = vadd.f32 %v2030, %v2123
      %v2125 = vpop.f32.mrb[0].mxu0
      %2126 = vmatprep.mubr.f32.mxu0 0.0
      %2127 = vmatmul.mubr.f32.gmra.mrb[0].mxu0 %v989
      %v2128 = vpop.f32.mrb[0].mxu0
      %v2129 = vadd.f32 %v2030, %v2128
      %v2130 = vpop.f32.mrb[0].mxu0
      %2131 = vmatprep.mubr.f32.mxu0 0.0
      %2132 = vmatmul.mubr.f32.gmra.mrb[0].mxu0 %v992
      %v2133 = vpop.f32.mrb[0].mxu0
      %v2134 = vadd.f32 %v2030, %v2133
      %v2135 = vpop.f32.mrb[0].mxu0
      %2136 = vmatprep.mubr.f32.mxu0 0.0
      %2137 = vmatmul.mubr.f32.gmra.mrb[0].mxu0 %v995
      %v2138 = vpop.f32.mrb[0].mxu0
      %v2139 = vadd.f32 %v2030, %v2138
      %v2140 = vpop.f32.mrb[0].mxu0
      %2141 = vmatprep.mubr.f32.mxu0 0.0
      %2142 = vmatmul.mubr.f32.gmra.mrb[0].mxu0 %v998
      %v2143 = vpop.f32.mrb[0].mxu0
      %v2144 = vadd.f32 %v2030, %v2143
      %v2145 = vpop.f32.mrb[0].mxu0
      %2146 = vmatprep.mubr.f32.mxu0 0.0
      %2147 = vmatmul.mubr.f32.gmra.mrb[0].mxu0 %v1001
      %v2148 = vpop.f32.mrb[0].mxu0
      %v2149 = vadd.f32 %v2030, %v2148
      %v2150 = vpop.f32.mrb[0].mxu0
      %2151 = vmatprep.mubr.f32.mxu0 0.0
      %2152 = vmatmul.mubr.f32.gmra.mrb[0].mxu0 %v1004
      %v2153 = vpop.f32.mrb[0].mxu0
      %v2154 = vadd.f32 %v2030, %v2153
      %v2155 = vpop.f32.mrb[0].mxu0
      %2156 = vmatprep.mubr.f32.mxu0 0.0
      %2157 = vmatmul.mubr.f32.gmra.mrb[0].mxu0 %v1007
      %v2158 = vpop.f32.mrb[0].mxu0
      %v2159 = vadd.f32 %v2030, %v2158
      %v2160 = vpop.f32.mrb[0].mxu0
      %2161 = vmatprep.mubr.f32.mxu0 0.0
      %2162 = vmatmul.mubr.f32.gmra.mrb[0].mxu0 %v1010
      %v2163 = vpop.f32.mrb[0].mxu0
      %v2164 = vadd.f32 %v2030, %v2163
      %v2165 = vpop.f32.mrb[0].mxu0
      %2166 = vmatprep.mubr.f32.mxu0 0.0
      %2167 = vmatmul.mubr.f32.gmra.mrb[0].mxu0 %v1013
      %v2168 = vpop.f32.mrb[0].mxu0
      %v2169 = vadd.f32 %v2030, %v2168
      %v2170 = vpop.f32.mrb[0].mxu0
      %2171 = vmatprep.mubr.f32.mxu0 0.0
      %2172 = vmatmul.mubr.f32.gmra.mrb[0].mxu0 %v1016
      %v2173 = vpop.f32.mrb[0].mxu0
      %v2174 = vadd.f32 %v2030, %v2173
      %v2175 = vpop.f32.mrb[0].mxu0
      %2176 = vdwg.mxu0
      %v2177 = vadd.f32 %v1717, %v1948
      %v2178 = vadd.f32 %v1722, %v1953
      %v2179 = vadd.f32 %v1727, %v1958
      %v2180 = vadd.f32 %v1732, %v1963
      %v2181 = vadd.f32 %v1737, %v1968
      %v2182 = vadd.f32 %v1742, %v1973
      %v2183 = vadd.f32 %v1747, %v1978
      %v2184 = vadd.f32 %v1752, %v1983
      %v2185 = vadd.f32 %v1757, %v1988
      %v2186 = vadd.f32 %v1762, %v1993
      %v2187 = vadd.f32 %v1767, %v1998
      %v2188 = vadd.f32 %v1772, %v2003
      %v2189 = vadd.f32 %v1777, %v2008
      %v2190 = vadd.f32 %v1782, %v2013
      %v2191 = vadd.f32 %v1787, %v2018
      %v2192 = vadd.f32 %v1792, %v2023
      %v2193 = vadd.f32 %v2177, %v2099
      %v2194 = vadd.f32 %v2178, %v2104
      %v2195 = vadd.f32 %v2179, %v2109
      %v2196 = vadd.f32 %v2180, %v2114
      %v2197 = vadd.f32 %v2181, %v2119
      %v2198 = vadd.f32 %v2182, %v2124
      %v2199 = vadd.f32 %v2183, %v2129
      %v2200 = vadd.f32 %v2184, %v2134
      %v2201 = vadd.f32 %v2185, %v2139
      %v2202 = vadd.f32 %v2186, %v2144
      %v2203 = vadd.f32 %v2187, %v2149
      %v2204 = vadd.f32 %v2188, %v2154
      %v2205 = vadd.f32 %v2189, %v2159
      %v2206 = vadd.f32 %v2190, %v2164
      %v2207 = vadd.f32 %v2191, %v2169
      %v2208 = vadd.f32 %v2192, %v2174
      %v2209 = vmax.f32 %v2193, 0.0
      %v2210 = vmax.f32 %v2194, 0.0
      %v2211 = vmax.f32 %v2195, 0.0
      %v2212 = vmax.f32 %v2196, 0.0
      %v2213 = vmax.f32 %v2197, 0.0
      %v2214 = vmax.f32 %v2198, 0.0
      %v2215 = vmax.f32 %v2199, 0.0
      %v2216 = vmax.f32 %v2200, 0.0
      %v2217 = vmax.f32 %v2201, 0.0
      %v2218 = vmax.f32 %v2202, 0.0
      %v2219 = vmax.f32 %v2203, 0.0
      %v2220 = vmax.f32 %v2204, 0.0
      %v2221 = vmax.f32 %v2205, 0.0
      %v2222 = vmax.f32 %v2206, 0.0
      %v2223 = vmax.f32 %v2207, 0.0
      %v2224 = vmax.f32 %v2208, 0.0
      %v2225 = vld [vmem:[%s23] sm:$0xff]
      %v2226 = vld [vmem:[%s23 + $0x8] sm:$0xff]
      %v2227 = vld [vmem:[%s23 + $0x10] sm:$0xff]
      %v2228 = vld [vmem:[%s23 + $0x18] sm:$0xff]
      %v2229 = vld [vmem:[%s23 + $0x20] sm:$0xff]
      %v2230 = vld [vmem:[%s23 + $0x28] sm:$0xff]
      %v2231 = vld [vmem:[%s23 + $0x30] sm:$0xff]
      %v2232 = vld [vmem:[%s23 + $0x38] sm:$0xff]
      %v2233 = vld [vmem:[%s23 + $0x40] sm:$0xff]
      %v2234 = vld [vmem:[%s23 + $0x48] sm:$0xff]
      %v2235 = vld [vmem:[%s23 + $0x50] sm:$0xff]
      %v2236 = vld [vmem:[%s23 + $0x58] sm:$0xff]
      %v2237 = vld [vmem:[%s23 + $0x60] sm:$0xff]
      %v2238 = vld [vmem:[%s23 + $0x68] sm:$0xff]
      %v2239 = vld [vmem:[%s23 + $0x70] sm:$0xff]
      %v2240 = vld [vmem:[%s23 + $0x78] sm:$0xff]
      %v2241 = vld [vmem:[%s25] sm:$0x1]
      %v2242 = vld [vmem:[%s27] sm:$0xff]
      %v2243 = vld [vmem:[%s27 + $0x8] sm:$0xff]
      %v2244 = vld [vmem:[%s27 + $0x10] sm:$0xff]
      %v2245 = vld [vmem:[%s27 + $0x18] sm:$0xff]
      %v2246 = vld [vmem:[%s27 + $0x20] sm:$0xff]
      %v2247 = vld [vmem:[%s27 + $0x28] sm:$0xff]
      %v2248 = vld [vmem:[%s27 + $0x30] sm:$0xff]
      %v2249 = vld [vmem:[%s27 + $0x38] sm:$0xff]
      %v2250 = vld [vmem:[%s27 + $0x40] sm:$0xff]
      %v2251 = vld [vmem:[%s27 + $0x48] sm:$0xff]
      %v2252 = vld [vmem:[%s27 + $0x50] sm:$0xff]
      %v2253 = vld [vmem:[%s27 + $0x58] sm:$0xff]
      %v2254 = vld [vmem:[%s27 + $0x60] sm:$0xff]
      %v2255 = vld [vmem:[%s27 + $0x68] sm:$0xff]
      %v2256 = vld [vmem:[%s27 + $0x70] sm:$0xff]
      %v2257 = vld [vmem:[%s27 + $0x78] sm:$0xff]
      %v2258 = vld [vmem:[%s29] sm:$0x1]
      %v2259 = vld [vmem:[%s31] sm:$0xff]
      %v2260 = vld [vmem:[%s33] sm:$0x3]
      %v2262 = vlaneseq
      %v2263 = vshrl.u32 %v2262, 7
      %v2264 = vsub.s32 0, %v2263
      %v2265 = vrot.slane %v2241, %v2264
      %2267 = vmatprep.subr.mxu0 0.0
      %2268 = vmatpush1.msra.mxu0 %v2225
      %2269 = vmatprep.subr.mxu0 0.0
      %2270 = vmatpush1.msra.mxu0 %v2226
      %2271 = vmatprep.subr.mxu0 0.0
      %2272 = vmatpush1.msra.mxu0 %v2227
      %2273 = vmatprep.subr.mxu0 0.0
      %2274 = vmatpush1.msra.mxu0 %v2228
      %2275 = vmatprep.subr.mxu0 0.0
      %2276 = vmatpush1.msra.mxu0 %v2229
      %2277 = vmatprep.subr.mxu0 0.0
      %2278 = vmatpush1.msra.mxu0 %v2230
      %2279 = vmatprep.subr.mxu0 0.0
      %2280 = vmatpush1.msra.mxu0 %v2231
      %2281 = vmatprep.subr.mxu0 0.0
      %2282 = vmatpush1.msra.mxu0 %v2232
      %2283 = vmatprep.subr.mxu0 0.0
      %2284 = vmatpush1.msra.mxu0 %v2233
      %2285 = vmatprep.subr.mxu0 0.0
      %2286 = vmatpush1.msra.mxu0 %v2234
      %2287 = vmatprep.subr.mxu0 0.0
      %2288 = vmatpush1.msra.mxu0 %v2235
      %2289 = vmatprep.subr.mxu0 0.0
      %2290 = vmatpush1.msra.mxu0 %v2236
      %2291 = vmatprep.subr.mxu0 0.0
      %2292 = vmatpush1.msra.mxu0 %v2237
      %2293 = vmatprep.subr.mxu0 0.0
      %2294 = vmatpush1.msra.mxu0 %v2238
      %2295 = vmatprep.subr.mxu0 0.0
      %2296 = vmatpush1.msra.mxu0 %v2239
      %2297 = vmatprep.subr.mxu0 0.0
      %2298 = vmatpush1.msra.mxu0 %v2240
      %2299 = vmatprep.subr.mxu0 0.0
      %2300 = vmatpush1.msra.mxu0 0.0
      %2301 = vmatprep.subr.mxu0 0.0
      %2302 = vmatpush1.msra.mxu0 0.0
      %2303 = vmatprep.subr.mxu0 0.0
      %2304 = vmatpush1.msra.mxu0 0.0
      %2305 = vmatprep.subr.mxu0 0.0
      %2306 = vmatpush1.msra.mxu0 0.0
      %2307 = vmatprep.subr.mxu0 0.0
      %2308 = vmatpush1.msra.mxu0 0.0
      %2309 = vmatprep.subr.mxu0 0.0
      %2310 = vmatpush1.msra.mxu0 0.0
      %2311 = vmatprep.subr.mxu0 0.0
      %2312 = vmatpush1.msra.mxu0 0.0
      %2313 = vmatprep.subr.mxu0 0.0
      %2314 = vmatpush1.msra.mxu0 0.0
      %2315 = vmatprep.subr.mxu0 0.0
      %2316 = vmatpush1.msra.mxu0 0.0
      %2317 = vmatprep.subr.mxu0 0.0
      %2318 = vmatpush1.msra.mxu0 0.0
      %2319 = vmatprep.subr.mxu0 0.0
      %2320 = vmatpush1.msra.mxu0 0.0
      %2321 = vmatprep.subr.mxu0 0.0
      %2322 = vmatpush1.msra.mxu0 0.0
      %2323 = vmatprep.subr.mxu0 0.0
      %2324 = vmatpush1.msra.mxu0 0.0
      %2325 = vmatprep.subr.mxu0 0.0
      %2326 = vmatpush1.msra.mxu0 0.0
      %2327 = vmatprep.subr.mxu0 0.0
      %2328 = vmatpush1.msra.mxu0 0.0
      %2329 = vmatprep.subr.mxu0 0.0
      %2330 = vmatpush1.msra.mxu0 0.0
      %2331 = vmatprep.mubr.f32.mxu0 0.0
      %2332 = vmatmul.mubr.f32.gmra.mrb[0].mxu0 %v2209
      %v2333 = vpop.f32.mrb[0].mxu0
      %v2334 = vadd.f32 %v2265, %v2333
      %v2335 = vpop.f32.mrb[0].mxu0
      %2336 = vmatprep.mubr.f32.mxu0 0.0
      %2337 = vmatmul.mubr.f32.gmra.mrb[0].mxu0 %v2210
      %v2338 = vpop.f32.mrb[0].mxu0
      %v2339 = vadd.f32 %v2265, %v2338
      %v2340 = vpop.f32.mrb[0].mxu0
      %2341 = vmatprep.mubr.f32.mxu0 0.0
      %2342 = vmatmul.mubr.f32.gmra.mrb[0].mxu0 %v2211
      %v2343 = vpop.f32.mrb[0].mxu0
      %v2344 = vadd.f32 %v2265, %v2343
      %v2345 = vpop.f32.mrb[0].mxu0
      %2346 = vmatprep.mubr.f32.mxu0 0.0
      %2347 = vmatmul.mubr.f32.gmra.mrb[0].mxu0 %v2212
      %v2348 = vpop.f32.mrb[0].mxu0
      %v2349 = vadd.f32 %v2265, %v2348
      %v2350 = vpop.f32.mrb[0].mxu0
      %2351 = vmatprep.mubr.f32.mxu0 0.0
      %2352 = vmatmul.mubr.f32.gmra.mrb[0].mxu0 %v2213
      %v2353 = vpop.f32.mrb[0].mxu0
      %v2354 = vadd.f32 %v2265, %v2353
      %v2355 = vpop.f32.mrb[0].mxu0
      %2356 = vmatprep.mubr.f32.mxu0 0.0
      %2357 = vmatmul.mubr.f32.gmra.mrb[0].mxu0 %v2214
      %v2358 = vpop.f32.mrb[0].mxu0
      %v2359 = vadd.f32 %v2265, %v2358
      %v2360 = vpop.f32.mrb[0].mxu0
      %2361 = vmatprep.mubr.f32.mxu0 0.0
      %2362 = vmatmul.mubr.f32.gmra.mrb[0].mxu0 %v2215
      %v2363 = vpop.f32.mrb[0].mxu0
      %v2364 = vadd.f32 %v2265, %v2363
      %v2365 = vpop.f32.mrb[0].mxu0
      %2366 = vmatprep.mubr.f32.mxu0 0.0
      %2367 = vmatmul.mubr.f32.gmra.mrb[0].mxu0 %v2216
      %v2368 = vpop.f32.mrb[0].mxu0
      %v2369 = vadd.f32 %v2265, %v2368
      %v2370 = vpop.f32.mrb[0].mxu0
      %2371 = vmatprep.mubr.f32.mxu0 0.0
      %2372 = vmatmul.mubr.f32.gmra.mrb[0].mxu0 %v2217
      %v2373 = vpop.f32.mrb[0].mxu0
      %v2374 = vadd.f32 %v2265, %v2373
      %v2375 = vpop.f32.mrb[0].mxu0
      %2376 = vmatprep.mubr.f32.mxu0 0.0
      %2377 = vmatmul.mubr.f32.gmra.mrb[0].mxu0 %v2218
      %v2378 = vpop.f32.mrb[0].mxu0
      %v2379 = vadd.f32 %v2265, %v2378
      %v2380 = vpop.f32.mrb[0].mxu0
      %2381 = vmatprep.mubr.f32.mxu0 0.0
      %2382 = vmatmul.mubr.f32.gmra.mrb[0].mxu0 %v2219
      %v2383 = vpop.f32.mrb[0].mxu0
      %v2384 = vadd.f32 %v2265, %v2383
      %v2385 = vpop.f32.mrb[0].mxu0
      %2386 = vmatprep.mubr.f32.mxu0 0.0
      %2387 = vmatmul.mubr.f32.gmra.mrb[0].mxu0 %v2220
      %v2388 = vpop.f32.mrb[0].mxu0
      %v2389 = vadd.f32 %v2265, %v2388
      %v2390 = vpop.f32.mrb[0].mxu0
      %2391 = vmatprep.mubr.f32.mxu0 0.0
      %2392 = vmatmul.mubr.f32.gmra.mrb[0].mxu0 %v2221
      %v2393 = vpop.f32.mrb[0].mxu0
      %v2394 = vadd.f32 %v2265, %v2393
      %v2395 = vpop.f32.mrb[0].mxu0
      %2396 = vmatprep.mubr.f32.mxu0 0.0
      %2397 = vmatmul.mubr.f32.gmra.mrb[0].mxu0 %v2222
      %v2398 = vpop.f32.mrb[0].mxu0
      %v2399 = vadd.f32 %v2265, %v2398
      %v2400 = vpop.f32.mrb[0].mxu0
      %2401 = vmatprep.mubr.f32.mxu0 0.0
      %2402 = vmatmul.mubr.f32.gmra.mrb[0].mxu0 %v2223
      %v2403 = vpop.f32.mrb[0].mxu0
      %v2404 = vadd.f32 %v2265, %v2403
      %v2405 = vpop.f32.mrb[0].mxu0
      %2406 = vmatprep.mubr.f32.mxu0 0.0
      %2407 = vmatmul.mubr.f32.gmra.mrb[0].mxu0 %v2224
      %v2408 = vpop.f32.mrb[0].mxu0
      %v2409 = vadd.f32 %v2265, %v2408
      %v2410 = vpop.f32.mrb[0].mxu0
      %2411 = vdwg.mxu0
      %2412 = vmatprep.subr.mxu0 0.0
      %2413 = vmatpush1.msra.mxu0 %v2334
      %2414 = vmatprep.subr.mxu0 0.0
      %2415 = vmatpush1.msra.mxu0 %v2339
      %2416 = vmatprep.subr.mxu0 0.0
      %2417 = vmatpush1.msra.mxu0 %v2344
      %2418 = vmatprep.subr.mxu0 0.0
      %2419 = vmatpush1.msra.mxu0 %v2349
      %2420 = vmatprep.subr.mxu0 0.0
      %2421 = vmatpush1.msra.mxu0 %v2354
      %2422 = vmatprep.subr.mxu0 0.0
      %2423 = vmatpush1.msra.mxu0 %v2359
      %2424 = vmatprep.subr.mxu0 0.0
      %2425 = vmatpush1.msra.mxu0 %v2364
      %2426 = vmatprep.subr.mxu0 0.0
      %2427 = vmatpush1.msra.mxu0 %v2369
      %2428 = vmatprep.subr.mxu0 0.0
      %2429 = vmatpush1.msra.mxu0 %v2374
      %2430 = vmatprep.subr.mxu0 0.0
      %2431 = vmatpush1.msra.mxu0 %v2379
      %2432 = vmatprep.subr.mxu0 0.0
      %2433 = vmatpush1.msra.mxu0 %v2384
      %2434 = vmatprep.subr.mxu0 0.0
      %2435 = vmatpush1.msra.mxu0 %v2389
      %2436 = vmatprep.subr.mxu0 0.0
      %2437 = vmatpush1.msra.mxu0 %v2394
      %2438 = vmatprep.subr.mxu0 0.0
      %2439 = vmatpush1.msra.mxu0 %v2399
      %2440 = vmatprep.subr.mxu0 0.0
      %2441 = vmatpush1.msra.mxu0 %v2404
      %2442 = vmatprep.subr.mxu0 0.0
      %2443 = vmatpush1.msra.mxu0 %v2409
      %2444 = vmatprep.subr.mxu0 0.0
      %2445 = vmatpush1.msra.mxu0 0.0
      %2446 = vmatprep.subr.mxu0 0.0
      %2447 = vmatpush1.msra.mxu0 0.0
      %2448 = vmatprep.subr.mxu0 0.0
      %2449 = vmatpush1.msra.mxu0 0.0
      %2450 = vmatprep.subr.mxu0 0.0
      %2451 = vmatpush1.msra.mxu0 0.0
      %2452 = vmatprep.subr.mxu0 0.0
      %2453 = vmatpush1.msra.mxu0 0.0
      %2454 = vmatprep.subr.mxu0 0.0
      %2455 = vmatpush1.msra.mxu0 0.0
      %2456 = vmatprep.subr.mxu0 0.0
      %2457 = vmatpush1.msra.mxu0 0.0
      %2458 = vmatprep.subr.mxu0 0.0
      %2459 = vmatpush1.msra.mxu0 0.0
      %2460 = vmatprep.subr.mxu0 0.0
      %2461 = vmatpush1.msra.mxu0 0.0
      %2462 = vmatprep.subr.mxu0 0.0
      %2463 = vmatpush1.msra.mxu0 0.0
      %2464 = vmatprep.subr.mxu0 0.0
      %2465 = vmatpush1.msra.mxu0 0.0
      %2466 = vmatprep.subr.mxu0 0.0
      %2467 = vmatpush1.msra.mxu0 0.0
      %2468 = vmatprep.subr.mxu0 0.0
      %2469 = vmatpush1.msra.mxu0 0.0
      %2470 = vmatprep.subr.mxu0 0.0
      %2471 = vmatpush1.msra.mxu0 0.0
      %2472 = vmatprep.subr.mxu0 0.0
      %2473 = vmatpush1.msra.mxu0 0.0
      %2474 = vmatprep.subr.mxu0 0.0
      %2475 = vmatpush1.msra.mxu0 0.0
      %2476 = vmatprep.mubr.f32.mxu0 0.0
      %2477 = vmatmul.mubr.f32.gmra.mrb[0].mxu0 %v921
      %v2478 = vpop.f32.mrb[0].mxu0
      %v2479 = vadd.f32 0.0, %v2478
      %v2480 = vpop.f32.mrb[0].mxu0
      %2481 = vdwg.mxu0
      %v2482 = vmul.f32 %v2479, 0.125
      %v2484 = vsel %vm1234, %v2482, 0
      %2486 = vmatprep.subr.mxu0 0.0
      %2487 = vmatpush1.msra.mxu0 %v2259
      %2488 = vmatprep.subr.mxu0 0.0
      %2489 = vmatpush1.msra.mxu0 0.0
      %2490 = vmatprep.subr.mxu0 0.0
      %2491 = vmatpush1.msra.mxu0 0.0
      %2492 = vmatprep.subr.mxu0 0.0
      %2493 = vmatpush1.msra.mxu0 0.0
      %2494 = vmatprep.subr.mxu0 0.0
      %2495 = vmatpush1.msra.mxu0 0.0
      %2496 = vmatprep.subr.mxu0 0.0
      %2497 = vmatpush1.msra.mxu0 0.0
      %2498 = vmatprep.subr.mxu0 0.0
      %2499 = vmatpush1.msra.mxu0 0.0
      %2500 = vmatprep.subr.mxu0 0.0
      %2501 = vmatpush1.msra.mxu0 0.0
      %2502 = vmatprep.subr.mxu0 0.0
      %2503 = vmatpush1.msra.mxu0 0.0
      %2504 = vmatprep.subr.mxu0 0.0
      %2505 = vmatpush1.msra.mxu0 0.0
      %2506 = vmatprep.subr.mxu0 0.0
      %2507 = vmatpush1.msra.mxu0 0.0
      %2508 = vmatprep.subr.mxu0 0.0
      %2509 = vmatpush1.msra.mxu0 0.0
      %2510 = vmatprep.subr.mxu0 0.0
      %2511 = vmatpush1.msra.mxu0 0.0
      %2512 = vmatprep.subr.mxu0 0.0
      %2513 = vmatpush1.msra.mxu0 0.0
      %2514 = vmatprep.subr.mxu0 0.0
      %2515 = vmatpush1.msra.mxu0 0.0
      %2516 = vmatprep.subr.mxu0 0.0
      %2517 = vmatpush1.msra.mxu0 0.0
      %2518 = vmatprep.subr.mxu0 0.0
      %2519 = vmatpush1.msra.mxu0 0.0
      %2520 = vmatprep.subr.mxu0 0.0
      %2521 = vmatpush1.msra.mxu0 0.0
      %2522 = vmatprep.subr.mxu0 0.0
      %2523 = vmatpush1.msra.mxu0 0.0
      %2524 = vmatprep.subr.mxu0 0.0
      %2525 = vmatpush1.msra.mxu0 0.0
      %2526 = vmatprep.subr.mxu0 0.0
      %2527 = vmatpush1.msra.mxu0 0.0
      %2528 = vmatprep.subr.mxu0 0.0
      %2529 = vmatpush1.msra.mxu0 0.0
      %2530 = vmatprep.subr.mxu0 0.0
      %2531 = vmatpush1.msra.mxu0 0.0
      %2532 = vmatprep.subr.mxu0 0.0
      %2533 = vmatpush1.msra.mxu0 0.0
      %2534 = vmatprep.subr.mxu0 0.0
      %2535 = vmatpush1.msra.mxu0 0.0
      %2536 = vmatprep.subr.mxu0 0.0
      %2537 = vmatpush1.msra.mxu0 0.0
      %2538 = vmatprep.subr.mxu0 0.0
      %2539 = vmatpush1.msra.mxu0 0.0
      %2540 = vmatprep.subr.mxu0 0.0
      %2541 = vmatpush1.msra.mxu0 0.0
      %2542 = vmatprep.subr.mxu0 0.0
      %2543 = vmatpush1.msra.mxu0 0.0
      %2544 = vmatprep.subr.mxu0 0.0
      %2545 = vmatpush1.msra.mxu0 0.0
      %2546 = vmatprep.subr.mxu0 0.0
      %2547 = vmatpush1.msra.mxu0 0.0
      %2548 = vmatprep.subr.mxu0 0.0
      %2549 = vmatpush1.msra.mxu0 0.0
      %2550 = vmatprep.mubr.f32.mxu0 0.0
      %2551 = vmatmul.mubr.f32.gmra.mrb[0].mxu0 %v2484
      %v2552 = vpop.f32.mrb[0].mxu0
      %v2553 = vadd.f32 0.0, %v2552
      %v2554 = vpop.f32.mrb[0].mxu0
      %2555 = vdwg.mxu0
      %v2556 = vmax.f32 %v2553, 0.0
      %v2558 = vsel %vm1309, %v2556, 0
      %v2561 = vsel %vm1313, %v2260, 0
      %2563 = vmatprep.subr.mxu0 0.0
      %2564 = vmatpush1.msra.mxu0 %v2561
      %2565 = vmatprep.subr.mxu0 0.0
      %2566 = vmatpush1.msra.mxu0 0.0
      %2567 = vmatprep.subr.mxu0 0.0
      %2568 = vmatpush1.msra.mxu0 0.0
      %2569 = vmatprep.subr.mxu0 0.0
      %2570 = vmatpush1.msra.mxu0 0.0
      %2571 = vmatprep.subr.mxu0 0.0
      %2572 = vmatpush1.msra.mxu0 0.0
      %2573 = vmatprep.subr.mxu0 0.0
      %2574 = vmatpush1.msra.mxu0 0.0
      %2575 = vmatprep.subr.mxu0 0.0
      %2576 = vmatpush1.msra.mxu0 0.0
      %2577 = vmatprep.subr.mxu0 0.0
      %2578 = vmatpush1.msra.mxu0 0.0
      %2579 = vmatprep.subr.mxu0 0.0
      %2580 = vmatpush1.msra.mxu0 0.0
      %2581 = vmatprep.subr.mxu0 0.0
      %2582 = vmatpush1.msra.mxu0 0.0
      %2583 = vmatprep.subr.mxu0 0.0
      %2584 = vmatpush1.msra.mxu0 0.0
      %2585 = vmatprep.subr.mxu0 0.0
      %2586 = vmatpush1.msra.mxu0 0.0
      %2587 = vmatprep.subr.mxu0 0.0
      %2588 = vmatpush1.msra.mxu0 0.0
      %2589 = vmatprep.subr.mxu0 0.0
      %2590 = vmatpush1.msra.mxu0 0.0
      %2591 = vmatprep.subr.mxu0 0.0
      %2592 = vmatpush1.msra.mxu0 0.0
      %2593 = vmatprep.subr.mxu0 0.0
      %2594 = vmatpush1.msra.mxu0 0.0
      %2595 = vmatprep.subr.mxu0 0.0
      %2596 = vmatpush1.msra.mxu0 0.0
      %2597 = vmatprep.subr.mxu0 0.0
      %2598 = vmatpush1.msra.mxu0 0.0
      %2599 = vmatprep.subr.mxu0 0.0
      %2600 = vmatpush1.msra.mxu0 0.0
      %2601 = vmatprep.subr.mxu0 0.0
      %2602 = vmatpush1.msra.mxu0 0.0
      %2603 = vmatprep.subr.mxu0 0.0
      %2604 = vmatpush1.msra.mxu0 0.0
      %2605 = vmatprep.subr.mxu0 0.0
      %2606 = vmatpush1.msra.mxu0 0.0
      %2607 = vmatprep.subr.mxu0 0.0
      %2608 = vmatpush1.msra.mxu0 0.0
      %2609 = vmatprep.subr.mxu0 0.0
      %2610 = vmatpush1.msra.mxu0 0.0
      %2611 = vmatprep.subr.mxu0 0.0
      %2612 = vmatpush1.msra.mxu0 0.0
      %2613 = vmatprep.subr.mxu0 0.0
      %2614 = vmatpush1.msra.mxu0 0.0
      %2615 = vmatprep.subr.mxu0 0.0
      %2616 = vmatpush1.msra.mxu0 0.0
      %2617 = vmatprep.subr.mxu0 0.0
      %2618 = vmatpush1.msra.mxu0 0.0
      %2619 = vmatprep.subr.mxu0 0.0
      %2620 = vmatpush1.msra.mxu0 0.0
      %2621 = vmatprep.subr.mxu0 0.0
      %2622 = vmatpush1.msra.mxu0 0.0
      %2623 = vmatprep.subr.mxu0 0.0
      %2624 = vmatpush1.msra.mxu0 0.0
      %2625 = vmatprep.subr.mxu0 0.0
      %2626 = vmatpush1.msra.mxu0 0.0
      %2627 = vmatprep.mubr.f32.mxu0 0.0
      %2628 = vmatmul.mubr.f32.gmra.mrb[0].mxu0 %v2558
      %v2629 = vpop.f32.mrb[0].mxu0
      %v2630 = vadd.f32 0.0, %v2629
      %v2631 = vpop.f32.mrb[0].mxu0
      %2632 = vdwg.mxu0
      %v2633 = vxor.u32 %v2630, 2147483648
      %v2634 = vmul.f32 %v2633, 1.442695
      %v2635 = vpow.pop %v2634
      %v2636 = vadd.f32 %v2635, 1.0
      %v2637 = vrcp.pop %v2636
      %v2638 = vmul.f32 1.0, %v2637
      %2639 = vmatprep.subr.mxu0 0.0
      %2640 = vmatpush1.msra.mxu0 %v2638
      %2641 = vmatprep.subr.mxu0 0.0
      %2642 = vmatpush1.msra.mxu0 0.0
      %2643 = vmatprep.subr.mxu0 0.0
      %2644 = vmatpush1.msra.mxu0 0.0
      %2645 = vmatprep.subr.mxu0 0.0
      %2646 = vmatpush1.msra.mxu0 0.0
      %2647 = vmatprep.subr.mxu0 0.0
      %2648 = vmatpush1.msra.mxu0 0.0
      %2649 = vmatprep.subr.mxu0 0.0
      %2650 = vmatpush1.msra.mxu0 0.0
      %2651 = vmatprep.subr.mxu0 0.0
      %2652 = vmatpush1.msra.mxu0 0.0
      %2653 = vmatprep.subr.mxu0 0.0
      %2654 = vmatpush1.msra.mxu0 0.0
      %2655 = vmatprep.subr.mxu0 0.0
      %2656 = vmatpush1.msra.mxu0 0.0
      %2657 = vmatprep.subr.mxu0 0.0
      %2658 = vmatpush1.msra.mxu0 0.0
      %2659 = vmatprep.subr.mxu0 0.0
      %2660 = vmatpush1.msra.mxu0 0.0
      %2661 = vmatprep.subr.mxu0 0.0
      %2662 = vmatpush1.msra.mxu0 0.0
      %2663 = vmatprep.subr.mxu0 0.0
      %2664 = vmatpush1.msra.mxu0 0.0
      %2665 = vmatprep.subr.mxu0 0.0
      %2666 = vmatpush1.msra.mxu0 0.0
      %2667 = vmatprep.subr.mxu0 0.0
      %2668 = vmatpush1.msra.mxu0 0.0
      %2669 = vmatprep.subr.mxu0 0.0
      %2670 = vmatpush1.msra.mxu0 0.0
      %2671 = vmatprep.subr.mxu0 0.0
      %2672 = vmatpush1.msra.mxu0 0.0
      %2673 = vmatprep.subr.mxu0 0.0
      %2674 = vmatpush1.msra.mxu0 0.0
      %2675 = vmatprep.subr.mxu0 0.0
      %2676 = vmatpush1.msra.mxu0 0.0
      %2677 = vmatprep.subr.mxu0 0.0
      %2678 = vmatpush1.msra.mxu0 0.0
      %2679 = vmatprep.subr.mxu0 0.0
      %2680 = vmatpush1.msra.mxu0 0.0
      %2681 = vmatprep.subr.mxu0 0.0
      %2682 = vmatpush1.msra.mxu0 0.0
      %2683 = vmatprep.subr.mxu0 0.0
      %2684 = vmatpush1.msra.mxu0 0.0
      %2685 = vmatprep.subr.mxu0 0.0
      %2686 = vmatpush1.msra.mxu0 0.0
      %2687 = vmatprep.subr.mxu0 0.0
      %2688 = vmatpush1.msra.mxu0 0.0
      %2689 = vmatprep.subr.mxu0 0.0
      %2690 = vmatpush1.msra.mxu0 0.0
      %2691 = vmatprep.subr.mxu0 0.0
      %2692 = vmatpush1.msra.mxu0 0.0
      %2693 = vmatprep.subr.mxu0 0.0
      %2694 = vmatpush1.msra.mxu0 0.0
      %2695 = vmatprep.subr.mxu0 0.0
      %2696 = vmatpush1.msra.mxu0 0.0
      %2697 = vmatprep.subr.mxu0 0.0
      %2698 = vmatpush1.msra.mxu0 0.0
      %2699 = vmatprep.subr.mxu0 0.0
      %2700 = vmatpush1.msra.mxu0 0.0
      %2701 = vmatprep.subr.mxu0 0.0
      %2702 = vmatpush1.msra.mxu0 0.0
      %2703 = vmatprep.mubr.f32.mxu0 0.0
      %2704 = vmatmul.mubr.f32.gmra.mrb[0].mxu0 %v1394
      %v2705 = vpop.f32.mrb[0].mxu0
      %v2706 = vadd.f32 0.0, %v2705
      %v2707 = vpop.f32.mrb[0].mxu0
      %2708 = vmatprep.mubr.f32.mxu0 0.0
      %2709 = vmatmul.mubr.f32.gmra.mrb[0].mxu0 %v1397
      %v2710 = vpop.f32.mrb[0].mxu0
      %v2711 = vadd.f32 0.0, %v2710
      %v2712 = vpop.f32.mrb[0].mxu0
      %2713 = vmatprep.mubr.f32.mxu0 0.0
      %2714 = vmatmul.mubr.f32.gmra.mrb[0].mxu0 %v1400
      %v2715 = vpop.f32.mrb[0].mxu0
      %v2716 = vadd.f32 0.0, %v2715
      %v2717 = vpop.f32.mrb[0].mxu0
      %2718 = vmatprep.mubr.f32.mxu0 0.0
      %2719 = vmatmul.mubr.f32.gmra.mrb[0].mxu0 %v1403
      %v2720 = vpop.f32.mrb[0].mxu0
      %v2721 = vadd.f32 0.0, %v2720
      %v2722 = vpop.f32.mrb[0].mxu0
      %2723 = vmatprep.mubr.f32.mxu0 0.0
      %2724 = vmatmul.mubr.f32.gmra.mrb[0].mxu0 %v1406
      %v2725 = vpop.f32.mrb[0].mxu0
      %v2726 = vadd.f32 0.0, %v2725
      %v2727 = vpop.f32.mrb[0].mxu0
      %2728 = vmatprep.mubr.f32.mxu0 0.0
      %2729 = vmatmul.mubr.f32.gmra.mrb[0].mxu0 %v1409
      %v2730 = vpop.f32.mrb[0].mxu0
      %v2731 = vadd.f32 0.0, %v2730
      %v2732 = vpop.f32.mrb[0].mxu0
      %2733 = vmatprep.mubr.f32.mxu0 0.0
      %2734 = vmatmul.mubr.f32.gmra.mrb[0].mxu0 %v1412
      %v2735 = vpop.f32.mrb[0].mxu0
      %v2736 = vadd.f32 0.0, %v2735
      %v2737 = vpop.f32.mrb[0].mxu0
      %2738 = vmatprep.mubr.f32.mxu0 0.0
      %2739 = vmatmul.mubr.f32.gmra.mrb[0].mxu0 %v1415
      %v2740 = vpop.f32.mrb[0].mxu0
      %v2741 = vadd.f32 0.0, %v2740
      %v2742 = vpop.f32.mrb[0].mxu0
      %2743 = vmatprep.mubr.f32.mxu0 0.0
      %2744 = vmatmul.mubr.f32.gmra.mrb[0].mxu0 %v1418
      %v2745 = vpop.f32.mrb[0].mxu0
      %v2746 = vadd.f32 0.0, %v2745
      %v2747 = vpop.f32.mrb[0].mxu0
      %2748 = vmatprep.mubr.f32.mxu0 0.0
      %2749 = vmatmul.mubr.f32.gmra.mrb[0].mxu0 %v1421
      %v2750 = vpop.f32.mrb[0].mxu0
      %v2751 = vadd.f32 0.0, %v2750
      %v2752 = vpop.f32.mrb[0].mxu0
      %2753 = vmatprep.mubr.f32.mxu0 0.0
      %2754 = vmatmul.mubr.f32.gmra.mrb[0].mxu0 %v1424
      %v2755 = vpop.f32.mrb[0].mxu0
      %v2756 = vadd.f32 0.0, %v2755
      %v2757 = vpop.f32.mrb[0].mxu0
      %2758 = vmatprep.mubr.f32.mxu0 0.0
      %2759 = vmatmul.mubr.f32.gmra.mrb[0].mxu0 %v1427
      %v2760 = vpop.f32.mrb[0].mxu0
      %v2761 = vadd.f32 0.0, %v2760
      %v2762 = vpop.f32.mrb[0].mxu0
      %2763 = vmatprep.mubr.f32.mxu0 0.0
      %2764 = vmatmul.mubr.f32.gmra.mrb[0].mxu0 %v1430
      %v2765 = vpop.f32.mrb[0].mxu0
      %v2766 = vadd.f32 0.0, %v2765
      %v2767 = vpop.f32.mrb[0].mxu0
      %2768 = vmatprep.mubr.f32.mxu0 0.0
      %2769 = vmatmul.mubr.f32.gmra.mrb[0].mxu0 %v1433
      %v2770 = vpop.f32.mrb[0].mxu0
      %v2771 = vadd.f32 0.0, %v2770
      %v2772 = vpop.f32.mrb[0].mxu0
      %2773 = vmatprep.mubr.f32.mxu0 0.0
      %2774 = vmatmul.mubr.f32.gmra.mrb[0].mxu0 %v1436
      %v2775 = vpop.f32.mrb[0].mxu0
      %v2776 = vadd.f32 0.0, %v2775
      %v2777 = vpop.f32.mrb[0].mxu0
      %2778 = vmatprep.mubr.f32.mxu0 0.0
      %2779 = vmatmul.mubr.f32.gmra.mrb[0].mxu0 %v1439
      %v2780 = vpop.f32.mrb[0].mxu0
      %v2781 = vadd.f32 0.0, %v2780
      %v2782 = vpop.f32.mrb[0].mxu0
      %2783 = vdwg.mxu0
      %v2784 = vmul.f32 %v2334, %v2706
      %v2785 = vmul.f32 %v2339, %v2711
      %v2786 = vmul.f32 %v2344, %v2716
      %v2787 = vmul.f32 %v2349, %v2721
      %v2788 = vmul.f32 %v2354, %v2726
      %v2789 = vmul.f32 %v2359, %v2731
      %v2790 = vmul.f32 %v2364, %v2736
      %v2791 = vmul.f32 %v2369, %v2741
      %v2792 = vmul.f32 %v2374, %v2746
      %v2793 = vmul.f32 %v2379, %v2751
      %v2794 = vmul.f32 %v2384, %v2756
      %v2795 = vmul.f32 %v2389, %v2761
      %v2796 = vmul.f32 %v2394, %v2766
      %v2797 = vmul.f32 %v2399, %v2771
      %v2798 = vmul.f32 %v2404, %v2776
      %v2799 = vmul.f32 %v2409, %v2781
      %v2801 = vsel %vm1234, %v2784, 0
      %v2804 = vsel %vm1234, %v2785, 0
      %v2807 = vsel %vm1234, %v2786, 0
      %v2810 = vsel %vm1234, %v2787, 0
      %v2813 = vsel %vm1234, %v2788, 0
      %v2816 = vsel %vm1234, %v2789, 0
      %v2819 = vsel %vm1234, %v2790, 0
      %v2822 = vsel %vm1234, %v2791, 0
      %v2825 = vsel %vm1234, %v2792, 0
      %v2828 = vsel %vm1234, %v2793, 0
      %v2831 = vsel %vm1234, %v2794, 0
      %v2834 = vsel %vm1234, %v2795, 0
      %v2837 = vsel %vm1234, %v2796, 0
      %v2840 = vsel %vm1234, %v2797, 0
      %v2843 = vsel %vm1234, %v2798, 0
      %v2846 = vsel %vm1234, %v2799, 0
      %2848 = vmatprep.subr.mxu0 0.0
      %2849 = vmatpush1.msra.mxu0 %v938
      %2850 = vmatprep.subr.mxu0 0.0
      %2851 = vmatpush1.msra.mxu0 0.0
      %2852 = vmatprep.subr.mxu0 0.0
      %2853 = vmatpush1.msra.mxu0 0.0
      %2854 = vmatprep.subr.mxu0 0.0
      %2855 = vmatpush1.msra.mxu0 0.0
      %2856 = vmatprep.subr.mxu0 0.0
      %2857 = vmatpush1.msra.mxu0 0.0
      %2858 = vmatprep.subr.mxu0 0.0
      %2859 = vmatpush1.msra.mxu0 0.0
      %2860 = vmatprep.subr.mxu0 0.0
      %2861 = vmatpush1.msra.mxu0 0.0
      %2862 = vmatprep.subr.mxu0 0.0
      %2863 = vmatpush1.msra.mxu0 0.0
      %2864 = vmatprep.subr.mxu0 0.0
      %2865 = vmatpush1.msra.mxu0 0.0
      %2866 = vmatprep.subr.mxu0 0.0
      %2867 = vmatpush1.msra.mxu0 0.0
      %2868 = vmatprep.subr.mxu0 0.0
      %2869 = vmatpush1.msra.mxu0 0.0
      %2870 = vmatprep.subr.mxu0 0.0
      %2871 = vmatpush1.msra.mxu0 0.0
      %2872 = vmatprep.subr.mxu0 0.0
      %2873 = vmatpush1.msra.mxu0 0.0
      %2874 = vmatprep.subr.mxu0 0.0
      %2875 = vmatpush1.msra.mxu0 0.0
      %2876 = vmatprep.subr.mxu0 0.0
      %2877 = vmatpush1.msra.mxu0 0.0
      %2878 = vmatprep.subr.mxu0 0.0
      %2879 = vmatpush1.msra.mxu0 0.0
      %2880 = vmatprep.subr.mxu0 0.0
      %2881 = vmatpush1.msra.mxu0 0.0
      %2882 = vmatprep.subr.mxu0 0.0
      %2883 = vmatpush1.msra.mxu0 0.0
      %2884 = vmatprep.subr.mxu0 0.0
      %2885 = vmatpush1.msra.mxu0 0.0
      %2886 = vmatprep.subr.mxu0 0.0
      %2887 = vmatpush1.msra.mxu0 0.0
      %2888 = vmatprep.subr.mxu0 0.0
      %2889 = vmatpush1.msra.mxu0 0.0
      %2890 = vmatprep.subr.mxu0 0.0
      %2891 = vmatpush1.msra.mxu0 0.0
      %2892 = vmatprep.subr.mxu0 0.0
      %2893 = vmatpush1.msra.mxu0 0.0
      %2894 = vmatprep.subr.mxu0 0.0
      %2895 = vmatpush1.msra.mxu0 0.0
      %2896 = vmatprep.subr.mxu0 0.0
      %2897 = vmatpush1.msra.mxu0 0.0
      %2898 = vmatprep.subr.mxu0 0.0
      %2899 = vmatpush1.msra.mxu0 0.0
      %2900 = vmatprep.subr.mxu0 0.0
      %2901 = vmatpush1.msra.mxu0 0.0
      %2902 = vmatprep.subr.mxu0 0.0
      %2903 = vmatpush1.msra.mxu0 0.0
      %2904 = vmatprep.subr.mxu0 0.0
      %2905 = vmatpush1.msra.mxu0 0.0
      %2906 = vmatprep.subr.mxu0 0.0
      %2907 = vmatpush1.msra.mxu0 0.0
      %2908 = vmatprep.subr.mxu0 0.0
      %2909 = vmatpush1.msra.mxu0 0.0
      %2910 = vmatprep.subr.mxu0 0.0
      %2911 = vmatpush1.msra.mxu0 0.0
      %2912 = vmatprep.mubr.f32.mxu0 0.0
      %2913 = vmatmul.mubr.f32.gmra.mrb[0].mxu0 %v2801
      %v2914 = vpop.f32.mrb[0].mxu0
      %v2915 = vadd.f32 0.0, %v2914
      %v2916 = vpop.f32.mrb[0].mxu0
      %2917 = vmatprep.mubr.f32.mxu0 0.0
      %2918 = vmatmul.mubr.f32.gmra.mrb[0].mxu0 %v2804
      %v2919 = vpop.f32.mrb[0].mxu0
      %v2920 = vadd.f32 0.0, %v2919
      %v2921 = vpop.f32.mrb[0].mxu0
      %2922 = vmatprep.mubr.f32.mxu0 0.0
      %2923 = vmatmul.mubr.f32.gmra.mrb[0].mxu0 %v2807
      %v2924 = vpop.f32.mrb[0].mxu0
      %v2925 = vadd.f32 0.0, %v2924
      %v2926 = vpop.f32.mrb[0].mxu0
      %2927 = vmatprep.mubr.f32.mxu0 0.0
      %2928 = vmatmul.mubr.f32.gmra.mrb[0].mxu0 %v2810
      %v2929 = vpop.f32.mrb[0].mxu0
      %v2930 = vadd.f32 0.0, %v2929
      %v2931 = vpop.f32.mrb[0].mxu0
      %2932 = vmatprep.mubr.f32.mxu0 0.0
      %2933 = vmatmul.mubr.f32.gmra.mrb[0].mxu0 %v2813
      %v2934 = vpop.f32.mrb[0].mxu0
      %v2935 = vadd.f32 0.0, %v2934
      %v2936 = vpop.f32.mrb[0].mxu0
      %2937 = vmatprep.mubr.f32.mxu0 0.0
      %2938 = vmatmul.mubr.f32.gmra.mrb[0].mxu0 %v2816
      %v2939 = vpop.f32.mrb[0].mxu0
      %v2940 = vadd.f32 0.0, %v2939
      %v2941 = vpop.f32.mrb[0].mxu0
      %2942 = vmatprep.mubr.f32.mxu0 0.0
      %2943 = vmatmul.mubr.f32.gmra.mrb[0].mxu0 %v2819
      %v2944 = vpop.f32.mrb[0].mxu0
      %v2945 = vadd.f32 0.0, %v2944
      %v2946 = vpop.f32.mrb[0].mxu0
      %2947 = vmatprep.mubr.f32.mxu0 0.0
      %2948 = vmatmul.mubr.f32.gmra.mrb[0].mxu0 %v2822
      %v2949 = vpop.f32.mrb[0].mxu0
      %v2950 = vadd.f32 0.0, %v2949
      %v2951 = vpop.f32.mrb[0].mxu0
      %2952 = vmatprep.mubr.f32.mxu0 0.0
      %2953 = vmatmul.mubr.f32.gmra.mrb[0].mxu0 %v2825
      %v2954 = vpop.f32.mrb[0].mxu0
      %v2955 = vadd.f32 0.0, %v2954
      %v2956 = vpop.f32.mrb[0].mxu0
      %2957 = vmatprep.mubr.f32.mxu0 0.0
      %2958 = vmatmul.mubr.f32.gmra.mrb[0].mxu0 %v2828
      %v2959 = vpop.f32.mrb[0].mxu0
      %v2960 = vadd.f32 0.0, %v2959
      %v2961 = vpop.f32.mrb[0].mxu0
      %2962 = vmatprep.mubr.f32.mxu0 0.0
      %2963 = vmatmul.mubr.f32.gmra.mrb[0].mxu0 %v2831
      %v2964 = vpop.f32.mrb[0].mxu0
      %v2965 = vadd.f32 0.0, %v2964
      %v2966 = vpop.f32.mrb[0].mxu0
      %2967 = vmatprep.mubr.f32.mxu0 0.0
      %2968 = vmatmul.mubr.f32.gmra.mrb[0].mxu0 %v2834
      %v2969 = vpop.f32.mrb[0].mxu0
      %v2970 = vadd.f32 0.0, %v2969
      %v2971 = vpop.f32.mrb[0].mxu0
      %2972 = vmatprep.mubr.f32.mxu0 0.0
      %2973 = vmatmul.mubr.f32.gmra.mrb[0].mxu0 %v2837
      %v2974 = vpop.f32.mrb[0].mxu0
      %v2975 = vadd.f32 0.0, %v2974
      %v2976 = vpop.f32.mrb[0].mxu0
      %2977 = vmatprep.mubr.f32.mxu0 0.0
      %2978 = vmatmul.mubr.f32.gmra.mrb[0].mxu0 %v2840
      %v2979 = vpop.f32.mrb[0].mxu0
      %v2980 = vadd.f32 0.0, %v2979
      %v2981 = vpop.f32.mrb[0].mxu0
      %2982 = vmatprep.mubr.f32.mxu0 0.0
      %2983 = vmatmul.mubr.f32.gmra.mrb[0].mxu0 %v2843
      %v2984 = vpop.f32.mrb[0].mxu0
      %v2985 = vadd.f32 0.0, %v2984
      %v2986 = vpop.f32.mrb[0].mxu0
      %2987 = vmatprep.mubr.f32.mxu0 0.0
      %2988 = vmatmul.mubr.f32.gmra.mrb[0].mxu0 %v2846
      %v2989 = vpop.f32.mrb[0].mxu0
      %v2990 = vadd.f32 0.0, %v2989
      %v2991 = vpop.f32.mrb[0].mxu0
      %2992 = vdwg.mxu0
      %v2993 = vmul.f32 %v2915, %v922
      %v2994 = vmul.f32 %v2920, %v923
      %v2995 = vmul.f32 %v2925, %v924
      %v2996 = vmul.f32 %v2930, %v925
      %v2997 = vmul.f32 %v2935, %v926
      %v2998 = vmul.f32 %v2940, %v927
      %v2999 = vmul.f32 %v2945, %v928
      %v3000 = vmul.f32 %v2950, %v929
      %v3001 = vmul.f32 %v2955, %v930
      %v3002 = vmul.f32 %v2960, %v931
      %v3003 = vmul.f32 %v2965, %v932
      %v3004 = vmul.f32 %v2970, %v933
      %v3005 = vmul.f32 %v2975, %v934
      %v3006 = vmul.f32 %v2980, %v935
      %v3007 = vmul.f32 %v2985, %v936
      %v3008 = vmul.f32 %v2990, %v937
      %3009 = vmatprep.subr.mxu0 0.0
      %3010 = vmatpush1.msra.mxu0 %v2993
      %3011 = vmatprep.subr.mxu0 0.0
      %3012 = vmatpush1.msra.mxu0 %v2994
      %3013 = vmatprep.subr.mxu0 0.0
      %3014 = vmatpush1.msra.mxu0 %v2995
      %3015 = vmatprep.subr.mxu0 0.0
      %3016 = vmatpush1.msra.mxu0 %v2996
      %3017 = vmatprep.subr.mxu0 0.0
      %3018 = vmatpush1.msra.mxu0 %v2997
      %3019 = vmatprep.subr.mxu0 0.0
      %3020 = vmatpush1.msra.mxu0 %v2998
      %3021 = vmatprep.subr.mxu0 0.0
      %3022 = vmatpush1.msra.mxu0 %v2999
      %3023 = vmatprep.subr.mxu0 0.0
      %3024 = vmatpush1.msra.mxu0 %v3000
      %3025 = vmatprep.subr.mxu0 0.0
      %3026 = vmatpush1.msra.mxu0 %v3001
      %3027 = vmatprep.subr.mxu0 0.0
      %3028 = vmatpush1.msra.mxu0 %v3002
      %3029 = vmatprep.subr.mxu0 0.0
      %3030 = vmatpush1.msra.mxu0 %v3003
      %3031 = vmatprep.subr.mxu0 0.0
      %3032 = vmatpush1.msra.mxu0 %v3004
      %3033 = vmatprep.subr.mxu0 0.0
      %3034 = vmatpush1.msra.mxu0 %v3005
      %3035 = vmatprep.subr.mxu0 0.0
      %3036 = vmatpush1.msra.mxu0 %v3006
      %3037 = vmatprep.subr.mxu0 0.0
      %3038 = vmatpush1.msra.mxu0 %v3007
      %3039 = vmatprep.subr.mxu0 0.0
      %3040 = vmatpush1.msra.mxu0 %v3008
      %3041 = vmatprep.subr.mxu0 0.0
      %3042 = vmatpush1.msra.mxu0 0.0
      %3043 = vmatprep.subr.mxu0 0.0
      %3044 = vmatpush1.msra.mxu0 0.0
      %3045 = vmatprep.subr.mxu0 0.0
      %3046 = vmatpush1.msra.mxu0 0.0
      %3047 = vmatprep.subr.mxu0 0.0
      %3048 = vmatpush1.msra.mxu0 0.0
      %3049 = vmatprep.subr.mxu0 0.0
      %3050 = vmatpush1.msra.mxu0 0.0
      %3051 = vmatprep.subr.mxu0 0.0
      %3052 = vmatpush1.msra.mxu0 0.0
      %3053 = vmatprep.subr.mxu0 0.0
      %3054 = vmatpush1.msra.mxu0 0.0
      %3055 = vmatprep.subr.mxu0 0.0
      %3056 = vmatpush1.msra.mxu0 0.0
      %3057 = vmatprep.subr.mxu0 0.0
      %3058 = vmatpush1.msra.mxu0 0.0
      %3059 = vmatprep.subr.mxu0 0.0
      %3060 = vmatpush1.msra.mxu0 0.0
      %3061 = vmatprep.subr.mxu0 0.0
      %3062 = vmatpush1.msra.mxu0 0.0
      %3063 = vmatprep.subr.mxu0 0.0
      %3064 = vmatpush1.msra.mxu0 0.0
      %3065 = vmatprep.subr.mxu0 0.0
      %3066 = vmatpush1.msra.mxu0 0.0
      %3067 = vmatprep.subr.mxu0 0.0
      %3068 = vmatpush1.msra.mxu0 0.0
      %3069 = vmatprep.subr.mxu0 0.0
      %3070 = vmatpush1.msra.mxu0 0.0
      %3071 = vmatprep.subr.mxu0 0.0
      %3072 = vmatpush1.msra.mxu0 0.0
      %3073 = vmatprep.mubr.f32.mxu0 0.0
      %3074 = vmatmul.mubr.f32.gmra.mrb[0].mxu0 %v921
      %v3075 = vpop.f32.mrb[0].mxu0
      %v3076 = vadd.f32 0.0, %v3075
      %v3077 = vpop.f32.mrb[0].mxu0
      %3078 = vdwg.mxu0
      %3079 = vmatprep.subr.mxu0 0.0
      %3080 = vmatpush1.msra.mxu0 %v3076
      %3081 = vmatprep.subr.mxu0 0.0
      %3082 = vmatpush1.msra.mxu0 0.0
      %3083 = vmatprep.subr.mxu0 0.0
      %3084 = vmatpush1.msra.mxu0 0.0
      %3085 = vmatprep.subr.mxu0 0.0
      %3086 = vmatpush1.msra.mxu0 0.0
      %3087 = vmatprep.subr.mxu0 0.0
      %3088 = vmatpush1.msra.mxu0 0.0
      %3089 = vmatprep.subr.mxu0 0.0
      %3090 = vmatpush1.msra.mxu0 0.0
      %3091 = vmatprep.subr.mxu0 0.0
      %3092 = vmatpush1.msra.mxu0 0.0
      %3093 = vmatprep.subr.mxu0 0.0
      %3094 = vmatpush1.msra.mxu0 0.0
      %3095 = vmatprep.subr.mxu0 0.0
      %3096 = vmatpush1.msra.mxu0 0.0
      %3097 = vmatprep.subr.mxu0 0.0
      %3098 = vmatpush1.msra.mxu0 0.0
      %3099 = vmatprep.subr.mxu0 0.0
      %3100 = vmatpush1.msra.mxu0 0.0
      %3101 = vmatprep.subr.mxu0 0.0
      %3102 = vmatpush1.msra.mxu0 0.0
      %3103 = vmatprep.subr.mxu0 0.0
      %3104 = vmatpush1.msra.mxu0 0.0
      %3105 = vmatprep.subr.mxu0 0.0
      %3106 = vmatpush1.msra.mxu0 0.0
      %3107 = vmatprep.subr.mxu0 0.0
      %3108 = vmatpush1.msra.mxu0 0.0
      %3109 = vmatprep.subr.mxu0 0.0
      %3110 = vmatpush1.msra.mxu0 0.0
      %3111 = vmatprep.subr.mxu0 0.0
      %3112 = vmatpush1.msra.mxu0 0.0
      %3113 = vmatprep.subr.mxu0 0.0
      %3114 = vmatpush1.msra.mxu0 0.0
      %3115 = vmatprep.subr.mxu0 0.0
      %3116 = vmatpush1.msra.mxu0 0.0
      %3117 = vmatprep.subr.mxu0 0.0
      %3118 = vmatpush1.msra.mxu0 0.0
      %3119 = vmatprep.subr.mxu0 0.0
      %3120 = vmatpush1.msra.mxu0 0.0
      %3121 = vmatprep.subr.mxu0 0.0
      %3122 = vmatpush1.msra.mxu0 0.0
      %3123 = vmatprep.subr.mxu0 0.0
      %3124 = vmatpush1.msra.mxu0 0.0
      %3125 = vmatprep.subr.mxu0 0.0
      %3126 = vmatpush1.msra.mxu0 0.0
      %3127 = vmatprep.subr.mxu0 0.0
      %3128 = vmatpush1.msra.mxu0 0.0
      %3129 = vmatprep.subr.mxu0 0.0
      %3130 = vmatpush1.msra.mxu0 0.0
      %3131 = vmatprep.subr.mxu0 0.0
      %3132 = vmatpush1.msra.mxu0 0.0
      %3133 = vmatprep.subr.mxu0 0.0
      %3134 = vmatpush1.msra.mxu0 0.0
      %3135 = vmatprep.subr.mxu0 0.0
      %3136 = vmatpush1.msra.mxu0 0.0
      %3137 = vmatprep.subr.mxu0 0.0
      %3138 = vmatpush1.msra.mxu0 0.0
      %3139 = vmatprep.subr.mxu0 0.0
      %3140 = vmatpush1.msra.mxu0 0.0
      %3141 = vmatprep.subr.mxu0 0.0
      %3142 = vmatpush1.msra.mxu0 0.0
      %3143 = vmatprep.mubr.f32.mxu0 0.0
      %3144 = vmatmul.mubr.f32.gmra.mrb[0].mxu0 %v1394
      %v3145 = vpop.f32.mrb[0].mxu0
      %v3146 = vadd.f32 0.0, %v3145
      %v3147 = vpop.f32.mrb[0].mxu0
      %3148 = vmatprep.mubr.f32.mxu0 0.0
      %3149 = vmatmul.mubr.f32.gmra.mrb[0].mxu0 %v1397
      %v3150 = vpop.f32.mrb[0].mxu0
      %v3151 = vadd.f32 0.0, %v3150
      %v3152 = vpop.f32.mrb[0].mxu0
      %3153 = vmatprep.mubr.f32.mxu0 0.0
      %3154 = vmatmul.mubr.f32.gmra.mrb[0].mxu0 %v1400
      %v3155 = vpop.f32.mrb[0].mxu0
      %v3156 = vadd.f32 0.0, %v3155
      %v3157 = vpop.f32.mrb[0].mxu0
      %3158 = vmatprep.mubr.f32.mxu0 0.0
      %3159 = vmatmul.mubr.f32.gmra.mrb[0].mxu0 %v1403
      %v3160 = vpop.f32.mrb[0].mxu0
      %v3161 = vadd.f32 0.0, %v3160
      %v3162 = vpop.f32.mrb[0].mxu0
      %3163 = vmatprep.mubr.f32.mxu0 0.0
      %3164 = vmatmul.mubr.f32.gmra.mrb[0].mxu0 %v1406
      %v3165 = vpop.f32.mrb[0].mxu0
      %v3166 = vadd.f32 0.0, %v3165
      %v3167 = vpop.f32.mrb[0].mxu0
      %3168 = vmatprep.mubr.f32.mxu0 0.0
      %3169 = vmatmul.mubr.f32.gmra.mrb[0].mxu0 %v1409
      %v3170 = vpop.f32.mrb[0].mxu0
      %v3171 = vadd.f32 0.0, %v3170
      %v3172 = vpop.f32.mrb[0].mxu0
      %3173 = vmatprep.mubr.f32.mxu0 0.0
      %3174 = vmatmul.mubr.f32.gmra.mrb[0].mxu0 %v1412
      %v3175 = vpop.f32.mrb[0].mxu0
      %v3176 = vadd.f32 0.0, %v3175
      %v3177 = vpop.f32.mrb[0].mxu0
      %3178 = vmatprep.mubr.f32.mxu0 0.0
      %3179 = vmatmul.mubr.f32.gmra.mrb[0].mxu0 %v1415
      %v3180 = vpop.f32.mrb[0].mxu0
      %v3181 = vadd.f32 0.0, %v3180
      %v3182 = vpop.f32.mrb[0].mxu0
      %3183 = vmatprep.mubr.f32.mxu0 0.0
      %3184 = vmatmul.mubr.f32.gmra.mrb[0].mxu0 %v1418
      %v3185 = vpop.f32.mrb[0].mxu0
      %v3186 = vadd.f32 0.0, %v3185
      %v3187 = vpop.f32.mrb[0].mxu0
      %3188 = vmatprep.mubr.f32.mxu0 0.0
      %3189 = vmatmul.mubr.f32.gmra.mrb[0].mxu0 %v1421
      %v3190 = vpop.f32.mrb[0].mxu0
      %v3191 = vadd.f32 0.0, %v3190
      %v3192 = vpop.f32.mrb[0].mxu0
      %3193 = vmatprep.mubr.f32.mxu0 0.0
      %3194 = vmatmul.mubr.f32.gmra.mrb[0].mxu0 %v1424
      %v3195 = vpop.f32.mrb[0].mxu0
      %v3196 = vadd.f32 0.0, %v3195
      %v3197 = vpop.f32.mrb[0].mxu0
      %3198 = vmatprep.mubr.f32.mxu0 0.0
      %3199 = vmatmul.mubr.f32.gmra.mrb[0].mxu0 %v1427
      %v3200 = vpop.f32.mrb[0].mxu0
      %v3201 = vadd.f32 0.0, %v3200
      %v3202 = vpop.f32.mrb[0].mxu0
      %3203 = vmatprep.mubr.f32.mxu0 0.0
      %3204 = vmatmul.mubr.f32.gmra.mrb[0].mxu0 %v1430
      %v3205 = vpop.f32.mrb[0].mxu0
      %v3206 = vadd.f32 0.0, %v3205
      %v3207 = vpop.f32.mrb[0].mxu0
      %3208 = vmatprep.mubr.f32.mxu0 0.0
      %3209 = vmatmul.mubr.f32.gmra.mrb[0].mxu0 %v1433
      %v3210 = vpop.f32.mrb[0].mxu0
      %v3211 = vadd.f32 0.0, %v3210
      %v3212 = vpop.f32.mrb[0].mxu0
      %3213 = vmatprep.mubr.f32.mxu0 0.0
      %3214 = vmatmul.mubr.f32.gmra.mrb[0].mxu0 %v1436
      %v3215 = vpop.f32.mrb[0].mxu0
      %v3216 = vadd.f32 0.0, %v3215
      %v3217 = vpop.f32.mrb[0].mxu0
      %3218 = vmatprep.mubr.f32.mxu0 0.0
      %3219 = vmatmul.mubr.f32.gmra.mrb[0].mxu0 %v1439
      %v3220 = vpop.f32.mrb[0].mxu0
      %v3221 = vadd.f32 0.0, %v3220
      %v3222 = vpop.f32.mrb[0].mxu0
      %3223 = vdwg.mxu0
      %v3225 = vlaneseq
      %v3226 = vshrl.u32 %v3225, 7
      %v3227 = vsub.s32 0, %v3226
      %v3228 = vrot.slane %v2258, %v3227
      %3230 = vmatprep.subr.mxu0 0.0
      %3231 = vmatpush1.msra.mxu0 %v2242
      %3232 = vmatprep.subr.mxu0 0.0
      %3233 = vmatpush1.msra.mxu0 %v2243
      %3234 = vmatprep.subr.mxu0 0.0
      %3235 = vmatpush1.msra.mxu0 %v2244
      %3236 = vmatprep.subr.mxu0 0.0
      %3237 = vmatpush1.msra.mxu0 %v2245
      %3238 = vmatprep.subr.mxu0 0.0
      %3239 = vmatpush1.msra.mxu0 %v2246
      %3240 = vmatprep.subr.mxu0 0.0
      %3241 = vmatpush1.msra.mxu0 %v2247
      %3242 = vmatprep.subr.mxu0 0.0
      %3243 = vmatpush1.msra.mxu0 %v2248
      %3244 = vmatprep.subr.mxu0 0.0
      %3245 = vmatpush1.msra.mxu0 %v2249
      %3246 = vmatprep.subr.mxu0 0.0
      %3247 = vmatpush1.msra.mxu0 %v2250
      %3248 = vmatprep.subr.mxu0 0.0
      %3249 = vmatpush1.msra.mxu0 %v2251
      %3250 = vmatprep.subr.mxu0 0.0
      %3251 = vmatpush1.msra.mxu0 %v2252
      %3252 = vmatprep.subr.mxu0 0.0
      %3253 = vmatpush1.msra.mxu0 %v2253
      %3254 = vmatprep.subr.mxu0 0.0
      %3255 = vmatpush1.msra.mxu0 %v2254
      %3256 = vmatprep.subr.mxu0 0.0
      %3257 = vmatpush1.msra.mxu0 %v2255
      %3258 = vmatprep.subr.mxu0 0.0
      %3259 = vmatpush1.msra.mxu0 %v2256
      %3260 = vmatprep.subr.mxu0 0.0
      %3261 = vmatpush1.msra.mxu0 %v2257
      %3262 = vmatprep.subr.mxu0 0.0
      %3263 = vmatpush1.msra.mxu0 0.0
      %3264 = vmatprep.subr.mxu0 0.0
      %3265 = vmatpush1.msra.mxu0 0.0
      %3266 = vmatprep.subr.mxu0 0.0
      %3267 = vmatpush1.msra.mxu0 0.0
      %3268 = vmatprep.subr.mxu0 0.0
      %3269 = vmatpush1.msra.mxu0 0.0
      %3270 = vmatprep.subr.mxu0 0.0
      %3271 = vmatpush1.msra.mxu0 0.0
      %3272 = vmatprep.subr.mxu0 0.0
      %3273 = vmatpush1.msra.mxu0 0.0
      %3274 = vmatprep.subr.mxu0 0.0
      %3275 = vmatpush1.msra.mxu0 0.0
      %3276 = vmatprep.subr.mxu0 0.0
      %3277 = vmatpush1.msra.mxu0 0.0
      %3278 = vmatprep.subr.mxu0 0.0
      %3279 = vmatpush1.msra.mxu0 0.0
      %3280 = vmatprep.subr.mxu0 0.0
      %3281 = vmatpush1.msra.mxu0 0.0
      %3282 = vmatprep.subr.mxu0 0.0
      %3283 = vmatpush1.msra.mxu0 0.0
      %3284 = vmatprep.subr.mxu0 0.0
      %3285 = vmatpush1.msra.mxu0 0.0
      %3286 = vmatprep.subr.mxu0 0.0
      %3287 = vmatpush1.msra.mxu0 0.0
      %3288 = vmatprep.subr.mxu0 0.0
      %3289 = vmatpush1.msra.mxu0 0.0
      %3290 = vmatprep.subr.mxu0 0.0
      %3291 = vmatpush1.msra.mxu0 0.0
      %3292 = vmatprep.subr.mxu0 0.0
      %3293 = vmatpush1.msra.mxu0 0.0
      %3294 = vmatprep.mubr.f32.mxu0 0.0
      %3295 = vmatmul.mubr.f32.gmra.mrb[0].mxu0 %v2209
      %v3296 = vpop.f32.mrb[0].mxu0
      %v3297 = vadd.f32 %v3228, %v3296
      %v3298 = vpop.f32.mrb[0].mxu0
      %3299 = vmatprep.mubr.f32.mxu0 0.0
      %3300 = vmatmul.mubr.f32.gmra.mrb[0].mxu0 %v2210
      %v3301 = vpop.f32.mrb[0].mxu0
      %v3302 = vadd.f32 %v3228, %v3301
      %v3303 = vpop.f32.mrb[0].mxu0
      %3304 = vmatprep.mubr.f32.mxu0 0.0
      %3305 = vmatmul.mubr.f32.gmra.mrb[0].mxu0 %v2211
      %v3306 = vpop.f32.mrb[0].mxu0
      %v3307 = vadd.f32 %v3228, %v3306
      %v3308 = vpop.f32.mrb[0].mxu0
      %3309 = vmatprep.mubr.f32.mxu0 0.0
      %3310 = vmatmul.mubr.f32.gmra.mrb[0].mxu0 %v2212
      %v3311 = vpop.f32.mrb[0].mxu0
      %v3312 = vadd.f32 %v3228, %v3311
      %v3313 = vpop.f32.mrb[0].mxu0
      %3314 = vmatprep.mubr.f32.mxu0 0.0
      %3315 = vmatmul.mubr.f32.gmra.mrb[0].mxu0 %v2213
      %v3316 = vpop.f32.mrb[0].mxu0
      %v3317 = vadd.f32 %v3228, %v3316
      %v3318 = vpop.f32.mrb[0].mxu0
      %3319 = vmatprep.mubr.f32.mxu0 0.0
      %3320 = vmatmul.mubr.f32.gmra.mrb[0].mxu0 %v2214
      %v3321 = vpop.f32.mrb[0].mxu0
      %v3322 = vadd.f32 %v3228, %v3321
      %v3323 = vpop.f32.mrb[0].mxu0
      %3324 = vmatprep.mubr.f32.mxu0 0.0
      %3325 = vmatmul.mubr.f32.gmra.mrb[0].mxu0 %v2215
      %v3326 = vpop.f32.mrb[0].mxu0
      %v3327 = vadd.f32 %v3228, %v3326
      %v3328 = vpop.f32.mrb[0].mxu0
      %3329 = vmatprep.mubr.f32.mxu0 0.0
      %3330 = vmatmul.mubr.f32.gmra.mrb[0].mxu0 %v2216
      %v3331 = vpop.f32.mrb[0].mxu0
      %v3332 = vadd.f32 %v3228, %v3331
      %v3333 = vpop.f32.mrb[0].mxu0
      %3334 = vmatprep.mubr.f32.mxu0 0.0
      %3335 = vmatmul.mubr.f32.gmra.mrb[0].mxu0 %v2217
      %v3336 = vpop.f32.mrb[0].mxu0
      %v3337 = vadd.f32 %v3228, %v3336
      %v3338 = vpop.f32.mrb[0].mxu0
      %3339 = vmatprep.mubr.f32.mxu0 0.0
      %3340 = vmatmul.mubr.f32.gmra.mrb[0].mxu0 %v2218
      %v3341 = vpop.f32.mrb[0].mxu0
      %v3342 = vadd.f32 %v3228, %v3341
      %v3343 = vpop.f32.mrb[0].mxu0
      %3344 = vmatprep.mubr.f32.mxu0 0.0
      %3345 = vmatmul.mubr.f32.gmra.mrb[0].mxu0 %v2219
      %v3346 = vpop.f32.mrb[0].mxu0
      %v3347 = vadd.f32 %v3228, %v3346
      %v3348 = vpop.f32.mrb[0].mxu0
      %3349 = vmatprep.mubr.f32.mxu0 0.0
      %3350 = vmatmul.mubr.f32.gmra.mrb[0].mxu0 %v2220
      %v3351 = vpop.f32.mrb[0].mxu0
      %v3352 = vadd.f32 %v3228, %v3351
      %v3353 = vpop.f32.mrb[0].mxu0
      %3354 = vmatprep.mubr.f32.mxu0 0.0
      %3355 = vmatmul.mubr.f32.gmra.mrb[0].mxu0 %v2221
      %v3356 = vpop.f32.mrb[0].mxu0
      %v3357 = vadd.f32 %v3228, %v3356
      %v3358 = vpop.f32.mrb[0].mxu0
      %3359 = vmatprep.mubr.f32.mxu0 0.0
      %3360 = vmatmul.mubr.f32.gmra.mrb[0].mxu0 %v2222
      %v3361 = vpop.f32.mrb[0].mxu0
      %v3362 = vadd.f32 %v3228, %v3361
      %v3363 = vpop.f32.mrb[0].mxu0
      %3364 = vmatprep.mubr.f32.mxu0 0.0
      %3365 = vmatmul.mubr.f32.gmra.mrb[0].mxu0 %v2223
      %v3366 = vpop.f32.mrb[0].mxu0
      %v3367 = vadd.f32 %v3228, %v3366
      %v3368 = vpop.f32.mrb[0].mxu0
      %3369 = vmatprep.mubr.f32.mxu0 0.0
      %3370 = vmatmul.mubr.f32.gmra.mrb[0].mxu0 %v2224
      %v3371 = vpop.f32.mrb[0].mxu0
      %v3372 = vadd.f32 %v3228, %v3371
      %v3373 = vpop.f32.mrb[0].mxu0
      %3374 = vdwg.mxu0
      %v3375 = vadd.f32 %v2915, %v3146
      %v3376 = vadd.f32 %v2920, %v3151
      %v3377 = vadd.f32 %v2925, %v3156
      %v3378 = vadd.f32 %v2930, %v3161
      %v3379 = vadd.f32 %v2935, %v3166
      %v3380 = vadd.f32 %v2940, %v3171
      %v3381 = vadd.f32 %v2945, %v3176
      %v3382 = vadd.f32 %v2950, %v3181
      %v3383 = vadd.f32 %v2955, %v3186
      %v3384 = vadd.f32 %v2960, %v3191
      %v3385 = vadd.f32 %v2965, %v3196
      %v3386 = vadd.f32 %v2970, %v3201
      %v3387 = vadd.f32 %v2975, %v3206
      %v3388 = vadd.f32 %v2980, %v3211
      %v3389 = vadd.f32 %v2985, %v3216
      %v3390 = vadd.f32 %v2990, %v3221
      %v3391 = vadd.f32 %v3375, %v3297
      %v3392 = vadd.f32 %v3376, %v3302
      %v3393 = vadd.f32 %v3377, %v3307
      %v3394 = vadd.f32 %v3378, %v3312
      %v3395 = vadd.f32 %v3379, %v3317
      %v3396 = vadd.f32 %v3380, %v3322
      %v3397 = vadd.f32 %v3381, %v3327
      %v3398 = vadd.f32 %v3382, %v3332
      %v3399 = vadd.f32 %v3383, %v3337
      %v3400 = vadd.f32 %v3384, %v3342
      %v3401 = vadd.f32 %v3385, %v3347
      %v3402 = vadd.f32 %v3386, %v3352
      %v3403 = vadd.f32 %v3387, %v3357
      %v3404 = vadd.f32 %v3388, %v3362
      %v3405 = vadd.f32 %v3389, %v3367
      %v3406 = vadd.f32 %v3390, %v3372
      %v3407 = vmax.f32 %v3391, 0.0
      %v3408 = vmax.f32 %v3392, 0.0
      %v3409 = vmax.f32 %v3393, 0.0
      %v3410 = vmax.f32 %v3394, 0.0
      %v3411 = vmax.f32 %v3395, 0.0
      %v3412 = vmax.f32 %v3396, 0.0
      %v3413 = vmax.f32 %v3397, 0.0
      %v3414 = vmax.f32 %v3398, 0.0
      %v3415 = vmax.f32 %v3399, 0.0
      %v3416 = vmax.f32 %v3400, 0.0
      %v3417 = vmax.f32 %v3401, 0.0
      %v3418 = vmax.f32 %v3402, 0.0
      %v3419 = vmax.f32 %v3403, 0.0
      %v3420 = vmax.f32 %v3404, 0.0
      %v3421 = vmax.f32 %v3405, 0.0
      %v3422 = vmax.f32 %v3406, 0.0
      %v3423 = vld [vmem:[%s35] sm:$0xff]
      %v3424 = vld [vmem:[%s35 + $0x8] sm:$0xff]
      %v3425 = vld [vmem:[%s35 + $0x10] sm:$0xff]
      %v3426 = vld [vmem:[%s35 + $0x18] sm:$0xff]
      %v3427 = vld [vmem:[%s35 + $0x20] sm:$0xff]
      %v3428 = vld [vmem:[%s35 + $0x28] sm:$0xff]
      %v3429 = vld [vmem:[%s35 + $0x30] sm:$0xff]
      %v3430 = vld [vmem:[%s35 + $0x38] sm:$0xff]
      %v3431 = vld [vmem:[%s35 + $0x40] sm:$0xff]
      %v3432 = vld [vmem:[%s35 + $0x48] sm:$0xff]
      %v3433 = vld [vmem:[%s35 + $0x50] sm:$0xff]
      %v3434 = vld [vmem:[%s35 + $0x58] sm:$0xff]
      %v3435 = vld [vmem:[%s35 + $0x60] sm:$0xff]
      %v3436 = vld [vmem:[%s35 + $0x68] sm:$0xff]
      %v3437 = vld [vmem:[%s35 + $0x70] sm:$0xff]
      %v3438 = vld [vmem:[%s35 + $0x78] sm:$0xff]
      %v3439 = vld [vmem:[%s37] sm:$0x1]
      %v3440 = vld [vmem:[%s39] sm:$0xff]
      %v3441 = vld [vmem:[%s39 + $0x8] sm:$0xff]
      %v3442 = vld [vmem:[%s39 + $0x10] sm:$0xff]
      %v3443 = vld [vmem:[%s39 + $0x18] sm:$0xff]
      %v3444 = vld [vmem:[%s39 + $0x20] sm:$0xff]
      %v3445 = vld [vmem:[%s39 + $0x28] sm:$0xff]
      %v3446 = vld [vmem:[%s39 + $0x30] sm:$0xff]
      %v3447 = vld [vmem:[%s39 + $0x38] sm:$0xff]
      %v3448 = vld [vmem:[%s39 + $0x40] sm:$0xff]
      %v3449 = vld [vmem:[%s39 + $0x48] sm:$0xff]
      %v3450 = vld [vmem:[%s39 + $0x50] sm:$0xff]
      %v3451 = vld [vmem:[%s39 + $0x58] sm:$0xff]
      %v3452 = vld [vmem:[%s39 + $0x60] sm:$0xff]
      %v3453 = vld [vmem:[%s39 + $0x68] sm:$0xff]
      %v3454 = vld [vmem:[%s39 + $0x70] sm:$0xff]
      %v3455 = vld [vmem:[%s39 + $0x78] sm:$0xff]
      %v3456 = vld [vmem:[%s41] sm:$0x1]
      %v3457 = vld [vmem:[%s43] sm:$0xff]
      %v3458 = vld [vmem:[%s45] sm:$0x3]
      %v3460 = vlaneseq
      %v3461 = vshrl.u32 %v3460, 7
      %v3462 = vsub.s32 0, %v3461
      %v3463 = vrot.slane %v3439, %v3462
      %3465 = vmatprep.subr.mxu0 0.0
      %3466 = vmatpush1.msra.mxu0 %v3423
      %3467 = vmatprep.subr.mxu0 0.0
      %3468 = vmatpush1.msra.mxu0 %v3424
      %3469 = vmatprep.subr.mxu0 0.0
      %3470 = vmatpush1.msra.mxu0 %v3425
      %3471 = vmatprep.subr.mxu0 0.0
      %3472 = vmatpush1.msra.mxu0 %v3426
      %3473 = vmatprep.subr.mxu0 0.0
      %3474 = vmatpush1.msra.mxu0 %v3427
      %3475 = vmatprep.subr.mxu0 0.0
      %3476 = vmatpush1.msra.mxu0 %v3428
      %3477 = vmatprep.subr.mxu0 0.0
      %3478 = vmatpush1.msra.mxu0 %v3429
      %3479 = vmatprep.subr.mxu0 0.0
      %3480 = vmatpush1.msra.mxu0 %v3430
      %3481 = vmatprep.subr.mxu0 0.0
      %3482 = vmatpush1.msra.mxu0 %v3431
      %3483 = vmatprep.subr.mxu0 0.0
      %3484 = vmatpush1.msra.mxu0 %v3432
      %3485 = vmatprep.subr.mxu0 0.0
      %3486 = vmatpush1.msra.mxu0 %v3433
      %3487 = vmatprep.subr.mxu0 0.0
      %3488 = vmatpush1.msra.mxu0 %v3434
      %3489 = vmatprep.subr.mxu0 0.0
      %3490 = vmatpush1.msra.mxu0 %v3435
      %3491 = vmatprep.subr.mxu0 0.0
      %3492 = vmatpush1.msra.mxu0 %v3436
      %3493 = vmatprep.subr.mxu0 0.0
      %3494 = vmatpush1.msra.mxu0 %v3437
      %3495 = vmatprep.subr.mxu0 0.0
      %3496 = vmatpush1.msra.mxu0 %v3438
      %3497 = vmatprep.subr.mxu0 0.0
      %3498 = vmatpush1.msra.mxu0 0.0
      %3499 = vmatprep.subr.mxu0 0.0
      %3500 = vmatpush1.msra.mxu0 0.0
      %3501 = vmatprep.subr.mxu0 0.0
      %3502 = vmatpush1.msra.mxu0 0.0
      %3503 = vmatprep.subr.mxu0 0.0
      %3504 = vmatpush1.msra.mxu0 0.0
      %3505 = vmatprep.subr.mxu0 0.0
      %3506 = vmatpush1.msra.mxu0 0.0
      %3507 = vmatprep.subr.mxu0 0.0
      %3508 = vmatpush1.msra.mxu0 0.0
      %3509 = vmatprep.subr.mxu0 0.0
      %3510 = vmatpush1.msra.mxu0 0.0
      %3511 = vmatprep.subr.mxu0 0.0
      %3512 = vmatpush1.msra.mxu0 0.0
      %3513 = vmatprep.subr.mxu0 0.0
      %3514 = vmatpush1.msra.mxu0 0.0
      %3515 = vmatprep.subr.mxu0 0.0
      %3516 = vmatpush1.msra.mxu0 0.0
      %3517 = vmatprep.subr.mxu0 0.0
      %3518 = vmatpush1.msra.mxu0 0.0
      %3519 = vmatprep.subr.mxu0 0.0
      %3520 = vmatpush1.msra.mxu0 0.0
      %3521 = vmatprep.subr.mxu0 0.0
      %3522 = vmatpush1.msra.mxu0 0.0
      %3523 = vmatprep.subr.mxu0 0.0
      %3524 = vmatpush1.msra.mxu0 0.0
      %3525 = vmatprep.subr.mxu0 0.0
      %3526 = vmatpush1.msra.mxu0 0.0
      %3527 = vmatprep.subr.mxu0 0.0
      %3528 = vmatpush1.msra.mxu0 0.0
      %3529 = vmatprep.mubr.f32.mxu0 0.0
      %3530 = vmatmul.mubr.f32.gmra.mrb[0].mxu0 %v3407
      %v3531 = vpop.f32.mrb[0].mxu0
      %v3532 = vadd.f32 %v3463, %v3531
      %v3533 = vpop.f32.mrb[0].mxu0
      %3534 = vmatprep.mubr.f32.mxu0 0.0
      %3535 = vmatmul.mubr.f32.gmra.mrb[0].mxu0 %v3408
      %v3536 = vpop.f32.mrb[0].mxu0
      %v3537 = vadd.f32 %v3463, %v3536
      %v3538 = vpop.f32.mrb[0].mxu0
      %3539 = vmatprep.mubr.f32.mxu0 0.0
      %3540 = vmatmul.mubr.f32.gmra.mrb[0].mxu0 %v3409
      %v3541 = vpop.f32.mrb[0].mxu0
      %v3542 = vadd.f32 %v3463, %v3541
      %v3543 = vpop.f32.mrb[0].mxu0
      %3544 = vmatprep.mubr.f32.mxu0 0.0
      %3545 = vmatmul.mubr.f32.gmra.mrb[0].mxu0 %v3410
      %v3546 = vpop.f32.mrb[0].mxu0
      %v3547 = vadd.f32 %v3463, %v3546
      %v3548 = vpop.f32.mrb[0].mxu0
      %3549 = vmatprep.mubr.f32.mxu0 0.0
      %3550 = vmatmul.mubr.f32.gmra.mrb[0].mxu0 %v3411
      %v3551 = vpop.f32.mrb[0].mxu0
      %v3552 = vadd.f32 %v3463, %v3551
      %v3553 = vpop.f32.mrb[0].mxu0
      %3554 = vmatprep.mubr.f32.mxu0 0.0
      %3555 = vmatmul.mubr.f32.gmra.mrb[0].mxu0 %v3412
      %v3556 = vpop.f32.mrb[0].mxu0
      %v3557 = vadd.f32 %v3463, %v3556
      %v3558 = vpop.f32.mrb[0].mxu0
      %3559 = vmatprep.mubr.f32.mxu0 0.0
      %3560 = vmatmul.mubr.f32.gmra.mrb[0].mxu0 %v3413
      %v3561 = vpop.f32.mrb[0].mxu0
      %v3562 = vadd.f32 %v3463, %v3561
      %v3563 = vpop.f32.mrb[0].mxu0
      %3564 = vmatprep.mubr.f32.mxu0 0.0
      %3565 = vmatmul.mubr.f32.gmra.mrb[0].mxu0 %v3414
      %v3566 = vpop.f32.mrb[0].mxu0
      %v3567 = vadd.f32 %v3463, %v3566
      %v3568 = vpop.f32.mrb[0].mxu0
      %3569 = vmatprep.mubr.f32.mxu0 0.0
      %3570 = vmatmul.mubr.f32.gmra.mrb[0].mxu0 %v3415
      %v3571 = vpop.f32.mrb[0].mxu0
      %v3572 = vadd.f32 %v3463, %v3571
      %v3573 = vpop.f32.mrb[0].mxu0
      %3574 = vmatprep.mubr.f32.mxu0 0.0
      %3575 = vmatmul.mubr.f32.gmra.mrb[0].mxu0 %v3416
      %v3576 = vpop.f32.mrb[0].mxu0
      %v3577 = vadd.f32 %v3463, %v3576
      %v3578 = vpop.f32.mrb[0].mxu0
      %3579 = vmatprep.mubr.f32.mxu0 0.0
      %3580 = vmatmul.mubr.f32.gmra.mrb[0].mxu0 %v3417
      %v3581 = vpop.f32.mrb[0].mxu0
      %v3582 = vadd.f32 %v3463, %v3581
      %v3583 = vpop.f32.mrb[0].mxu0
      %3584 = vmatprep.mubr.f32.mxu0 0.0
      %3585 = vmatmul.mubr.f32.gmra.mrb[0].mxu0 %v3418
      %v3586 = vpop.f32.mrb[0].mxu0
      %v3587 = vadd.f32 %v3463, %v3586
      %v3588 = vpop.f32.mrb[0].mxu0
      %3589 = vmatprep.mubr.f32.mxu0 0.0
      %3590 = vmatmul.mubr.f32.gmra.mrb[0].mxu0 %v3419
      %v3591 = vpop.f32.mrb[0].mxu0
      %v3592 = vadd.f32 %v3463, %v3591
      %v3593 = vpop.f32.mrb[0].mxu0
      %3594 = vmatprep.mubr.f32.mxu0 0.0
      %3595 = vmatmul.mubr.f32.gmra.mrb[0].mxu0 %v3420
      %v3596 = vpop.f32.mrb[0].mxu0
      %v3597 = vadd.f32 %v3463, %v3596
      %v3598 = vpop.f32.mrb[0].mxu0
      %3599 = vmatprep.mubr.f32.mxu0 0.0
      %3600 = vmatmul.mubr.f32.gmra.mrb[0].mxu0 %v3421
      %v3601 = vpop.f32.mrb[0].mxu0
      %v3602 = vadd.f32 %v3463, %v3601
      %v3603 = vpop.f32.mrb[0].mxu0
      %3604 = vmatprep.mubr.f32.mxu0 0.0
      %3605 = vmatmul.mubr.f32.gmra.mrb[0].mxu0 %v3422
      %v3606 = vpop.f32.mrb[0].mxu0
      %v3607 = vadd.f32 %v3463, %v3606
      %v3608 = vpop.f32.mrb[0].mxu0
      %3609 = vdwg.mxu0
      %3610 = vmatprep.subr.mxu0 0.0
      %3611 = vmatpush1.msra.mxu0 %v3532
      %3612 = vmatprep.subr.mxu0 0.0
      %3613 = vmatpush1.msra.mxu0 %v3537
      %3614 = vmatprep.subr.mxu0 0.0
      %3615 = vmatpush1.msra.mxu0 %v3542
      %3616 = vmatprep.subr.mxu0 0.0
      %3617 = vmatpush1.msra.mxu0 %v3547
      %3618 = vmatprep.subr.mxu0 0.0
      %3619 = vmatpush1.msra.mxu0 %v3552
      %3620 = vmatprep.subr.mxu0 0.0
      %3621 = vmatpush1.msra.mxu0 %v3557
      %3622 = vmatprep.subr.mxu0 0.0
      %3623 = vmatpush1.msra.mxu0 %v3562
      %3624 = vmatprep.subr.mxu0 0.0
      %3625 = vmatpush1.msra.mxu0 %v3567
      %3626 = vmatprep.subr.mxu0 0.0
      %3627 = vmatpush1.msra.mxu0 %v3572
      %3628 = vmatprep.subr.mxu0 0.0
      %3629 = vmatpush1.msra.mxu0 %v3577
      %3630 = vmatprep.subr.mxu0 0.0
      %3631 = vmatpush1.msra.mxu0 %v3582
      %3632 = vmatprep.subr.mxu0 0.0
      %3633 = vmatpush1.msra.mxu0 %v3587
      %3634 = vmatprep.subr.mxu0 0.0
      %3635 = vmatpush1.msra.mxu0 %v3592
      %3636 = vmatprep.subr.mxu0 0.0
      %3637 = vmatpush1.msra.mxu0 %v3597
      %3638 = vmatprep.subr.mxu0 0.0
      %3639 = vmatpush1.msra.mxu0 %v3602
      %3640 = vmatprep.subr.mxu0 0.0
      %3641 = vmatpush1.msra.mxu0 %v3607
      %3642 = vmatprep.subr.mxu0 0.0
      %3643 = vmatpush1.msra.mxu0 0.0
      %3644 = vmatprep.subr.mxu0 0.0
      %3645 = vmatpush1.msra.mxu0 0.0
      %3646 = vmatprep.subr.mxu0 0.0
      %3647 = vmatpush1.msra.mxu0 0.0
      %3648 = vmatprep.subr.mxu0 0.0
      %3649 = vmatpush1.msra.mxu0 0.0
      %3650 = vmatprep.subr.mxu0 0.0
      %3651 = vmatpush1.msra.mxu0 0.0
      %3652 = vmatprep.subr.mxu0 0.0
      %3653 = vmatpush1.msra.mxu0 0.0
      %3654 = vmatprep.subr.mxu0 0.0
      %3655 = vmatpush1.msra.mxu0 0.0
      %3656 = vmatprep.subr.mxu0 0.0
      %3657 = vmatpush1.msra.mxu0 0.0
      %3658 = vmatprep.subr.mxu0 0.0
      %3659 = vmatpush1.msra.mxu0 0.0
      %3660 = vmatprep.subr.mxu0 0.0
      %3661 = vmatpush1.msra.mxu0 0.0
      %3662 = vmatprep.subr.mxu0 0.0
      %3663 = vmatpush1.msra.mxu0 0.0
      %3664 = vmatprep.subr.mxu0 0.0
      %3665 = vmatpush1.msra.mxu0 0.0
      %3666 = vmatprep.subr.mxu0 0.0
      %3667 = vmatpush1.msra.mxu0 0.0
      %3668 = vmatprep.subr.mxu0 0.0
      %3669 = vmatpush1.msra.mxu0 0.0
      %3670 = vmatprep.subr.mxu0 0.0
      %3671 = vmatpush1.msra.mxu0 0.0
      %3672 = vmatprep.subr.mxu0 0.0
      %3673 = vmatpush1.msra.mxu0 0.0
      %3674 = vmatprep.mubr.f32.mxu0 0.0
      %3675 = vmatmul.mubr.f32.gmra.mrb[0].mxu0 %v921
      %v3676 = vpop.f32.mrb[0].mxu0
      %v3677 = vadd.f32 0.0, %v3676
      %v3678 = vpop.f32.mrb[0].mxu0
      %3679 = vdwg.mxu0
      %v3680 = vmul.f32 %v3677, 0.125
      %v3682 = vsel %vm1234, %v3680, 0
      %3684 = vmatprep.subr.mxu0 0.0
      %3685 = vmatpush1.msra.mxu0 %v3457
      %3686 = vmatprep.subr.mxu0 0.0
      %3687 = vmatpush1.msra.mxu0 0.0
      %3688 = vmatprep.subr.mxu0 0.0
      %3689 = vmatpush1.msra.mxu0 0.0
      %3690 = vmatprep.subr.mxu0 0.0
      %3691 = vmatpush1.msra.mxu0 0.0
      %3692 = vmatprep.subr.mxu0 0.0
      %3693 = vmatpush1.msra.mxu0 0.0
      %3694 = vmatprep.subr.mxu0 0.0
      %3695 = vmatpush1.msra.mxu0 0.0
      %3696 = vmatprep.subr.mxu0 0.0
      %3697 = vmatpush1.msra.mxu0 0.0
      %3698 = vmatprep.subr.mxu0 0.0
      %3699 = vmatpush1.msra.mxu0 0.0
      %3700 = vmatprep.subr.mxu0 0.0
      %3701 = vmatpush1.msra.mxu0 0.0
      %3702 = vmatprep.subr.mxu0 0.0
      %3703 = vmatpush1.msra.mxu0 0.0
      %3704 = vmatprep.subr.mxu0 0.0
      %3705 = vmatpush1.msra.mxu0 0.0
      %3706 = vmatprep.subr.mxu0 0.0
      %3707 = vmatpush1.msra.mxu0 0.0
      %3708 = vmatprep.subr.mxu0 0.0
      %3709 = vmatpush1.msra.mxu0 0.0
      %3710 = vmatprep.subr.mxu0 0.0
      %3711 = vmatpush1.msra.mxu0 0.0
      %3712 = vmatprep.subr.mxu0 0.0
      %3713 = vmatpush1.msra.mxu0 0.0
      %3714 = vmatprep.subr.mxu0 0.0
      %3715 = vmatpush1.msra.mxu0 0.0
      %3716 = vmatprep.subr.mxu0 0.0
      %3717 = vmatpush1.msra.mxu0 0.0
      %3718 = vmatprep.subr.mxu0 0.0
      %3719 = vmatpush1.msra.mxu0 0.0
      %3720 = vmatprep.subr.mxu0 0.0
      %3721 = vmatpush1.msra.mxu0 0.0
      %3722 = vmatprep.subr.mxu0 0.0
      %3723 = vmatpush1.msra.mxu0 0.0
      %3724 = vmatprep.subr.mxu0 0.0
      %3725 = vmatpush1.msra.mxu0 0.0
      %3726 = vmatprep.subr.mxu0 0.0
      %3727 = vmatpush1.msra.mxu0 0.0
      %3728 = vmatprep.subr.mxu0 0.0
      %3729 = vmatpush1.msra.mxu0 0.0
      %3730 = vmatprep.subr.mxu0 0.0
      %3731 = vmatpush1.msra.mxu0 0.0
      %3732 = vmatprep.subr.mxu0 0.0
      %3733 = vmatpush1.msra.mxu0 0.0
      %3734 = vmatprep.subr.mxu0 0.0
      %3735 = vmatpush1.msra.mxu0 0.0
      %3736 = vmatprep.subr.mxu0 0.0
      %3737 = vmatpush1.msra.mxu0 0.0
      %3738 = vmatprep.subr.mxu0 0.0
      %3739 = vmatpush1.msra.mxu0 0.0
      %3740 = vmatprep.subr.mxu0 0.0
      %3741 = vmatpush1.msra.mxu0 0.0
      %3742 = vmatprep.subr.mxu0 0.0
      %3743 = vmatpush1.msra.mxu0 0.0
      %3744 = vmatprep.subr.mxu0 0.0
      %3745 = vmatpush1.msra.mxu0 0.0
      %3746 = vmatprep.subr.mxu0 0.0
      %3747 = vmatpush1.msra.mxu0 0.0
      %3748 = vmatprep.mubr.f32.mxu0 0.0
      %3749 = vmatmul.mubr.f32.gmra.mrb[0].mxu0 %v3682
      %v3750 = vpop.f32.mrb[0].mxu0
      %v3751 = vadd.f32 0.0, %v3750
      %v3752 = vpop.f32.mrb[0].mxu0
      %3753 = vdwg.mxu0
      %v3754 = vmax.f32 %v3751, 0.0
      %v3756 = vsel %vm1309, %v3754, 0
      %v3759 = vsel %vm1313, %v3458, 0
      %3761 = vmatprep.subr.mxu0 0.0
      %3762 = vmatpush1.msra.mxu0 %v3759
      %3763 = vmatprep.subr.mxu0 0.0
      %3764 = vmatpush1.msra.mxu0 0.0
      %3765 = vmatprep.subr.mxu0 0.0
      %3766 = vmatpush1.msra.mxu0 0.0
      %3767 = vmatprep.subr.mxu0 0.0
      %3768 = vmatpush1.msra.mxu0 0.0
      %3769 = vmatprep.subr.mxu0 0.0
      %3770 = vmatpush1.msra.mxu0 0.0
      %3771 = vmatprep.subr.mxu0 0.0
      %3772 = vmatpush1.msra.mxu0 0.0
      %3773 = vmatprep.subr.mxu0 0.0
      %3774 = vmatpush1.msra.mxu0 0.0
      %3775 = vmatprep.subr.mxu0 0.0
      %3776 = vmatpush1.msra.mxu0 0.0
      %3777 = vmatprep.subr.mxu0 0.0
      %3778 = vmatpush1.msra.mxu0 0.0
      %3779 = vmatprep.subr.mxu0 0.0
      %3780 = vmatpush1.msra.mxu0 0.0
      %3781 = vmatprep.subr.mxu0 0.0
      %3782 = vmatpush1.msra.mxu0 0.0
      %3783 = vmatprep.subr.mxu0 0.0
      %3784 = vmatpush1.msra.mxu0 0.0
      %3785 = vmatprep.subr.mxu0 0.0
      %3786 = vmatpush1.msra.mxu0 0.0
      %3787 = vmatprep.subr.mxu0 0.0
      %3788 = vmatpush1.msra.mxu0 0.0
      %3789 = vmatprep.subr.mxu0 0.0
      %3790 = vmatpush1.msra.mxu0 0.0
      %3791 = vmatprep.subr.mxu0 0.0
      %3792 = vmatpush1.msra.mxu0 0.0
      %3793 = vmatprep.subr.mxu0 0.0
      %3794 = vmatpush1.msra.mxu0 0.0
      %3795 = vmatprep.subr.mxu0 0.0
      %3796 = vmatpush1.msra.mxu0 0.0
      %3797 = vmatprep.subr.mxu0 0.0
      %3798 = vmatpush1.msra.mxu0 0.0
      %3799 = vmatprep.subr.mxu0 0.0
      %3800 = vmatpush1.msra.mxu0 0.0
      %3801 = vmatprep.subr.mxu0 0.0
      %3802 = vmatpush1.msra.mxu0 0.0
      %3803 = vmatprep.subr.mxu0 0.0
      %3804 = vmatpush1.msra.mxu0 0.0
      %3805 = vmatprep.subr.mxu0 0.0
      %3806 = vmatpush1.msra.mxu0 0.0
      %3807 = vmatprep.subr.mxu0 0.0
      %3808 = vmatpush1.msra.mxu0 0.0
      %3809 = vmatprep.subr.mxu0 0.0
      %3810 = vmatpush1.msra.mxu0 0.0
      %3811 = vmatprep.subr.mxu0 0.0
      %3812 = vmatpush1.msra.mxu0 0.0
      %3813 = vmatprep.subr.mxu0 0.0
      %3814 = vmatpush1.msra.mxu0 0.0
      %3815 = vmatprep.subr.mxu0 0.0
      %3816 = vmatpush1.msra.mxu0 0.0
      %3817 = vmatprep.subr.mxu0 0.0
      %3818 = vmatpush1.msra.mxu0 0.0
      %3819 = vmatprep.subr.mxu0 0.0
      %3820 = vmatpush1.msra.mxu0 0.0
      %3821 = vmatprep.subr.mxu0 0.0
      %3822 = vmatpush1.msra.mxu0 0.0
      %3823 = vmatprep.subr.mxu0 0.0
      %3824 = vmatpush1.msra.mxu0 0.0
      %3825 = vmatprep.mubr.f32.mxu0 0.0
      %3826 = vmatmul.mubr.f32.gmra.mrb[0].mxu0 %v3756
      %v3827 = vpop.f32.mrb[0].mxu0
      %v3828 = vadd.f32 0.0, %v3827
      %v3829 = vpop.f32.mrb[0].mxu0
      %3830 = vdwg.mxu0
      %v3831 = vxor.u32 %v3828, 2147483648
      %v3832 = vmul.f32 %v3831, 1.442695
      %v3833 = vpow.pop %v3832
      %v3834 = vadd.f32 %v3833, 1.0
      %v3835 = vrcp.pop %v3834
      %v3836 = vmul.f32 1.0, %v3835
      %3837 = vmatprep.subr.mxu0 0.0
      %3838 = vmatpush1.msra.mxu0 %v3836
      %3839 = vmatprep.subr.mxu0 0.0
      %3840 = vmatpush1.msra.mxu0 0.0
      %3841 = vmatprep.subr.mxu0 0.0
      %3842 = vmatpush1.msra.mxu0 0.0
      %3843 = vmatprep.subr.mxu0 0.0
      %3844 = vmatpush1.msra.mxu0 0.0
      %3845 = vmatprep.subr.mxu0 0.0
      %3846 = vmatpush1.msra.mxu0 0.0
      %3847 = vmatprep.subr.mxu0 0.0
      %3848 = vmatpush1.msra.mxu0 0.0
      %3849 = vmatprep.subr.mxu0 0.0
      %3850 = vmatpush1.msra.mxu0 0.0
      %3851 = vmatprep.subr.mxu0 0.0
      %3852 = vmatpush1.msra.mxu0 0.0
      %3853 = vmatprep.subr.mxu0 0.0
      %3854 = vmatpush1.msra.mxu0 0.0
      %3855 = vmatprep.subr.mxu0 0.0
      %3856 = vmatpush1.msra.mxu0 0.0
      %3857 = vmatprep.subr.mxu0 0.0
      %3858 = vmatpush1.msra.mxu0 0.0
      %3859 = vmatprep.subr.mxu0 0.0
      %3860 = vmatpush1.msra.mxu0 0.0
      %3861 = vmatprep.subr.mxu0 0.0
      %3862 = vmatpush1.msra.mxu0 0.0
      %3863 = vmatprep.subr.mxu0 0.0
      %3864 = vmatpush1.msra.mxu0 0.0
      %3865 = vmatprep.subr.mxu0 0.0
      %3866 = vmatpush1.msra.mxu0 0.0
      %3867 = vmatprep.subr.mxu0 0.0
      %3868 = vmatpush1.msra.mxu0 0.0
      %3869 = vmatprep.subr.mxu0 0.0
      %3870 = vmatpush1.msra.mxu0 0.0
      %3871 = vmatprep.subr.mxu0 0.0
      %3872 = vmatpush1.msra.mxu0 0.0
      %3873 = vmatprep.subr.mxu0 0.0
      %3874 = vmatpush1.msra.mxu0 0.0
      %3875 = vmatprep.subr.mxu0 0.0
      %3876 = vmatpush1.msra.mxu0 0.0
      %3877 = vmatprep.subr.mxu0 0.0
      %3878 = vmatpush1.msra.mxu0 0.0
      %3879 = vmatprep.subr.mxu0 0.0
      %3880 = vmatpush1.msra.mxu0 0.0
      %3881 = vmatprep.subr.mxu0 0.0
      %3882 = vmatpush1.msra.mxu0 0.0
      %3883 = vmatprep.subr.mxu0 0.0
      %3884 = vmatpush1.msra.mxu0 0.0
      %3885 = vmatprep.subr.mxu0 0.0
      %3886 = vmatpush1.msra.mxu0 0.0
      %3887 = vmatprep.subr.mxu0 0.0
      %3888 = vmatpush1.msra.mxu0 0.0
      %3889 = vmatprep.subr.mxu0 0.0
      %3890 = vmatpush1.msra.mxu0 0.0
      %3891 = vmatprep.subr.mxu0 0.0
      %3892 = vmatpush1.msra.mxu0 0.0
      %3893 = vmatprep.subr.mxu0 0.0
      %3894 = vmatpush1.msra.mxu0 0.0
      %3895 = vmatprep.subr.mxu0 0.0
      %3896 = vmatpush1.msra.mxu0 0.0
      %3897 = vmatprep.subr.mxu0 0.0
      %3898 = vmatpush1.msra.mxu0 0.0
      %3899 = vmatprep.subr.mxu0 0.0
      %3900 = vmatpush1.msra.mxu0 0.0
      %3901 = vmatprep.mubr.f32.mxu0 0.0
      %3902 = vmatmul.mubr.f32.gmra.mrb[0].mxu0 %v1394
      %v3903 = vpop.f32.mrb[0].mxu0
      %v3904 = vadd.f32 0.0, %v3903
      %v3905 = vpop.f32.mrb[0].mxu0
      %3906 = vmatprep.mubr.f32.mxu0 0.0
      %3907 = vmatmul.mubr.f32.gmra.mrb[0].mxu0 %v1397
      %v3908 = vpop.f32.mrb[0].mxu0
      %v3909 = vadd.f32 0.0, %v3908
      %v3910 = vpop.f32.mrb[0].mxu0
      %3911 = vmatprep.mubr.f32.mxu0 0.0
      %3912 = vmatmul.mubr.f32.gmra.mrb[0].mxu0 %v1400
      %v3913 = vpop.f32.mrb[0].mxu0
      %v3914 = vadd.f32 0.0, %v3913
      %v3915 = vpop.f32.mrb[0].mxu0
      %3916 = vmatprep.mubr.f32.mxu0 0.0
      %3917 = vmatmul.mubr.f32.gmra.mrb[0].mxu0 %v1403
      %v3918 = vpop.f32.mrb[0].mxu0
      %v3919 = vadd.f32 0.0, %v3918
      %v3920 = vpop.f32.mrb[0].mxu0
      %3921 = vmatprep.mubr.f32.mxu0 0.0
      %3922 = vmatmul.mubr.f32.gmra.mrb[0].mxu0 %v1406
      %v3923 = vpop.f32.mrb[0].mxu0
      %v3924 = vadd.f32 0.0, %v3923
      %v3925 = vpop.f32.mrb[0].mxu0
      %3926 = vmatprep.mubr.f32.mxu0 0.0
      %3927 = vmatmul.mubr.f32.gmra.mrb[0].mxu0 %v1409
      %v3928 = vpop.f32.mrb[0].mxu0
      %v3929 = vadd.f32 0.0, %v3928
      %v3930 = vpop.f32.mrb[0].mxu0
      %3931 = vmatprep.mubr.f32.mxu0 0.0
      %3932 = vmatmul.mubr.f32.gmra.mrb[0].mxu0 %v1412
      %v3933 = vpop.f32.mrb[0].mxu0
      %v3934 = vadd.f32 0.0, %v3933
      %v3935 = vpop.f32.mrb[0].mxu0
      %3936 = vmatprep.mubr.f32.mxu0 0.0
      %3937 = vmatmul.mubr.f32.gmra.mrb[0].mxu0 %v1415
      %v3938 = vpop.f32.mrb[0].mxu0
      %v3939 = vadd.f32 0.0, %v3938
      %v3940 = vpop.f32.mrb[0].mxu0
      %3941 = vmatprep.mubr.f32.mxu0 0.0
      %3942 = vmatmul.mubr.f32.gmra.mrb[0].mxu0 %v1418
      %v3943 = vpop.f32.mrb[0].mxu0
      %v3944 = vadd.f32 0.0, %v3943
      %v3945 = vpop.f32.mrb[0].mxu0
      %3946 = vmatprep.mubr.f32.mxu0 0.0
      %3947 = vmatmul.mubr.f32.gmra.mrb[0].mxu0 %v1421
      %v3948 = vpop.f32.mrb[0].mxu0
      %v3949 = vadd.f32 0.0, %v3948
      %v3950 = vpop.f32.mrb[0].mxu0
      %3951 = vmatprep.mubr.f32.mxu0 0.0
      %3952 = vmatmul.mubr.f32.gmra.mrb[0].mxu0 %v1424
      %v3953 = vpop.f32.mrb[0].mxu0
      %v3954 = vadd.f32 0.0, %v3953
      %v3955 = vpop.f32.mrb[0].mxu0
      %3956 = vmatprep.mubr.f32.mxu0 0.0
      %3957 = vmatmul.mubr.f32.gmra.mrb[0].mxu0 %v1427
      %v3958 = vpop.f32.mrb[0].mxu0
      %v3959 = vadd.f32 0.0, %v3958
      %v3960 = vpop.f32.mrb[0].mxu0
      %3961 = vmatprep.mubr.f32.mxu0 0.0
      %3962 = vmatmul.mubr.f32.gmra.mrb[0].mxu0 %v1430
      %v3963 = vpop.f32.mrb[0].mxu0
      %v3964 = vadd.f32 0.0, %v3963
      %v3965 = vpop.f32.mrb[0].mxu0
      %3966 = vmatprep.mubr.f32.mxu0 0.0
      %3967 = vmatmul.mubr.f32.gmra.mrb[0].mxu0 %v1433
      %v3968 = vpop.f32.mrb[0].mxu0
      %v3969 = vadd.f32 0.0, %v3968
      %v3970 = vpop.f32.mrb[0].mxu0
      %3971 = vmatprep.mubr.f32.mxu0 0.0
      %3972 = vmatmul.mubr.f32.gmra.mrb[0].mxu0 %v1436
      %v3973 = vpop.f32.mrb[0].mxu0
      %v3974 = vadd.f32 0.0, %v3973
      %v3975 = vpop.f32.mrb[0].mxu0
      %3976 = vmatprep.mubr.f32.mxu0 0.0
      %3977 = vmatmul.mubr.f32.gmra.mrb[0].mxu0 %v1439
      %v3978 = vpop.f32.mrb[0].mxu0
      %v3979 = vadd.f32 0.0, %v3978
      %v3980 = vpop.f32.mrb[0].mxu0
      %3981 = vdwg.mxu0
      %v3982 = vmul.f32 %v3532, %v3904
      %v3983 = vmul.f32 %v3537, %v3909
      %v3984 = vmul.f32 %v3542, %v3914
      %v3985 = vmul.f32 %v3547, %v3919
      %v3986 = vmul.f32 %v3552, %v3924
      %v3987 = vmul.f32 %v3557, %v3929
      %v3988 = vmul.f32 %v3562, %v3934
      %v3989 = vmul.f32 %v3567, %v3939
      %v3990 = vmul.f32 %v3572, %v3944
      %v3991 = vmul.f32 %v3577, %v3949
      %v3992 = vmul.f32 %v3582, %v3954
      %v3993 = vmul.f32 %v3587, %v3959
      %v3994 = vmul.f32 %v3592, %v3964
      %v3995 = vmul.f32 %v3597, %v3969
      %v3996 = vmul.f32 %v3602, %v3974
      %v3997 = vmul.f32 %v3607, %v3979
      %v3999 = vsel %vm1234, %v3982, 0
      %v4002 = vsel %vm1234, %v3983, 0
      %v4005 = vsel %vm1234, %v3984, 0
      %v4008 = vsel %vm1234, %v3985, 0
      %v4011 = vsel %vm1234, %v3986, 0
      %v4014 = vsel %vm1234, %v3987, 0
      %v4017 = vsel %vm1234, %v3988, 0
      %v4020 = vsel %vm1234, %v3989, 0
      %v4023 = vsel %vm1234, %v3990, 0
      %v4026 = vsel %vm1234, %v3991, 0
      %v4029 = vsel %vm1234, %v3992, 0
      %v4032 = vsel %vm1234, %v3993, 0
      %v4035 = vsel %vm1234, %v3994, 0
      %v4038 = vsel %vm1234, %v3995, 0
      %v4041 = vsel %vm1234, %v3996, 0
      %v4044 = vsel %vm1234, %v3997, 0
      %4046 = vmatprep.subr.mxu0 0.0
      %4047 = vmatpush1.msra.mxu0 %v938
      %4048 = vmatprep.subr.mxu0 0.0
      %4049 = vmatpush1.msra.mxu0 0.0
      %4050 = vmatprep.subr.mxu0 0.0
      %4051 = vmatpush1.msra.mxu0 0.0
      %4052 = vmatprep.subr.mxu0 0.0
      %4053 = vmatpush1.msra.mxu0 0.0
      %4054 = vmatprep.subr.mxu0 0.0
      %4055 = vmatpush1.msra.mxu0 0.0
      %4056 = vmatprep.subr.mxu0 0.0
      %4057 = vmatpush1.msra.mxu0 0.0
      %4058 = vmatprep.subr.mxu0 0.0
      %4059 = vmatpush1.msra.mxu0 0.0
      %4060 = vmatprep.subr.mxu0 0.0
      %4061 = vmatpush1.msra.mxu0 0.0
      %4062 = vmatprep.subr.mxu0 0.0
      %4063 = vmatpush1.msra.mxu0 0.0
      %4064 = vmatprep.subr.mxu0 0.0
      %4065 = vmatpush1.msra.mxu0 0.0
      %4066 = vmatprep.subr.mxu0 0.0
      %4067 = vmatpush1.msra.mxu0 0.0
      %4068 = vmatprep.subr.mxu0 0.0
      %4069 = vmatpush1.msra.mxu0 0.0
      %4070 = vmatprep.subr.mxu0 0.0
      %4071 = vmatpush1.msra.mxu0 0.0
      %4072 = vmatprep.subr.mxu0 0.0
      %4073 = vmatpush1.msra.mxu0 0.0
      %4074 = vmatprep.subr.mxu0 0.0
      %4075 = vmatpush1.msra.mxu0 0.0
      %4076 = vmatprep.subr.mxu0 0.0
      %4077 = vmatpush1.msra.mxu0 0.0
      %4078 = vmatprep.subr.mxu0 0.0
      %4079 = vmatpush1.msra.mxu0 0.0
      %4080 = vmatprep.subr.mxu0 0.0
      %4081 = vmatpush1.msra.mxu0 0.0
      %4082 = vmatprep.subr.mxu0 0.0
      %4083 = vmatpush1.msra.mxu0 0.0
      %4084 = vmatprep.subr.mxu0 0.0
      %4085 = vmatpush1.msra.mxu0 0.0
      %4086 = vmatprep.subr.mxu0 0.0
      %4087 = vmatpush1.msra.mxu0 0.0
      %4088 = vmatprep.subr.mxu0 0.0
      %4089 = vmatpush1.msra.mxu0 0.0
      %4090 = vmatprep.subr.mxu0 0.0
      %4091 = vmatpush1.msra.mxu0 0.0
      %4092 = vmatprep.subr.mxu0 0.0
      %4093 = vmatpush1.msra.mxu0 0.0
      %4094 = vmatprep.subr.mxu0 0.0
      %4095 = vmatpush1.msra.mxu0 0.0
      %4096 = vmatprep.subr.mxu0 0.0
      %4097 = vmatpush1.msra.mxu0 0.0
      %4098 = vmatprep.subr.mxu0 0.0
      %4099 = vmatpush1.msra.mxu0 0.0
      %4100 = vmatprep.subr.mxu0 0.0
      %4101 = vmatpush1.msra.mxu0 0.0
      %4102 = vmatprep.subr.mxu0 0.0
      %4103 = vmatpush1.msra.mxu0 0.0
      %4104 = vmatprep.subr.mxu0 0.0
      %4105 = vmatpush1.msra.mxu0 0.0
      %4106 = vmatprep.subr.mxu0 0.0
      %4107 = vmatpush1.msra.mxu0 0.0
      %4108 = vmatprep.subr.mxu0 0.0
      %4109 = vmatpush1.msra.mxu0 0.0
      %4110 = vmatprep.mubr.f32.mxu0 0.0
      %4111 = vmatmul.mubr.f32.gmra.mrb[0].mxu0 %v3999
      %v4112 = vpop.f32.mrb[0].mxu0
      %v4113 = vadd.f32 0.0, %v4112
      %v4114 = vpop.f32.mrb[0].mxu0
      %4115 = vmatprep.mubr.f32.mxu0 0.0
      %4116 = vmatmul.mubr.f32.gmra.mrb[0].mxu0 %v4002
      %v4117 = vpop.f32.mrb[0].mxu0
      %v4118 = vadd.f32 0.0, %v4117
      %v4119 = vpop.f32.mrb[0].mxu0
      %4120 = vmatprep.mubr.f32.mxu0 0.0
      %4121 = vmatmul.mubr.f32.gmra.mrb[0].mxu0 %v4005
      %v4122 = vpop.f32.mrb[0].mxu0
      %v4123 = vadd.f32 0.0, %v4122
      %v4124 = vpop.f32.mrb[0].mxu0
      %4125 = vmatprep.mubr.f32.mxu0 0.0
      %4126 = vmatmul.mubr.f32.gmra.mrb[0].mxu0 %v4008
      %v4127 = vpop.f32.mrb[0].mxu0
      %v4128 = vadd.f32 0.0, %v4127
      %v4129 = vpop.f32.mrb[0].mxu0
      %4130 = vmatprep.mubr.f32.mxu0 0.0
      %4131 = vmatmul.mubr.f32.gmra.mrb[0].mxu0 %v4011
      %v4132 = vpop.f32.mrb[0].mxu0
      %v4133 = vadd.f32 0.0, %v4132
      %v4134 = vpop.f32.mrb[0].mxu0
      %4135 = vmatprep.mubr.f32.mxu0 0.0
      %4136 = vmatmul.mubr.f32.gmra.mrb[0].mxu0 %v4014
      %v4137 = vpop.f32.mrb[0].mxu0
      %v4138 = vadd.f32 0.0, %v4137
      %v4139 = vpop.f32.mrb[0].mxu0
      %4140 = vmatprep.mubr.f32.mxu0 0.0
      %4141 = vmatmul.mubr.f32.gmra.mrb[0].mxu0 %v4017
      %v4142 = vpop.f32.mrb[0].mxu0
      %v4143 = vadd.f32 0.0, %v4142
      %v4144 = vpop.f32.mrb[0].mxu0
      %4145 = vmatprep.mubr.f32.mxu0 0.0
      %4146 = vmatmul.mubr.f32.gmra.mrb[0].mxu0 %v4020
      %v4147 = vpop.f32.mrb[0].mxu0
      %v4148 = vadd.f32 0.0, %v4147
      %v4149 = vpop.f32.mrb[0].mxu0
      %4150 = vmatprep.mubr.f32.mxu0 0.0
      %4151 = vmatmul.mubr.f32.gmra.mrb[0].mxu0 %v4023
      %v4152 = vpop.f32.mrb[0].mxu0
      %v4153 = vadd.f32 0.0, %v4152
      %v4154 = vpop.f32.mrb[0].mxu0
      %4155 = vmatprep.mubr.f32.mxu0 0.0
      %4156 = vmatmul.mubr.f32.gmra.mrb[0].mxu0 %v4026
      %v4157 = vpop.f32.mrb[0].mxu0
      %v4158 = vadd.f32 0.0, %v4157
      %v4159 = vpop.f32.mrb[0].mxu0
      %4160 = vmatprep.mubr.f32.mxu0 0.0
      %4161 = vmatmul.mubr.f32.gmra.mrb[0].mxu0 %v4029
      %v4162 = vpop.f32.mrb[0].mxu0
      %v4163 = vadd.f32 0.0, %v4162
      %v4164 = vpop.f32.mrb[0].mxu0
      %4165 = vmatprep.mubr.f32.mxu0 0.0
      %4166 = vmatmul.mubr.f32.gmra.mrb[0].mxu0 %v4032
      %v4167 = vpop.f32.mrb[0].mxu0
      %v4168 = vadd.f32 0.0, %v4167
      %v4169 = vpop.f32.mrb[0].mxu0
      %4170 = vmatprep.mubr.f32.mxu0 0.0
      %4171 = vmatmul.mubr.f32.gmra.mrb[0].mxu0 %v4035
      %v4172 = vpop.f32.mrb[0].mxu0
      %v4173 = vadd.f32 0.0, %v4172
      %v4174 = vpop.f32.mrb[0].mxu0
      %4175 = vmatprep.mubr.f32.mxu0 0.0
      %4176 = vmatmul.mubr.f32.gmra.mrb[0].mxu0 %v4038
      %v4177 = vpop.f32.mrb[0].mxu0
      %v4178 = vadd.f32 0.0, %v4177
      %v4179 = vpop.f32.mrb[0].mxu0
      %4180 = vmatprep.mubr.f32.mxu0 0.0
      %4181 = vmatmul.mubr.f32.gmra.mrb[0].mxu0 %v4041
      %v4182 = vpop.f32.mrb[0].mxu0
      %v4183 = vadd.f32 0.0, %v4182
      %v4184 = vpop.f32.mrb[0].mxu0
      %4185 = vmatprep.mubr.f32.mxu0 0.0
      %4186 = vmatmul.mubr.f32.gmra.mrb[0].mxu0 %v4044
      %v4187 = vpop.f32.mrb[0].mxu0
      %v4188 = vadd.f32 0.0, %v4187
      %v4189 = vpop.f32.mrb[0].mxu0
      %4190 = vdwg.mxu0
      %v4191 = vmul.f32 %v4113, %v922
      %v4192 = vmul.f32 %v4118, %v923
      %v4193 = vmul.f32 %v4123, %v924
      %v4194 = vmul.f32 %v4128, %v925
      %v4195 = vmul.f32 %v4133, %v926
      %v4196 = vmul.f32 %v4138, %v927
      %v4197 = vmul.f32 %v4143, %v928
      %v4198 = vmul.f32 %v4148, %v929
      %v4199 = vmul.f32 %v4153, %v930
      %v4200 = vmul.f32 %v4158, %v931
      %v4201 = vmul.f32 %v4163, %v932
      %v4202 = vmul.f32 %v4168, %v933
      %v4203 = vmul.f32 %v4173, %v934
      %v4204 = vmul.f32 %v4178, %v935
      %v4205 = vmul.f32 %v4183, %v936
      %v4206 = vmul.f32 %v4188, %v937
      %4207 = vmatprep.subr.mxu0 0.0
      %4208 = vmatpush1.msra.mxu0 %v4191
      %4209 = vmatprep.subr.mxu0 0.0
      %4210 = vmatpush1.msra.mxu0 %v4192
      %4211 = vmatprep.subr.mxu0 0.0
      %4212 = vmatpush1.msra.mxu0 %v4193
      %4213 = vmatprep.subr.mxu0 0.0
      %4214 = vmatpush1.msra.mxu0 %v4194
      %4215 = vmatprep.subr.mxu0 0.0
      %4216 = vmatpush1.msra.mxu0 %v4195
      %4217 = vmatprep.subr.mxu0 0.0
      %4218 = vmatpush1.msra.mxu0 %v4196
      %4219 = vmatprep.subr.mxu0 0.0
      %4220 = vmatpush1.msra.mxu0 %v4197
      %4221 = vmatprep.subr.mxu0 0.0
      %4222 = vmatpush1.msra.mxu0 %v4198
      %4223 = vmatprep.subr.mxu0 0.0
      %4224 = vmatpush1.msra.mxu0 %v4199
      %4225 = vmatprep.subr.mxu0 0.0
      %4226 = vmatpush1.msra.mxu0 %v4200
      %4227 = vmatprep.subr.mxu0 0.0
      %4228 = vmatpush1.msra.mxu0 %v4201
      %4229 = vmatprep.subr.mxu0 0.0
      %4230 = vmatpush1.msra.mxu0 %v4202
      %4231 = vmatprep.subr.mxu0 0.0
      %4232 = vmatpush1.msra.mxu0 %v4203
      %4233 = vmatprep.subr.mxu0 0.0
      %4234 = vmatpush1.msra.mxu0 %v4204
      %4235 = vmatprep.subr.mxu0 0.0
      %4236 = vmatpush1.msra.mxu0 %v4205
      %4237 = vmatprep.subr.mxu0 0.0
      %4238 = vmatpush1.msra.mxu0 %v4206
      %4239 = vmatprep.subr.mxu0 0.0
      %4240 = vmatpush1.msra.mxu0 0.0
      %4241 = vmatprep.subr.mxu0 0.0
      %4242 = vmatpush1.msra.mxu0 0.0
      %4243 = vmatprep.subr.mxu0 0.0
      %4244 = vmatpush1.msra.mxu0 0.0
      %4245 = vmatprep.subr.mxu0 0.0
      %4246 = vmatpush1.msra.mxu0 0.0
      %4247 = vmatprep.subr.mxu0 0.0
      %4248 = vmatpush1.msra.mxu0 0.0
      %4249 = vmatprep.subr.mxu0 0.0
      %4250 = vmatpush1.msra.mxu0 0.0
      %4251 = vmatprep.subr.mxu0 0.0
      %4252 = vmatpush1.msra.mxu0 0.0
      %4253 = vmatprep.subr.mxu0 0.0
      %4254 = vmatpush1.msra.mxu0 0.0
      %4255 = vmatprep.subr.mxu0 0.0
      %4256 = vmatpush1.msra.mxu0 0.0
      %4257 = vmatprep.subr.mxu0 0.0
      %4258 = vmatpush1.msra.mxu0 0.0
      %4259 = vmatprep.subr.mxu0 0.0
      %4260 = vmatpush1.msra.mxu0 0.0
      %4261 = vmatprep.subr.mxu0 0.0
      %4262 = vmatpush1.msra.mxu0 0.0
      %4263 = vmatprep.subr.mxu0 0.0
      %4264 = vmatpush1.msra.mxu0 0.0
      %4265 = vmatprep.subr.mxu0 0.0
      %4266 = vmatpush1.msra.mxu0 0.0
      %4267 = vmatprep.subr.mxu0 0.0
      %4268 = vmatpush1.msra.mxu0 0.0
      %4269 = vmatprep.subr.mxu0 0.0
      %4270 = vmatpush1.msra.mxu0 0.0
      %4271 = vmatprep.mubr.f32.mxu0 0.0
      %4272 = vmatmul.mubr.f32.gmra.mrb[0].mxu0 %v921
      %v4273 = vpop.f32.mrb[0].mxu0
      %v4274 = vadd.f32 0.0, %v4273
      %v4275 = vpop.f32.mrb[0].mxu0
      %4276 = vdwg.mxu0
      %4277 = vmatprep.subr.mxu0 0.0
      %4278 = vmatpush1.msra.mxu0 %v4274
      %4279 = vmatprep.subr.mxu0 0.0
      %4280 = vmatpush1.msra.mxu0 0.0
      %4281 = vmatprep.subr.mxu0 0.0
      %4282 = vmatpush1.msra.mxu0 0.0
      %4283 = vmatprep.subr.mxu0 0.0
      %4284 = vmatpush1.msra.mxu0 0.0
      %4285 = vmatprep.subr.mxu0 0.0
      %4286 = vmatpush1.msra.mxu0 0.0
      %4287 = vmatprep.subr.mxu0 0.0
      %4288 = vmatpush1.msra.mxu0 0.0
      %4289 = vmatprep.subr.mxu0 0.0
      %4290 = vmatpush1.msra.mxu0 0.0
      %4291 = vmatprep.subr.mxu0 0.0
      %4292 = vmatpush1.msra.mxu0 0.0
      %4293 = vmatprep.subr.mxu0 0.0
      %4294 = vmatpush1.msra.mxu0 0.0
      %4295 = vmatprep.subr.mxu0 0.0
      %4296 = vmatpush1.msra.mxu0 0.0
      %4297 = vmatprep.subr.mxu0 0.0
      %4298 = vmatpush1.msra.mxu0 0.0
      %4299 = vmatprep.subr.mxu0 0.0
      %4300 = vmatpush1.msra.mxu0 0.0
      %4301 = vmatprep.subr.mxu0 0.0
      %4302 = vmatpush1.msra.mxu0 0.0
      %4303 = vmatprep.subr.mxu0 0.0
      %4304 = vmatpush1.msra.mxu0 0.0
      %4305 = vmatprep.subr.mxu0 0.0
      %4306 = vmatpush1.msra.mxu0 0.0
      %4307 = vmatprep.subr.mxu0 0.0
      %4308 = vmatpush1.msra.mxu0 0.0
      %4309 = vmatprep.subr.mxu0 0.0
      %4310 = vmatpush1.msra.mxu0 0.0
      %4311 = vmatprep.subr.mxu0 0.0
      %4312 = vmatpush1.msra.mxu0 0.0
      %4313 = vmatprep.subr.mxu0 0.0
      %4314 = vmatpush1.msra.mxu0 0.0
      %4315 = vmatprep.subr.mxu0 0.0
      %4316 = vmatpush1.msra.mxu0 0.0
      %4317 = vmatprep.subr.mxu0 0.0
      %4318 = vmatpush1.msra.mxu0 0.0
      %4319 = vmatprep.subr.mxu0 0.0
      %4320 = vmatpush1.msra.mxu0 0.0
      %4321 = vmatprep.subr.mxu0 0.0
      %4322 = vmatpush1.msra.mxu0 0.0
      %4323 = vmatprep.subr.mxu0 0.0
      %4324 = vmatpush1.msra.mxu0 0.0
      %4325 = vmatprep.subr.mxu0 0.0
      %4326 = vmatpush1.msra.mxu0 0.0
      %4327 = vmatprep.subr.mxu0 0.0
      %4328 = vmatpush1.msra.mxu0 0.0
      %4329 = vmatprep.subr.mxu0 0.0
      %4330 = vmatpush1.msra.mxu0 0.0
      %4331 = vmatprep.subr.mxu0 0.0
      %4332 = vmatpush1.msra.mxu0 0.0
      %4333 = vmatprep.subr.mxu0 0.0
      %4334 = vmatpush1.msra.mxu0 0.0
      %4335 = vmatprep.subr.mxu0 0.0
      %4336 = vmatpush1.msra.mxu0 0.0
      %4337 = vmatprep.subr.mxu0 0.0
      %4338 = vmatpush1.msra.mxu0 0.0
      %4339 = vmatprep.subr.mxu0 0.0
      %4340 = vmatpush1.msra.mxu0 0.0
      %4341 = vmatprep.mubr.f32.mxu0 0.0
      %4342 = vmatmul.mubr.f32.gmra.mrb[0].mxu0 %v1394
      %v4343 = vpop.f32.mrb[0].mxu0
      %v4344 = vadd.f32 0.0, %v4343
      %v4345 = vpop.f32.mrb[0].mxu0
      %4346 = vmatprep.mubr.f32.mxu0 0.0
      %4347 = vmatmul.mubr.f32.gmra.mrb[0].mxu0 %v1397
      %v4348 = vpop.f32.mrb[0].mxu0
      %v4349 = vadd.f32 0.0, %v4348
      %v4350 = vpop.f32.mrb[0].mxu0
      %4351 = vmatprep.mubr.f32.mxu0 0.0
      %4352 = vmatmul.mubr.f32.gmra.mrb[0].mxu0 %v1400
      %v4353 = vpop.f32.mrb[0].mxu0
      %v4354 = vadd.f32 0.0, %v4353
      %v4355 = vpop.f32.mrb[0].mxu0
      %4356 = vmatprep.mubr.f32.mxu0 0.0
      %4357 = vmatmul.mubr.f32.gmra.mrb[0].mxu0 %v1403
      %v4358 = vpop.f32.mrb[0].mxu0
      %v4359 = vadd.f32 0.0, %v4358
      %v4360 = vpop.f32.mrb[0].mxu0
      %4361 = vmatprep.mubr.f32.mxu0 0.0
      %4362 = vmatmul.mubr.f32.gmra.mrb[0].mxu0 %v1406
      %v4363 = vpop.f32.mrb[0].mxu0
      %v4364 = vadd.f32 0.0, %v4363
      %v4365 = vpop.f32.mrb[0].mxu0
      %4366 = vmatprep.mubr.f32.mxu0 0.0
      %4367 = vmatmul.mubr.f32.gmra.mrb[0].mxu0 %v1409
      %v4368 = vpop.f32.mrb[0].mxu0
      %v4369 = vadd.f32 0.0, %v4368
      %v4370 = vpop.f32.mrb[0].mxu0
      %4371 = vmatprep.mubr.f32.mxu0 0.0
      %4372 = vmatmul.mubr.f32.gmra.mrb[0].mxu0 %v1412
      %v4373 = vpop.f32.mrb[0].mxu0
      %v4374 = vadd.f32 0.0, %v4373
      %v4375 = vpop.f32.mrb[0].mxu0
      %4376 = vmatprep.mubr.f32.mxu0 0.0
      %4377 = vmatmul.mubr.f32.gmra.mrb[0].mxu0 %v1415
      %v4378 = vpop.f32.mrb[0].mxu0
      %v4379 = vadd.f32 0.0, %v4378
      %v4380 = vpop.f32.mrb[0].mxu0
      %4381 = vmatprep.mubr.f32.mxu0 0.0
      %4382 = vmatmul.mubr.f32.gmra.mrb[0].mxu0 %v1418
      %v4383 = vpop.f32.mrb[0].mxu0
      %v4384 = vadd.f32 0.0, %v4383
      %v4385 = vpop.f32.mrb[0].mxu0
      %4386 = vmatprep.mubr.f32.mxu0 0.0
      %4387 = vmatmul.mubr.f32.gmra.mrb[0].mxu0 %v1421
      %v4388 = vpop.f32.mrb[0].mxu0
      %v4389 = vadd.f32 0.0, %v4388
      %v4390 = vpop.f32.mrb[0].mxu0
      %4391 = vmatprep.mubr.f32.mxu0 0.0
      %4392 = vmatmul.mubr.f32.gmra.mrb[0].mxu0 %v1424
      %v4393 = vpop.f32.mrb[0].mxu0
      %v4394 = vadd.f32 0.0, %v4393
      %v4395 = vpop.f32.mrb[0].mxu0
      %4396 = vmatprep.mubr.f32.mxu0 0.0
      %4397 = vmatmul.mubr.f32.gmra.mrb[0].mxu0 %v1427
      %v4398 = vpop.f32.mrb[0].mxu0
      %v4399 = vadd.f32 0.0, %v4398
      %v4400 = vpop.f32.mrb[0].mxu0
      %4401 = vmatprep.mubr.f32.mxu0 0.0
      %4402 = vmatmul.mubr.f32.gmra.mrb[0].mxu0 %v1430
      %v4403 = vpop.f32.mrb[0].mxu0
      %v4404 = vadd.f32 0.0, %v4403
      %v4405 = vpop.f32.mrb[0].mxu0
      %4406 = vmatprep.mubr.f32.mxu0 0.0
      %4407 = vmatmul.mubr.f32.gmra.mrb[0].mxu0 %v1433
      %v4408 = vpop.f32.mrb[0].mxu0
      %v4409 = vadd.f32 0.0, %v4408
      %v4410 = vpop.f32.mrb[0].mxu0
      %4411 = vmatprep.mubr.f32.mxu0 0.0
      %4412 = vmatmul.mubr.f32.gmra.mrb[0].mxu0 %v1436
      %v4413 = vpop.f32.mrb[0].mxu0
      %v4414 = vadd.f32 0.0, %v4413
      %v4415 = vpop.f32.mrb[0].mxu0
      %4416 = vmatprep.mubr.f32.mxu0 0.0
      %4417 = vmatmul.mubr.f32.gmra.mrb[0].mxu0 %v1439
      %v4418 = vpop.f32.mrb[0].mxu0
      %v4419 = vadd.f32 0.0, %v4418
      %v4420 = vpop.f32.mrb[0].mxu0
      %4421 = vdwg.mxu0
      %v4423 = vlaneseq
      %v4424 = vshrl.u32 %v4423, 7
      %v4425 = vsub.s32 0, %v4424
      %v4426 = vrot.slane %v3456, %v4425
      %4428 = vmatprep.subr.mxu0 0.0
      %4429 = vmatpush1.msra.mxu0 %v3440
      %4430 = vmatprep.subr.mxu0 0.0
      %4431 = vmatpush1.msra.mxu0 %v3441
      %4432 = vmatprep.subr.mxu0 0.0
      %4433 = vmatpush1.msra.mxu0 %v3442
      %4434 = vmatprep.subr.mxu0 0.0
      %4435 = vmatpush1.msra.mxu0 %v3443
      %4436 = vmatprep.subr.mxu0 0.0
      %4437 = vmatpush1.msra.mxu0 %v3444
      %4438 = vmatprep.subr.mxu0 0.0
      %4439 = vmatpush1.msra.mxu0 %v3445
      %4440 = vmatprep.subr.mxu0 0.0
      %4441 = vmatpush1.msra.mxu0 %v3446
      %4442 = vmatprep.subr.mxu0 0.0
      %4443 = vmatpush1.msra.mxu0 %v3447
      %4444 = vmatprep.subr.mxu0 0.0
      %4445 = vmatpush1.msra.mxu0 %v3448
      %4446 = vmatprep.subr.mxu0 0.0
      %4447 = vmatpush1.msra.mxu0 %v3449
      %4448 = vmatprep.subr.mxu0 0.0
      %4449 = vmatpush1.msra.mxu0 %v3450
      %4450 = vmatprep.subr.mxu0 0.0
      %4451 = vmatpush1.msra.mxu0 %v3451
      %4452 = vmatprep.subr.mxu0 0.0
      %4453 = vmatpush1.msra.mxu0 %v3452
      %4454 = vmatprep.subr.mxu0 0.0
      %4455 = vmatpush1.msra.mxu0 %v3453
      %4456 = vmatprep.subr.mxu0 0.0
      %4457 = vmatpush1.msra.mxu0 %v3454
      %4458 = vmatprep.subr.mxu0 0.0
      %4459 = vmatpush1.msra.mxu0 %v3455
      %4460 = vmatprep.subr.mxu0 0.0
      %4461 = vmatpush1.msra.mxu0 0.0
      %4462 = vmatprep.subr.mxu0 0.0
      %4463 = vmatpush1.msra.mxu0 0.0
      %4464 = vmatprep.subr.mxu0 0.0
      %4465 = vmatpush1.msra.mxu0 0.0
      %4466 = vmatprep.subr.mxu0 0.0
      %4467 = vmatpush1.msra.mxu0 0.0
      %4468 = vmatprep.subr.mxu0 0.0
      %4469 = vmatpush1.msra.mxu0 0.0
      %4470 = vmatprep.subr.mxu0 0.0
      %4471 = vmatpush1.msra.mxu0 0.0
      %4472 = vmatprep.subr.mxu0 0.0
      %4473 = vmatpush1.msra.mxu0 0.0
      %4474 = vmatprep.subr.mxu0 0.0
      %4475 = vmatpush1.msra.mxu0 0.0
      %4476 = vmatprep.subr.mxu0 0.0
      %4477 = vmatpush1.msra.mxu0 0.0
      %4478 = vmatprep.subr.mxu0 0.0
      %4479 = vmatpush1.msra.mxu0 0.0
      %4480 = vmatprep.subr.mxu0 0.0
      %4481 = vmatpush1.msra.mxu0 0.0
      %4482 = vmatprep.subr.mxu0 0.0
      %4483 = vmatpush1.msra.mxu0 0.0
      %4484 = vmatprep.subr.mxu0 0.0
      %4485 = vmatpush1.msra.mxu0 0.0
      %4486 = vmatprep.subr.mxu0 0.0
      %4487 = vmatpush1.msra.mxu0 0.0
      %4488 = vmatprep.subr.mxu0 0.0
      %4489 = vmatpush1.msra.mxu0 0.0
      %4490 = vmatprep.subr.mxu0 0.0
      %4491 = vmatpush1.msra.mxu0 0.0
      %4492 = vmatprep.mubr.f32.mxu0 0.0
      %4493 = vmatmul.mubr.f32.gmra.mrb[0].mxu0 %v3407
      %v4494 = vpop.f32.mrb[0].mxu0
      %v4495 = vadd.f32 %v4426, %v4494
      %v4496 = vpop.f32.mrb[0].mxu0
      %4497 = vmatprep.mubr.f32.mxu0 0.0
      %4498 = vmatmul.mubr.f32.gmra.mrb[0].mxu0 %v3408
      %v4499 = vpop.f32.mrb[0].mxu0
      %v4500 = vadd.f32 %v4426, %v4499
      %v4501 = vpop.f32.mrb[0].mxu0
      %4502 = vmatprep.mubr.f32.mxu0 0.0
      %4503 = vmatmul.mubr.f32.gmra.mrb[0].mxu0 %v3409
      %v4504 = vpop.f32.mrb[0].mxu0
      %v4505 = vadd.f32 %v4426, %v4504
      %v4506 = vpop.f32.mrb[0].mxu0
      %4507 = vmatprep.mubr.f32.mxu0 0.0
      %4508 = vmatmul.mubr.f32.gmra.mrb[0].mxu0 %v3410
      %v4509 = vpop.f32.mrb[0].mxu0
      %v4510 = vadd.f32 %v4426, %v4509
      %v4511 = vpop.f32.mrb[0].mxu0
      %4512 = vmatprep.mubr.f32.mxu0 0.0
      %4513 = vmatmul.mubr.f32.gmra.mrb[0].mxu0 %v3411
      %v4514 = vpop.f32.mrb[0].mxu0
      %v4515 = vadd.f32 %v4426, %v4514
      %v4516 = vpop.f32.mrb[0].mxu0
      %4517 = vmatprep.mubr.f32.mxu0 0.0
      %4518 = vmatmul.mubr.f32.gmra.mrb[0].mxu0 %v3412
      %v4519 = vpop.f32.mrb[0].mxu0
      %v4520 = vadd.f32 %v4426, %v4519
      %v4521 = vpop.f32.mrb[0].mxu0
      %4522 = vmatprep.mubr.f32.mxu0 0.0
      %4523 = vmatmul.mubr.f32.gmra.mrb[0].mxu0 %v3413
      %v4524 = vpop.f32.mrb[0].mxu0
      %v4525 = vadd.f32 %v4426, %v4524
      %v4526 = vpop.f32.mrb[0].mxu0
      %4527 = vmatprep.mubr.f32.mxu0 0.0
      %4528 = vmatmul.mubr.f32.gmra.mrb[0].mxu0 %v3414
      %v4529 = vpop.f32.mrb[0].mxu0
      %v4530 = vadd.f32 %v4426, %v4529
      %v4531 = vpop.f32.mrb[0].mxu0
      %4532 = vmatprep.mubr.f32.mxu0 0.0
      %4533 = vmatmul.mubr.f32.gmra.mrb[0].mxu0 %v3415
      %v4534 = vpop.f32.mrb[0].mxu0
      %v4535 = vadd.f32 %v4426, %v4534
      %v4536 = vpop.f32.mrb[0].mxu0
      %4537 = vmatprep.mubr.f32.mxu0 0.0
      %4538 = vmatmul.mubr.f32.gmra.mrb[0].mxu0 %v3416
      %v4539 = vpop.f32.mrb[0].mxu0
      %v4540 = vadd.f32 %v4426, %v4539
      %v4541 = vpop.f32.mrb[0].mxu0
      %4542 = vmatprep.mubr.f32.mxu0 0.0
      %4543 = vmatmul.mubr.f32.gmra.mrb[0].mxu0 %v3417
      %v4544 = vpop.f32.mrb[0].mxu0
      %v4545 = vadd.f32 %v4426, %v4544
      %v4546 = vpop.f32.mrb[0].mxu0
      %4547 = vmatprep.mubr.f32.mxu0 0.0
      %4548 = vmatmul.mubr.f32.gmra.mrb[0].mxu0 %v3418
      %v4549 = vpop.f32.mrb[0].mxu0
      %v4550 = vadd.f32 %v4426, %v4549
      %v4551 = vpop.f32.mrb[0].mxu0
      %4552 = vmatprep.mubr.f32.mxu0 0.0
      %4553 = vmatmul.mubr.f32.gmra.mrb[0].mxu0 %v3419
      %v4554 = vpop.f32.mrb[0].mxu0
      %v4555 = vadd.f32 %v4426, %v4554
      %v4556 = vpop.f32.mrb[0].mxu0
      %4557 = vmatprep.mubr.f32.mxu0 0.0
      %4558 = vmatmul.mubr.f32.gmra.mrb[0].mxu0 %v3420
      %v4559 = vpop.f32.mrb[0].mxu0
      %v4560 = vadd.f32 %v4426, %v4559
      %v4561 = vpop.f32.mrb[0].mxu0
      %4562 = vmatprep.mubr.f32.mxu0 0.0
      %4563 = vmatmul.mubr.f32.gmra.mrb[0].mxu0 %v3421
      %v4564 = vpop.f32.mrb[0].mxu0
      %v4565 = vadd.f32 %v4426, %v4564
      %v4566 = vpop.f32.mrb[0].mxu0
      %4567 = vmatprep.mubr.f32.mxu0 0.0
      %4568 = vmatmul.mubr.f32.gmra.mrb[0].mxu0 %v3422
      %v4569 = vpop.f32.mrb[0].mxu0
      %v4570 = vadd.f32 %v4426, %v4569
      %v4571 = vpop.f32.mrb[0].mxu0
      %4572 = vdwg.mxu0
      %v4573 = vadd.f32 %v4113, %v4344
      %v4574 = vadd.f32 %v4118, %v4349
      %v4575 = vadd.f32 %v4123, %v4354
      %v4576 = vadd.f32 %v4128, %v4359
      %v4577 = vadd.f32 %v4133, %v4364
      %v4578 = vadd.f32 %v4138, %v4369
      %v4579 = vadd.f32 %v4143, %v4374
      %v4580 = vadd.f32 %v4148, %v4379
      %v4581 = vadd.f32 %v4153, %v4384
      %v4582 = vadd.f32 %v4158, %v4389
      %v4583 = vadd.f32 %v4163, %v4394
      %v4584 = vadd.f32 %v4168, %v4399
      %v4585 = vadd.f32 %v4173, %v4404
      %v4586 = vadd.f32 %v4178, %v4409
      %v4587 = vadd.f32 %v4183, %v4414
      %v4588 = vadd.f32 %v4188, %v4419
      %v4589 = vadd.f32 %v4573, %v4495
      %v4590 = vadd.f32 %v4574, %v4500
      %v4591 = vadd.f32 %v4575, %v4505
      %v4592 = vadd.f32 %v4576, %v4510
      %v4593 = vadd.f32 %v4577, %v4515
      %v4594 = vadd.f32 %v4578, %v4520
      %v4595 = vadd.f32 %v4579, %v4525
      %v4596 = vadd.f32 %v4580, %v4530
      %v4597 = vadd.f32 %v4581, %v4535
      %v4598 = vadd.f32 %v4582, %v4540
      %v4599 = vadd.f32 %v4583, %v4545
      %v4600 = vadd.f32 %v4584, %v4550
      %v4601 = vadd.f32 %v4585, %v4555
      %v4602 = vadd.f32 %v4586, %v4560
      %v4603 = vadd.f32 %v4587, %v4565
      %v4604 = vadd.f32 %v4588, %v4570
      %v4605 = vmax.f32 %v4589, 0.0
      %v4606 = vmax.f32 %v4590, 0.0
      %v4607 = vmax.f32 %v4591, 0.0
      %v4608 = vmax.f32 %v4592, 0.0
      %v4609 = vmax.f32 %v4593, 0.0
      %v4610 = vmax.f32 %v4594, 0.0
      %v4611 = vmax.f32 %v4595, 0.0
      %v4612 = vmax.f32 %v4596, 0.0
      %v4613 = vmax.f32 %v4597, 0.0
      %v4614 = vmax.f32 %v4598, 0.0
      %v4615 = vmax.f32 %v4599, 0.0
      %v4616 = vmax.f32 %v4600, 0.0
      %v4617 = vmax.f32 %v4601, 0.0
      %v4618 = vmax.f32 %v4602, 0.0
      %v4619 = vmax.f32 %v4603, 0.0
      %v4620 = vmax.f32 %v4604, 0.0
      %v4621 = vld [vmem:[%s47] sm:$0xff]
      %v4622 = vld [vmem:[%s47 + $0x8] sm:$0xff]
      %v4623 = vld [vmem:[%s47 + $0x10] sm:$0xff]
      %v4624 = vld [vmem:[%s47 + $0x18] sm:$0xff]
      %v4625 = vld [vmem:[%s47 + $0x20] sm:$0xff]
      %v4626 = vld [vmem:[%s47 + $0x28] sm:$0xff]
      %v4627 = vld [vmem:[%s47 + $0x30] sm:$0xff]
      %v4628 = vld [vmem:[%s47 + $0x38] sm:$0xff]
      %v4629 = vld [vmem:[%s47 + $0x40] sm:$0xff]
      %v4630 = vld [vmem:[%s47 + $0x48] sm:$0xff]
      %v4631 = vld [vmem:[%s47 + $0x50] sm:$0xff]
      %v4632 = vld [vmem:[%s47 + $0x58] sm:$0xff]
      %v4633 = vld [vmem:[%s47 + $0x60] sm:$0xff]
      %v4634 = vld [vmem:[%s47 + $0x68] sm:$0xff]
      %v4635 = vld [vmem:[%s47 + $0x70] sm:$0xff]
      %v4636 = vld [vmem:[%s47 + $0x78] sm:$0xff]
      %v4637 = vld [vmem:[%s49] sm:$0x1]
      %v4639 = vlaneseq
      %v4640 = vshrl.u32 %v4639, 7
      %v4641 = vsub.s32 0, %v4640
      %v4642 = vrot.slane %v4637, %v4641
      %4644 = vmatprep.subr.mxu0 0.0
      %4645 = vmatpush1.msra.mxu0 %v4621
      %4646 = vmatprep.subr.mxu0 0.0
      %4647 = vmatpush1.msra.mxu0 %v4622
      %4648 = vmatprep.subr.mxu0 0.0
      %4649 = vmatpush1.msra.mxu0 %v4623
      %4650 = vmatprep.subr.mxu0 0.0
      %4651 = vmatpush1.msra.mxu0 %v4624
      %4652 = vmatprep.subr.mxu0 0.0
      %4653 = vmatpush1.msra.mxu0 %v4625
      %4654 = vmatprep.subr.mxu0 0.0
      %4655 = vmatpush1.msra.mxu0 %v4626
      %4656 = vmatprep.subr.mxu0 0.0
      %4657 = vmatpush1.msra.mxu0 %v4627
      %4658 = vmatprep.subr.mxu0 0.0
      %4659 = vmatpush1.msra.mxu0 %v4628
      %4660 = vmatprep.subr.mxu0 0.0
      %4661 = vmatpush1.msra.mxu0 %v4629
      %4662 = vmatprep.subr.mxu0 0.0
      %4663 = vmatpush1.msra.mxu0 %v4630
      %4664 = vmatprep.subr.mxu0 0.0
      %4665 = vmatpush1.msra.mxu0 %v4631
      %4666 = vmatprep.subr.mxu0 0.0
      %4667 = vmatpush1.msra.mxu0 %v4632
      %4668 = vmatprep.subr.mxu0 0.0
      %4669 = vmatpush1.msra.mxu0 %v4633
      %4670 = vmatprep.subr.mxu0 0.0
      %4671 = vmatpush1.msra.mxu0 %v4634
      %4672 = vmatprep.subr.mxu0 0.0
      %4673 = vmatpush1.msra.mxu0 %v4635
      %4674 = vmatprep.subr.mxu0 0.0
      %4675 = vmatpush1.msra.mxu0 %v4636
      %4676 = vmatprep.subr.mxu0 0.0
      %4677 = vmatpush1.msra.mxu0 0.0
      %4678 = vmatprep.subr.mxu0 0.0
      %4679 = vmatpush1.msra.mxu0 0.0
      %4680 = vmatprep.subr.mxu0 0.0
      %4681 = vmatpush1.msra.mxu0 0.0
      %4682 = vmatprep.subr.mxu0 0.0
      %4683 = vmatpush1.msra.mxu0 0.0
      %4684 = vmatprep.subr.mxu0 0.0
      %4685 = vmatpush1.msra.mxu0 0.0
      %4686 = vmatprep.subr.mxu0 0.0
      %4687 = vmatpush1.msra.mxu0 0.0
      %4688 = vmatprep.subr.mxu0 0.0
      %4689 = vmatpush1.msra.mxu0 0.0
      %4690 = vmatprep.subr.mxu0 0.0
      %4691 = vmatpush1.msra.mxu0 0.0
      %4692 = vmatprep.subr.mxu0 0.0
      %4693 = vmatpush1.msra.mxu0 0.0
      %4694 = vmatprep.subr.mxu0 0.0
      %4695 = vmatpush1.msra.mxu0 0.0
      %4696 = vmatprep.subr.mxu0 0.0
      %4697 = vmatpush1.msra.mxu0 0.0
      %4698 = vmatprep.subr.mxu0 0.0
      %4699 = vmatpush1.msra.mxu0 0.0
      %4700 = vmatprep.subr.mxu0 0.0
      %4701 = vmatpush1.msra.mxu0 0.0
      %4702 = vmatprep.subr.mxu0 0.0
      %4703 = vmatpush1.msra.mxu0 0.0
      %4704 = vmatprep.subr.mxu0 0.0
      %4705 = vmatpush1.msra.mxu0 0.0
      %4706 = vmatprep.subr.mxu0 0.0
      %4707 = vmatpush1.msra.mxu0 0.0
      %4708 = vmatprep.mubr.f32.mxu0 0.0
      %4709 = vmatmul.mubr.f32.gmra.mrb[0].mxu0 %v4605
      %v4710 = vpop.f32.mrb[0].mxu0
      %v4711 = vadd.f32 %v4642, %v4710
      %v4712 = vpop.f32.mrb[0].mxu0
      %4713 = vmatprep.mubr.f32.mxu0 0.0
      %4714 = vmatmul.mubr.f32.gmra.mrb[0].mxu0 %v4606
      %v4715 = vpop.f32.mrb[0].mxu0
      %v4716 = vadd.f32 %v4642, %v4715
      %v4717 = vpop.f32.mrb[0].mxu0
      %4718 = vmatprep.mubr.f32.mxu0 0.0
      %4719 = vmatmul.mubr.f32.gmra.mrb[0].mxu0 %v4607
      %v4720 = vpop.f32.mrb[0].mxu0
      %v4721 = vadd.f32 %v4642, %v4720
      %v4722 = vpop.f32.mrb[0].mxu0
      %4723 = vmatprep.mubr.f32.mxu0 0.0
      %4724 = vmatmul.mubr.f32.gmra.mrb[0].mxu0 %v4608
      %v4725 = vpop.f32.mrb[0].mxu0
      %v4726 = vadd.f32 %v4642, %v4725
      %v4727 = vpop.f32.mrb[0].mxu0
      %4728 = vmatprep.mubr.f32.mxu0 0.0
      %4729 = vmatmul.mubr.f32.gmra.mrb[0].mxu0 %v4609
      %v4730 = vpop.f32.mrb[0].mxu0
      %v4731 = vadd.f32 %v4642, %v4730
      %v4732 = vpop.f32.mrb[0].mxu0
      %4733 = vmatprep.mubr.f32.mxu0 0.0
      %4734 = vmatmul.mubr.f32.gmra.mrb[0].mxu0 %v4610
      %v4735 = vpop.f32.mrb[0].mxu0
      %v4736 = vadd.f32 %v4642, %v4735
      %v4737 = vpop.f32.mrb[0].mxu0
      %4738 = vmatprep.mubr.f32.mxu0 0.0
      %4739 = vmatmul.mubr.f32.gmra.mrb[0].mxu0 %v4611
      %v4740 = vpop.f32.mrb[0].mxu0
      %v4741 = vadd.f32 %v4642, %v4740
      %v4742 = vpop.f32.mrb[0].mxu0
      %4743 = vmatprep.mubr.f32.mxu0 0.0
      %4744 = vmatmul.mubr.f32.gmra.mrb[0].mxu0 %v4612
      %v4745 = vpop.f32.mrb[0].mxu0
      %v4746 = vadd.f32 %v4642, %v4745
      %v4747 = vpop.f32.mrb[0].mxu0
      %4748 = vmatprep.mubr.f32.mxu0 0.0
      %4749 = vmatmul.mubr.f32.gmra.mrb[0].mxu0 %v4613
      %v4750 = vpop.f32.mrb[0].mxu0
      %v4751 = vadd.f32 %v4642, %v4750
      %v4752 = vpop.f32.mrb[0].mxu0
      %4753 = vmatprep.mubr.f32.mxu0 0.0
      %4754 = vmatmul.mubr.f32.gmra.mrb[0].mxu0 %v4614
      %v4755 = vpop.f32.mrb[0].mxu0
      %v4756 = vadd.f32 %v4642, %v4755
      %v4757 = vpop.f32.mrb[0].mxu0
      %4758 = vmatprep.mubr.f32.mxu0 0.0
      %4759 = vmatmul.mubr.f32.gmra.mrb[0].mxu0 %v4615
      %v4760 = vpop.f32.mrb[0].mxu0
      %v4761 = vadd.f32 %v4642, %v4760
      %v4762 = vpop.f32.mrb[0].mxu0
      %4763 = vmatprep.mubr.f32.mxu0 0.0
      %4764 = vmatmul.mubr.f32.gmra.mrb[0].mxu0 %v4616
      %v4765 = vpop.f32.mrb[0].mxu0
      %v4766 = vadd.f32 %v4642, %v4765
      %v4767 = vpop.f32.mrb[0].mxu0
      %4768 = vmatprep.mubr.f32.mxu0 0.0
      %4769 = vmatmul.mubr.f32.gmra.mrb[0].mxu0 %v4617
      %v4770 = vpop.f32.mrb[0].mxu0
      %v4771 = vadd.f32 %v4642, %v4770
      %v4772 = vpop.f32.mrb[0].mxu0
      %4773 = vmatprep.mubr.f32.mxu0 0.0
      %4774 = vmatmul.mubr.f32.gmra.mrb[0].mxu0 %v4618
      %v4775 = vpop.f32.mrb[0].mxu0
      %v4776 = vadd.f32 %v4642, %v4775
      %v4777 = vpop.f32.mrb[0].mxu0
      %4778 = vmatprep.mubr.f32.mxu0 0.0
      %4779 = vmatmul.mubr.f32.gmra.mrb[0].mxu0 %v4619
      %v4780 = vpop.f32.mrb[0].mxu0
      %v4781 = vadd.f32 %v4642, %v4780
      %v4782 = vpop.f32.mrb[0].mxu0
      %4783 = vmatprep.mubr.f32.mxu0 0.0
      %4784 = vmatmul.mubr.f32.gmra.mrb[0].mxu0 %v4620
      %v4785 = vpop.f32.mrb[0].mxu0
      %v4786 = vadd.f32 %v4642, %v4785
      %v4787 = vpop.f32.mrb[0].mxu0
      %4788 = vdwg.mxu0
      %v4789 = vmax.f32 %v4711, 0.0
      %v4790 = vmax.f32 %v4716, 0.0
      %v4791 = vmax.f32 %v4721, 0.0
      %v4792 = vmax.f32 %v4726, 0.0
      %v4793 = vmax.f32 %v4731, 0.0
      %v4794 = vmax.f32 %v4736, 0.0
      %v4795 = vmax.f32 %v4741, 0.0
      %v4796 = vmax.f32 %v4746, 0.0
      %v4797 = vmax.f32 %v4751, 0.0
      %v4798 = vmax.f32 %v4756, 0.0
      %v4799 = vmax.f32 %v4761, 0.0
      %v4800 = vmax.f32 %v4766, 0.0
      %v4801 = vmax.f32 %v4771, 0.0
      %v4802 = vmax.f32 %v4776, 0.0
      %v4803 = vmax.f32 %v4781, 0.0
      %v4804 = vmax.f32 %v4786, 0.0
      %v4806 = vsel %vm1234, %v4789, 0
      %v4809 = vsel %vm1234, %v4790, 0
      %v4812 = vsel %vm1234, %v4791, 0
      %v4815 = vsel %vm1234, %v4792, 0
      %v4818 = vsel %vm1234, %v4793, 0
      %v4821 = vsel %vm1234, %v4794, 0
      %v4824 = vsel %vm1234, %v4795, 0
      %v4827 = vsel %vm1234, %v4796, 0
      %v4830 = vsel %vm1234, %v4797, 0
      %v4833 = vsel %vm1234, %v4798, 0
      %v4836 = vsel %vm1234, %v4799, 0
      %v4839 = vsel %vm1234, %v4800, 0
      %v4842 = vsel %vm1234, %v4801, 0
      %v4845 = vsel %vm1234, %v4802, 0
      %v4848 = vsel %vm1234, %v4803, 0
      %v4851 = vsel %vm1234, %v4804, 0
      %4853 = vmatprep.subr.mxu0 0.0
      %4854 = vmatpush1.msra.mxu0 %v938
      %4855 = vmatprep.subr.mxu0 0.0
      %4856 = vmatpush1.msra.mxu0 0.0
      %4857 = vmatprep.subr.mxu0 0.0
      %4858 = vmatpush1.msra.mxu0 0.0
      %4859 = vmatprep.subr.mxu0 0.0
      %4860 = vmatpush1.msra.mxu0 0.0
      %4861 = vmatprep.subr.mxu0 0.0
      %4862 = vmatpush1.msra.mxu0 0.0
      %4863 = vmatprep.subr.mxu0 0.0
      %4864 = vmatpush1.msra.mxu0 0.0
      %4865 = vmatprep.subr.mxu0 0.0
      %4866 = vmatpush1.msra.mxu0 0.0
      %4867 = vmatprep.subr.mxu0 0.0
      %4868 = vmatpush1.msra.mxu0 0.0
      %4869 = vmatprep.subr.mxu0 0.0
      %4870 = vmatpush1.msra.mxu0 0.0
      %4871 = vmatprep.subr.mxu0 0.0
      %4872 = vmatpush1.msra.mxu0 0.0
      %4873 = vmatprep.subr.mxu0 0.0
      %4874 = vmatpush1.msra.mxu0 0.0
      %4875 = vmatprep.subr.mxu0 0.0
      %4876 = vmatpush1.msra.mxu0 0.0
      %4877 = vmatprep.subr.mxu0 0.0
      %4878 = vmatpush1.msra.mxu0 0.0
      %4879 = vmatprep.subr.mxu0 0.0
      %4880 = vmatpush1.msra.mxu0 0.0
      %4881 = vmatprep.subr.mxu0 0.0
      %4882 = vmatpush1.msra.mxu0 0.0
      %4883 = vmatprep.subr.mxu0 0.0
      %4884 = vmatpush1.msra.mxu0 0.0
      %4885 = vmatprep.subr.mxu0 0.0
      %4886 = vmatpush1.msra.mxu0 0.0
      %4887 = vmatprep.subr.mxu0 0.0
      %4888 = vmatpush1.msra.mxu0 0.0
      %4889 = vmatprep.subr.mxu0 0.0
      %4890 = vmatpush1.msra.mxu0 0.0
      %4891 = vmatprep.subr.mxu0 0.0
      %4892 = vmatpush1.msra.mxu0 0.0
      %4893 = vmatprep.subr.mxu0 0.0
      %4894 = vmatpush1.msra.mxu0 0.0
      %4895 = vmatprep.subr.mxu0 0.0
      %4896 = vmatpush1.msra.mxu0 0.0
      %4897 = vmatprep.subr.mxu0 0.0
      %4898 = vmatpush1.msra.mxu0 0.0
      %4899 = vmatprep.subr.mxu0 0.0
      %4900 = vmatpush1.msra.mxu0 0.0
      %4901 = vmatprep.subr.mxu0 0.0
      %4902 = vmatpush1.msra.mxu0 0.0
      %4903 = vmatprep.subr.mxu0 0.0
      %4904 = vmatpush1.msra.mxu0 0.0
      %4905 = vmatprep.subr.mxu0 0.0
      %4906 = vmatpush1.msra.mxu0 0.0
      %4907 = vmatprep.subr.mxu0 0.0
      %4908 = vmatpush1.msra.mxu0 0.0
      %4909 = vmatprep.subr.mxu0 0.0
      %4910 = vmatpush1.msra.mxu0 0.0
      %4911 = vmatprep.subr.mxu0 0.0
      %4912 = vmatpush1.msra.mxu0 0.0
      %4913 = vmatprep.subr.mxu0 0.0
      %4914 = vmatpush1.msra.mxu0 0.0
      %4915 = vmatprep.subr.mxu0 0.0
      %4916 = vmatpush1.msra.mxu0 0.0
      %4917 = vmatprep.mubr.f32.mxu0 0.0
      %4918 = vmatmul.mubr.f32.gmra.mrb[0].mxu0 %v4806
      %v4919 = vpop.f32.mrb[0].mxu0
      %v4920 = vadd.f32 0.0, %v4919
      %v4921 = vpop.f32.mrb[0].mxu0
      %4922 = vmatprep.mubr.f32.mxu0 0.0
      %4923 = vmatmul.mubr.f32.gmra.mrb[0].mxu0 %v4809
      %v4924 = vpop.f32.mrb[0].mxu0
      %v4925 = vadd.f32 0.0, %v4924
      %v4926 = vpop.f32.mrb[0].mxu0
      %4927 = vmatprep.mubr.f32.mxu0 0.0
      %4928 = vmatmul.mubr.f32.gmra.mrb[0].mxu0 %v4812
      %v4929 = vpop.f32.mrb[0].mxu0
      %v4930 = vadd.f32 0.0, %v4929
      %v4931 = vpop.f32.mrb[0].mxu0
      %4932 = vmatprep.mubr.f32.mxu0 0.0
      %4933 = vmatmul.mubr.f32.gmra.mrb[0].mxu0 %v4815
      %v4934 = vpop.f32.mrb[0].mxu0
      %v4935 = vadd.f32 0.0, %v4934
      %v4936 = vpop.f32.mrb[0].mxu0
      %4937 = vmatprep.mubr.f32.mxu0 0.0
      %4938 = vmatmul.mubr.f32.gmra.mrb[0].mxu0 %v4818
      %v4939 = vpop.f32.mrb[0].mxu0
      %v4940 = vadd.f32 0.0, %v4939
      %v4941 = vpop.f32.mrb[0].mxu0
      %4942 = vmatprep.mubr.f32.mxu0 0.0
      %4943 = vmatmul.mubr.f32.gmra.mrb[0].mxu0 %v4821
      %v4944 = vpop.f32.mrb[0].mxu0
      %v4945 = vadd.f32 0.0, %v4944
      %v4946 = vpop.f32.mrb[0].mxu0
      %4947 = vmatprep.mubr.f32.mxu0 0.0
      %4948 = vmatmul.mubr.f32.gmra.mrb[0].mxu0 %v4824
      %v4949 = vpop.f32.mrb[0].mxu0
      %v4950 = vadd.f32 0.0, %v4949
      %v4951 = vpop.f32.mrb[0].mxu0
      %4952 = vmatprep.mubr.f32.mxu0 0.0
      %4953 = vmatmul.mubr.f32.gmra.mrb[0].mxu0 %v4827
      %v4954 = vpop.f32.mrb[0].mxu0
      %v4955 = vadd.f32 0.0, %v4954
      %v4956 = vpop.f32.mrb[0].mxu0
      %4957 = vmatprep.mubr.f32.mxu0 0.0
      %4958 = vmatmul.mubr.f32.gmra.mrb[0].mxu0 %v4830
      %v4959 = vpop.f32.mrb[0].mxu0
      %v4960 = vadd.f32 0.0, %v4959
      %v4961 = vpop.f32.mrb[0].mxu0
      %4962 = vmatprep.mubr.f32.mxu0 0.0
      %4963 = vmatmul.mubr.f32.gmra.mrb[0].mxu0 %v4833
      %v4964 = vpop.f32.mrb[0].mxu0
      %v4965 = vadd.f32 0.0, %v4964
      %v4966 = vpop.f32.mrb[0].mxu0
      %4967 = vmatprep.mubr.f32.mxu0 0.0
      %4968 = vmatmul.mubr.f32.gmra.mrb[0].mxu0 %v4836
      %v4969 = vpop.f32.mrb[0].mxu0
      %v4970 = vadd.f32 0.0, %v4969
      %v4971 = vpop.f32.mrb[0].mxu0
      %4972 = vmatprep.mubr.f32.mxu0 0.0
      %4973 = vmatmul.mubr.f32.gmra.mrb[0].mxu0 %v4839
      %v4974 = vpop.f32.mrb[0].mxu0
      %v4975 = vadd.f32 0.0, %v4974
      %v4976 = vpop.f32.mrb[0].mxu0
      %4977 = vmatprep.mubr.f32.mxu0 0.0
      %4978 = vmatmul.mubr.f32.gmra.mrb[0].mxu0 %v4842
      %v4979 = vpop.f32.mrb[0].mxu0
      %v4980 = vadd.f32 0.0, %v4979
      %v4981 = vpop.f32.mrb[0].mxu0
      %4982 = vmatprep.mubr.f32.mxu0 0.0
      %4983 = vmatmul.mubr.f32.gmra.mrb[0].mxu0 %v4845
      %v4984 = vpop.f32.mrb[0].mxu0
      %v4985 = vadd.f32 0.0, %v4984
      %v4986 = vpop.f32.mrb[0].mxu0
      %4987 = vmatprep.mubr.f32.mxu0 0.0
      %4988 = vmatmul.mubr.f32.gmra.mrb[0].mxu0 %v4848
      %v4989 = vpop.f32.mrb[0].mxu0
      %v4990 = vadd.f32 0.0, %v4989
      %v4991 = vpop.f32.mrb[0].mxu0
      %4992 = vmatprep.mubr.f32.mxu0 0.0
      %4993 = vmatmul.mubr.f32.gmra.mrb[0].mxu0 %v4851
      %v4994 = vpop.f32.mrb[0].mxu0
      %v4995 = vadd.f32 0.0, %v4994
      %v4996 = vpop.f32.mrb[0].mxu0
      %4997 = vdwg.mxu0
      %v4998 = vmul.f32 %v4920, %v922
      %v4999 = vmul.f32 %v4925, %v923
      %v5000 = vmul.f32 %v4930, %v924
      %v5001 = vmul.f32 %v4935, %v925
      %v5002 = vmul.f32 %v4940, %v926
      %v5003 = vmul.f32 %v4945, %v927
      %v5004 = vmul.f32 %v4950, %v928
      %v5005 = vmul.f32 %v4955, %v929
      %v5006 = vmul.f32 %v4960, %v930
      %v5007 = vmul.f32 %v4965, %v931
      %v5008 = vmul.f32 %v4970, %v932
      %v5009 = vmul.f32 %v4975, %v933
      %v5010 = vmul.f32 %v4980, %v934
      %v5011 = vmul.f32 %v4985, %v935
      %v5012 = vmul.f32 %v4990, %v936
      %v5013 = vmul.f32 %v4995, %v937
      %5014 = vmatprep.subr.mxu0 0.0
      %5015 = vmatpush1.msra.mxu0 %v4998
      %5016 = vmatprep.subr.mxu0 0.0
      %5017 = vmatpush1.msra.mxu0 %v4999
      %5018 = vmatprep.subr.mxu0 0.0
      %5019 = vmatpush1.msra.mxu0 %v5000
      %5020 = vmatprep.subr.mxu0 0.0
      %5021 = vmatpush1.msra.mxu0 %v5001
      %5022 = vmatprep.subr.mxu0 0.0
      %5023 = vmatpush1.msra.mxu0 %v5002
      %5024 = vmatprep.subr.mxu0 0.0
      %5025 = vmatpush1.msra.mxu0 %v5003
      %5026 = vmatprep.subr.mxu0 0.0
      %5027 = vmatpush1.msra.mxu0 %v5004
      %5028 = vmatprep.subr.mxu0 0.0
      %5029 = vmatpush1.msra.mxu0 %v5005
      %5030 = vmatprep.subr.mxu0 0.0
      %5031 = vmatpush1.msra.mxu0 %v5006
      %5032 = vmatprep.subr.mxu0 0.0
      %5033 = vmatpush1.msra.mxu0 %v5007
      %5034 = vmatprep.subr.mxu0 0.0
      %5035 = vmatpush1.msra.mxu0 %v5008
      %5036 = vmatprep.subr.mxu0 0.0
      %5037 = vmatpush1.msra.mxu0 %v5009
      %5038 = vmatprep.subr.mxu0 0.0
      %5039 = vmatpush1.msra.mxu0 %v5010
      %5040 = vmatprep.subr.mxu0 0.0
      %5041 = vmatpush1.msra.mxu0 %v5011
      %5042 = vmatprep.subr.mxu0 0.0
      %5043 = vmatpush1.msra.mxu0 %v5012
      %5044 = vmatprep.subr.mxu0 0.0
      %5045 = vmatpush1.msra.mxu0 %v5013
      %5046 = vmatprep.subr.mxu0 0.0
      %5047 = vmatpush1.msra.mxu0 0.0
      %5048 = vmatprep.subr.mxu0 0.0
      %5049 = vmatpush1.msra.mxu0 0.0
      %5050 = vmatprep.subr.mxu0 0.0
      %5051 = vmatpush1.msra.mxu0 0.0
      %5052 = vmatprep.subr.mxu0 0.0
      %5053 = vmatpush1.msra.mxu0 0.0
      %5054 = vmatprep.subr.mxu0 0.0
      %5055 = vmatpush1.msra.mxu0 0.0
      %5056 = vmatprep.subr.mxu0 0.0
      %5057 = vmatpush1.msra.mxu0 0.0
      %5058 = vmatprep.subr.mxu0 0.0
      %5059 = vmatpush1.msra.mxu0 0.0
      %5060 = vmatprep.subr.mxu0 0.0
      %5061 = vmatpush1.msra.mxu0 0.0
      %5062 = vmatprep.subr.mxu0 0.0
      %5063 = vmatpush1.msra.mxu0 0.0
      %5064 = vmatprep.subr.mxu0 0.0
      %5065 = vmatpush1.msra.mxu0 0.0
      %5066 = vmatprep.subr.mxu0 0.0
      %5067 = vmatpush1.msra.mxu0 0.0
      %5068 = vmatprep.subr.mxu0 0.0
      %5069 = vmatpush1.msra.mxu0 0.0
      %5070 = vmatprep.subr.mxu0 0.0
      %5071 = vmatpush1.msra.mxu0 0.0
      %5072 = vmatprep.subr.mxu0 0.0
      %5073 = vmatpush1.msra.mxu0 0.0
      %5074 = vmatprep.subr.mxu0 0.0
      %5075 = vmatpush1.msra.mxu0 0.0
      %5076 = vmatprep.subr.mxu0 0.0
      %5077 = vmatpush1.msra.mxu0 0.0
      %5078 = vmatprep.mubr.f32.mxu0 0.0
      %5079 = vmatmul.mubr.f32.gmra.mrb[0].mxu0 %v921
      %v5080 = vpop.f32.mrb[0].mxu0
      %v5081 = vadd.f32 0.0, %v5080
      %v5082 = vpop.f32.mrb[0].mxu0
      %5083 = vdwg.mxu0
      %v5084 = vld [vmem:[%s51] sm:$0xff]
      %v5085 = vld [vmem:[%s51 + $0x8] sm:$0xff]
      %v5086 = vld [vmem:[%s51 + $0x10] sm:$0xff]
      %v5087 = vld [vmem:[%s51 + $0x18] sm:$0xff]
      %v5088 = vld [vmem:[%s51 + $0x20] sm:$0xff]
      %v5089 = vld [vmem:[%s51 + $0x28] sm:$0xff]
      %v5090 = vld [vmem:[%s51 + $0x30] sm:$0xff]
      %v5091 = vld [vmem:[%s51 + $0x38] sm:$0xff]
      %v5092 = vld [vmem:[%s51 + $0x40] sm:$0xff]
      %v5093 = vld [vmem:[%s51 + $0x48] sm:$0xff]
      %v5094 = vld [vmem:[%s51 + $0x50] sm:$0xff]
      %v5095 = vld [vmem:[%s51 + $0x58] sm:$0xff]
      %v5096 = vld [vmem:[%s51 + $0x60] sm:$0xff]
      %v5097 = vld [vmem:[%s51 + $0x68] sm:$0xff]
      %v5098 = vld [vmem:[%s51 + $0x70] sm:$0xff]
      %v5099 = vld [vmem:[%s51 + $0x78] sm:$0xff]
      %v5100 = vld [vmem:[%s53] sm:$0x1]
      %v5102 = vlaneseq
      %v5103 = vshrl.u32 %v5102, 7
      %v5104 = vsub.s32 0, %v5103
      %v5105 = vrot.slane %v5100, %v5104
      %5107 = vmatprep.subr.mxu0 0.0
      %5108 = vmatpush1.msra.mxu0 %v5084
      %5109 = vmatprep.subr.mxu0 0.0
      %5110 = vmatpush1.msra.mxu0 %v5085
      %5111 = vmatprep.subr.mxu0 0.0
      %5112 = vmatpush1.msra.mxu0 %v5086
      %5113 = vmatprep.subr.mxu0 0.0
      %5114 = vmatpush1.msra.mxu0 %v5087
      %5115 = vmatprep.subr.mxu0 0.0
      %5116 = vmatpush1.msra.mxu0 %v5088
      %5117 = vmatprep.subr.mxu0 0.0
      %5118 = vmatpush1.msra.mxu0 %v5089
      %5119 = vmatprep.subr.mxu0 0.0
      %5120 = vmatpush1.msra.mxu0 %v5090
      %5121 = vmatprep.subr.mxu0 0.0
      %5122 = vmatpush1.msra.mxu0 %v5091
      %5123 = vmatprep.subr.mxu0 0.0
      %5124 = vmatpush1.msra.mxu0 %v5092
      %5125 = vmatprep.subr.mxu0 0.0
      %5126 = vmatpush1.msra.mxu0 %v5093
      %5127 = vmatprep.subr.mxu0 0.0
      %5128 = vmatpush1.msra.mxu0 %v5094
      %5129 = vmatprep.subr.mxu0 0.0
      %5130 = vmatpush1.msra.mxu0 %v5095
      %5131 = vmatprep.subr.mxu0 0.0
      %5132 = vmatpush1.msra.mxu0 %v5096
      %5133 = vmatprep.subr.mxu0 0.0
      %5134 = vmatpush1.msra.mxu0 %v5097
      %5135 = vmatprep.subr.mxu0 0.0
      %5136 = vmatpush1.msra.mxu0 %v5098
      %5137 = vmatprep.subr.mxu0 0.0
      %5138 = vmatpush1.msra.mxu0 %v5099
      %5139 = vmatprep.subr.mxu0 0.0
      %5140 = vmatpush1.msra.mxu0 0.0
      %5141 = vmatprep.subr.mxu0 0.0
      %5142 = vmatpush1.msra.mxu0 0.0
      %5143 = vmatprep.subr.mxu0 0.0
      %5144 = vmatpush1.msra.mxu0 0.0
      %5145 = vmatprep.subr.mxu0 0.0
      %5146 = vmatpush1.msra.mxu0 0.0
      %5147 = vmatprep.subr.mxu0 0.0
      %5148 = vmatpush1.msra.mxu0 0.0
      %5149 = vmatprep.subr.mxu0 0.0
      %5150 = vmatpush1.msra.mxu0 0.0
      %5151 = vmatprep.subr.mxu0 0.0
      %5152 = vmatpush1.msra.mxu0 0.0
      %5153 = vmatprep.subr.mxu0 0.0
      %5154 = vmatpush1.msra.mxu0 0.0
      %5155 = vmatprep.subr.mxu0 0.0
      %5156 = vmatpush1.msra.mxu0 0.0
      %5157 = vmatprep.subr.mxu0 0.0
      %5158 = vmatpush1.msra.mxu0 0.0
      %5159 = vmatprep.subr.mxu0 0.0
      %5160 = vmatpush1.msra.mxu0 0.0
      %5161 = vmatprep.subr.mxu0 0.0
      %5162 = vmatpush1.msra.mxu0 0.0
      %5163 = vmatprep.subr.mxu0 0.0
      %5164 = vmatpush1.msra.mxu0 0.0
      %5165 = vmatprep.subr.mxu0 0.0
      %5166 = vmatpush1.msra.mxu0 0.0
      %5167 = vmatprep.subr.mxu0 0.0
      %5168 = vmatpush1.msra.mxu0 0.0
      %5169 = vmatprep.subr.mxu0 0.0
      %5170 = vmatpush1.msra.mxu0 0.0
      %5171 = vmatprep.mubr.f32.mxu0 0.0
      %5172 = vmatmul.mubr.f32.gmra.mrb[0].mxu0 %v5081
      %v5173 = vpop.f32.mrb[0].mxu0
      %v5174 = vadd.f32 %v5105, %v5173
      %v5175 = vpop.f32.mrb[0].mxu0
      %5176 = vdwg.mxu0
      %v5177 = vmax.f32 %v5174, 0.0
      %v5178 = vld [vmem:[%s55] sm:$0xff]
      %v5179 = vld [vmem:[%s55 + $0x8] sm:$0xff]
      %v5180 = vld [vmem:[#allocation2] sm:$0x1]
      %v5182 = vlaneseq
      %v5183 = vshrl.u32 %v5182, 7
      %v5184 = vsub.s32 0, %v5183
      %v5185 = vrot.slane %v5180, %v5184
      %v5188 = vsel %vm969, %v5177, 0
      %5190 = vmatprep.subr.mxu0 0.0
      %5191 = vmatpush1.msra.mxu0 %v5178
      %5192 = vmatprep.subr.mxu0 0.0
      %5193 = vmatpush1.msra.mxu0 %v5179
      %5194 = vmatprep.subr.mxu0 0.0
      %5195 = vmatpush1.msra.mxu0 0.0
      %5196 = vmatprep.subr.mxu0 0.0
      %5197 = vmatpush1.msra.mxu0 0.0
      %5198 = vmatprep.subr.mxu0 0.0
      %5199 = vmatpush1.msra.mxu0 0.0
      %5200 = vmatprep.subr.mxu0 0.0
      %5201 = vmatpush1.msra.mxu0 0.0
      %5202 = vmatprep.subr.mxu0 0.0
      %5203 = vmatpush1.msra.mxu0 0.0
      %5204 = vmatprep.subr.mxu0 0.0
      %5205 = vmatpush1.msra.mxu0 0.0
      %5206 = vmatprep.subr.mxu0 0.0
      %5207 = vmatpush1.msra.mxu0 0.0
      %5208 = vmatprep.subr.mxu0 0.0
      %5209 = vmatpush1.msra.mxu0 0.0
      %5210 = vmatprep.subr.mxu0 0.0
      %5211 = vmatpush1.msra.mxu0 0.0
      %5212 = vmatprep.subr.mxu0 0.0
      %5213 = vmatpush1.msra.mxu0 0.0
      %5214 = vmatprep.subr.mxu0 0.0
      %5215 = vmatpush1.msra.mxu0 0.0
      %5216 = vmatprep.subr.mxu0 0.0
      %5217 = vmatpush1.msra.mxu0 0.0
      %5218 = vmatprep.subr.mxu0 0.0
      %5219 = vmatpush1.msra.mxu0 0.0
      %5220 = vmatprep.subr.mxu0 0.0
      %5221 = vmatpush1.msra.mxu0 0.0
      %5222 = vmatprep.subr.mxu0 0.0
      %5223 = vmatpush1.msra.mxu0 0.0
      %5224 = vmatprep.subr.mxu0 0.0
      %5225 = vmatpush1.msra.mxu0 0.0
      %5226 = vmatprep.subr.mxu0 0.0
      %5227 = vmatpush1.msra.mxu0 0.0
      %5228 = vmatprep.subr.mxu0 0.0
      %5229 = vmatpush1.msra.mxu0 0.0
      %5230 = vmatprep.subr.mxu0 0.0
      %5231 = vmatpush1.msra.mxu0 0.0
      %5232 = vmatprep.subr.mxu0 0.0
      %5233 = vmatpush1.msra.mxu0 0.0
      %5234 = vmatprep.subr.mxu0 0.0
      %5235 = vmatpush1.msra.mxu0 0.0
      %5236 = vmatprep.subr.mxu0 0.0
      %5237 = vmatpush1.msra.mxu0 0.0
      %5238 = vmatprep.subr.mxu0 0.0
      %5239 = vmatpush1.msra.mxu0 0.0
      %5240 = vmatprep.subr.mxu0 0.0
      %5241 = vmatpush1.msra.mxu0 0.0
      %5242 = vmatprep.subr.mxu0 0.0
      %5243 = vmatpush1.msra.mxu0 0.0
      %5244 = vmatprep.subr.mxu0 0.0
      %5245 = vmatpush1.msra.mxu0 0.0
      %5246 = vmatprep.subr.mxu0 0.0
      %5247 = vmatpush1.msra.mxu0 0.0
      %5248 = vmatprep.subr.mxu0 0.0
      %5249 = vmatpush1.msra.mxu0 0.0
      %5250 = vmatprep.subr.mxu0 0.0
      %5251 = vmatpush1.msra.mxu0 0.0
      %5252 = vmatprep.subr.mxu0 0.0
      %5253 = vmatpush1.msra.mxu0 0.0
      %5254 = vmatprep.mubr.f32.mxu0 0.0
      %5255 = vmatmul.mubr.f32.gmra.mrb[0].mxu0 %v5188
      %v5256 = vpop.f32.mrb[0].mxu0
      %v5257 = vadd.f32 %v5185, %v5256
      %v5258 = vpop.f32.mrb[0].mxu0
      %5259 = vdwg.mxu0
      %vm5260 = vcmask 7168
      %5261 = vst.msk [vmem:[%s904] sm:$0xff] %vm5260, %v5257
      %p5262 = scmp.lt.s32.totalorder %s72, 1
      %s5263 = scalar_select %p5262, %s72, 1
      %s5264 = smul.addr %s5263, 8
      %s5265 = scalar_lea.vmem %s59, %s5264
      // Predicated region
      $region137: #{tpu_custom_call.1} parent=135 // pred_check
        %p5266 = pneg %p704
      $region138: #{tpu_custom_call.1} parent=135 // pred_check_branch
        %5268 = sbr.rel (%p5266) target = $region140
      $region139: #{tpu_custom_call.1} parent=135 // pred_region
        _
      $region140: #{tpu_custom_call.1} parent=135 // pred_fallthru
        _
    $region136: #{tpu_custom_call.1} parent=5 // pred_fallthru
      _
    %p5269 = scmp.le.s32.totalorder 2, %s67
    // Predicated region
    $region141: #{tpu_custom_call.1} parent=5 // pred_check
      %p5270 = pneg %p5269
    $region142: #{tpu_custom_call.1} parent=5 // pred_check_branch
      %5272 = sbr.rel (%p5270) target = $region144
    $region143: #{tpu_custom_call.1} parent=5 // pred_region
      %s5273 = ssub.s32 %s67, 2
      // Predicated region
      $region145: #{tpu_custom_call.1} parent=143 // pred_check
        %p5274 = pneg %p710
      $region146: #{tpu_custom_call.1} parent=143 // pred_check_branch
        %5276 = sbr.rel (%p5274) target = $region148
      $region147: #{tpu_custom_call.1} parent=143 // pred_region
        %p5277 = scmp.lt.s32.totalorder %s73, 1
        %s5278 = scalar_select %p5277, %s73, 1
        %s5279 = smul.addr %s5278, 8
        %s5280 = scalar_lea.vmem %s59, %s5279
      $region148: #{tpu_custom_call.1} parent=143 // pred_fallthru
        _
    $region144: #{tpu_custom_call.1} parent=5 // pred_fallthru
      _
  $region6: #{tpu_custom_call.1} parent=0 // loop_footer
    %s71 = sadd.s32 1, %s67
  $region7: #{tpu_custom_call.1} parent=0 // loop_footer_branch
    %66 = sbr.rel target = $region3
  $region8: #{tpu_custom_call.1} parent=0 // loop_exit
    _

</llo_original>
